<compile_context>
chip_gen: v6e
topology: v6e:2x2x1
jax: 0.10.0
libtpu: 0.0.40
codegen_flags: <defaults>
</compile_context>

<pallas_src>
import functools
import math

import jax
import jax.numpy as jnp
from jax.experimental import pallas as pl
from jax.experimental.pallas import tpu as pltpu

SEQ = 10          # LTL formula length
NUM_REL = 8       # relation vocabulary (values >= NUM_REL act as attention mask)
NUM_LAYERS = 3    # GA layers
D_MODEL = 16      # embedding width


def _full_spec(shape):
    # whole-array block (no grid): last-two-dims (8,128) constraint does not apply.
    return pl.BlockSpec(shape, lambda *_: (0,) * len(shape))


# ----------------------------- fused Pallas kernel -----------------------------

def _fused_kernel(img_ref, formula_ref, rels_ref,
                  c1w_ref, c1b_ref, c2w_ref, c2b_ref, c3w_ref, c3b_ref,
                  emb_ref, wqkv_ref, wo_ref, rel_tab_ref,
                  h1w_ref, h1b_ref, h2w_ref, h2b_ref, h3w_ref, h3b_ref,
                  out_ref, *, batch):
    f32 = jnp.float32
    B = batch
    S, L, R, D = SEQ, NUM_LAYERS, NUM_REL, D_MODEL

    def dot(a, b):
        return jnp.dot(a, b, preferred_element_type=f32)

    # ------------------ image path: conv stack as im2col matmuls ------------------
    # Activations are kept as [positions, B, channels]; patches are built with
    # lane-slices + lane-concats and positions are stacked on the leading dim only.
    img = img_ref[...]                                          # [B, 147]  (h*21 + w*3 + c)

    # conv1: 7x7x3 -> 5x5x16   (3x3 kernel, VALID, stride 1)
    pats = []
    for i in range(5):
        for j in range(5):
            rows = [img[:, (i + di) * 21 + j * 3:(i + di) * 21 + j * 3 + 9]
                    for di in range(3)]                         # 3 x [B, 9]  (dj, c contiguous)
            pats.append(jnp.concatenate(rows, axis=-1))         # [B, 27]    (di, dj, c)
    x1 = jnp.stack(pats, axis=0)                                # [25, B, 27]
    y1 = jnp.maximum(jnp.einsum('pbk,kn->pbn', x1, c1w_ref[...],
                                preferred_element_type=f32) + c1b_ref[...], 0.0)  # [25,B,16]

    # conv2: 5x5x16 -> 3x3x32
    pats = []
    for i in range(3):
        for j in range(3):
            cols = [y1[(i + di) * 5 + (j + dj)] for di in range(3) for dj in range(3)]
            pats.append(jnp.concatenate(cols, axis=-1))         # [B, 144]
    x2 = jnp.stack(pats, axis=0)                                # [9, B, 144]
    y2 = jnp.maximum(jnp.einsum('pbk,kn->pbn', x2, c2w_ref[...],
                                preferred_element_type=f32) + c2b_ref[...], 0.0)  # [9,B,32]

    # conv3: 3x3x32 -> 2x2x32
    pats = []
    for i in range(2):
        for j in range(2):
            cols = [y2[(i + di) * 3 + (j + dj)] for di in range(2) for dj in range(2)]
            pats.append(jnp.concatenate(cols, axis=-1))         # [B, 128]
    x3 = jnp.stack(pats, axis=0)                                # [4, B, 128]
    y3 = jnp.maximum(jnp.einsum('pbk,kn->pbn', x3, c3w_ref[...],
                                preferred_element_type=f32) + c3b_ref[...], 0.0)  # [4,B,32]

    # lane-dense flatten in (position, channel) order; the matching row permutation of
    # the first head weight was applied host-side, so semantics equal PyTorch's
    # channel-major Flatten.
    emb_img = jnp.concatenate([y3[p] for p in range(4)], axis=-1)    # [B, 128]

    # ------------------ formula path: embedding lookup + GA ------------------
    SB = S * B
    fids = formula_ref[...]                                     # [SB, 1] int32 (row = s*B + b)
    onehot = (fids == jax.lax.broadcasted_iota(jnp.int32, (SB, 14), 1)).astype(f32)
    x = dot(onehot, emb_ref[...])                               # [SB, 16]  (padding_idx row is 0)

    rels = rels_ref[...]                                        # [SB, SB] int32
    # Cross-batch entries carry the sentinel NUM_REL -> additive -inf so the flattened
    # [SB, SB] attention stays block-diagonal (exactly per-batch softmax).
    neg_mask = jnp.where(rels >= R, f32(-1e9), f32(0.0))
    scale = 1.0 / math.sqrt(float(D))

    for l in range(L):                                          # unrolled (L = 3)
        # in-kernel relation-bias gather from the tiny SMEM scalar table
        bias = neg_mask
        for r in range(R):
            bias = bias + jnp.where(rels == r, rel_tab_ref[l * R + r], f32(0.0))
        qkv = dot(x, wqkv_ref[l])                               # [SB, 48]  (packed q|k|v)
        q, k, v = qkv[:, :D], qkv[:, D:2 * D], qkv[:, 2 * D:]
        logits = jnp.einsum('se,te->st', q, k,
                            preferred_element_type=f32) * scale + bias   # [SB, SB]
        m = jnp.max(logits, axis=-1, keepdims=True)
        e = jnp.exp(logits - m)
        p = e * pl.reciprocal(jnp.sum(e, axis=-1, keepdims=True), approx=True)
        attn = dot(p, v)                                        # [SB, 16]
        x = jnp.maximum(x + dot(attn, wo_ref[l]), 0.0)

    # flatten [B, S, D] (stored as rows s*B+b) -> [B, 160] via lane concat (s*16+d order)
    emb_formula = jnp.concatenate([x[s * B:(s + 1) * B, :] for s in range(S)], axis=-1)

    # ------------------ merged policy/value MLP heads ------------------
    composed = jnp.concatenate([emb_img, emb_formula], axis=-1)       # [B, 288]
    h = jnp.maximum(dot(composed, h1w_ref[...]) + h1b_ref[...], 0.0)  # [B, 128]
    h = jnp.maximum(dot(h, h2w_ref[...]) + h2b_ref[...], 0.0)         # [B, 128] (block-diag)
    out_ref[...] = (dot(h, h3w_ref[...]) + h3b_ref[...]).astype(out_ref.dtype)  # [B, 128]


def fused_forward(kp, img_flat, formula_sb, rels_sb):
    B = img_flat.shape[0]
    SB = SEQ * B
    args = (img_flat, formula_sb, rels_sb,
            kp['c1w'], kp['c1b'], kp['c2w'], kp['c2b'], kp['c3w'], kp['c3b'],
            kp['emb'], kp['wqkv'], kp['wo'], kp['rel_tab'],
            kp['h1w'], kp['h1b'], kp['h2w'], kp['h2b'], kp['h3w'], kp['h3b'])
    in_specs = [_full_spec(a.shape) for a in args]
    in_specs[12] = pl.BlockSpec(memory_space=pltpu.MemorySpace.SMEM)  # rel_tab scalar table

    flops = (2 * B * (25 * 27 * 16 + 9 * 144 * 32 + 4 * 128 * 32)     # convs
             + 2 * SB * 14 * 16                                       # embedding one-hot matmul
             + NUM_LAYERS * 2 * (SB * 16 * 48 + 2 * SB * SB * 16 + SB * 16 * 16)  # GA
             + 2 * B * (288 * 128 + 2 * 128 * 128))                   # merged heads
    cost = pl.CostEstimate(
        flops=flops,
        transcendentals=NUM_LAYERS * SB * SB,
        bytes_accessed=4 * (sum(int(a.size) for a in args) + B * 128))

    # TODO(synk): if B is ever scaled up, add a grid over batch with
    # dimension_semantics=("parallel",) to shard across v7x's two TensorCores.
    return pl.pallas_call(
        functools.partial(_fused_kernel, batch=B),
        out_shape=jax.ShapeDtypeStruct((B, 128), jnp.float32),
        in_specs=in_specs,
        out_specs=_full_spec((B, 128)),
        cost_estimate=cost,
    )(*args)


# ------------------------------- parameters ---------------------------------

def init_params(key):
    ks = iter(jax.random.split(key, 32))

    def nrm(shape, scale=0.1):
        return scale * jax.random.normal(next(ks), shape, dtype=jnp.float32)

    p = {}
    # image_embedder: Conv2d(3,16,3) -> Conv2d(16,32,3) -> Conv2d(32,32,2)   (HWIO)
    p['conv1_w'] = nrm((3, 3, 3, 16));  p['conv1_b'] = nrm((16,))
    p['conv2_w'] = nrm((3, 3, 16, 32)); p['conv2_b'] = nrm((32,))
    p['conv3_w'] = nrm((2, 2, 32, 32)); p['conv3_b'] = nrm((32,))
    # nn.Embedding(14, 16, padding_idx=0)
    emb = nrm((14, 16), 1.0)
    p['ltl_emb'] = emb.at[0].set(0.0)
    # GA(seq_len=10, num_rel=8, num_layers=3)
    L = NUM_LAYERS
    p['ga_wq'] = nrm((L, 16, 16)); p['ga_wk'] = nrm((L, 16, 16))
    p['ga_wv'] = nrm((L, 16, 16)); p['ga_wo'] = nrm((L, 16, 16))
    p['ga_rel'] = nrm((L, NUM_REL), 1.0)      # scalar relation-bias table per layer
    # policy_net / value_net: 288 -> 64 -> 64 -> 64
    p['pi_w1'] = nrm((288, 64)); p['pi_b1'] = nrm((64,))
    p['pi_w2'] = nrm((64, 64));  p['pi_b2'] = nrm((64,))
    p['pi_w3'] = nrm((64, 64));  p['pi_b3'] = nrm((64,))
    p['vf_w1'] = nrm((288, 64)); p['vf_b1'] = nrm((64,))
    p['vf_w2'] = nrm((64, 64));  p['vf_b2'] = nrm((64,))
    p['vf_w3'] = nrm((64, 64));  p['vf_b3'] = nrm((64,))
    return p


def pack_params(p):
    """One-time host-side repack into the fused-kernel layout (exact transform)."""
    N = 128
    kp = {}
    kp['c1w'] = p['conv1_w'].reshape(-1, 16);  kp['c1b'] = p['conv1_b'].reshape(1, 16)
    kp['c2w'] = p['conv2_w'].reshape(-1, 32);  kp['c2b'] = p['conv2_b'].reshape(1, 32)
    kp['c3w'] = p['conv3_w'].reshape(-1, 32);  kp['c3b'] = p['conv3_b'].reshape(1, 32)
    kp['emb'] = p['ltl_emb']
    kp['wqkv'] = jnp.concatenate([p['ga_wq'], p['ga_wk'], p['ga_wv']], axis=2)  # [L,16,48]
    kp['wo'] = p['ga_wo']
    kp['rel_tab'] = p['ga_rel'].reshape(-1)                                     # [L*NUM_REL]

    # merged policy||value first layer; permute the image rows from PyTorch's
    # channel-major flatten order (c*4 + p) to the kernel's (p*32 + c) order.
    w1 = jnp.concatenate([p['pi_w1'], p['vf_w1']], axis=1)                      # [288, 128]
    w1_img = jnp.transpose(w1[:128].reshape(32, 4, N), (1, 0, 2)).reshape(128, N)
    kp['h1w'] = jnp.concatenate([w1_img, w1[128:]], axis=0)
    kp['h1b'] = jnp.concatenate([p['pi_b1'], p['vf_b1']]).reshape(1, N)
    z = jnp.zeros((64, 64), jnp.float32)
    kp['h2w'] = jnp.concatenate([jnp.concatenate([p['pi_w2'], z], 1),
                                 jnp.concatenate([z, p['vf_w2']], 1)], 0)       # block-diag
    kp['h2b'] = jnp.concatenate([p['pi_b2'], p['vf_b2']]).reshape(1, N)
    kp['h3w'] = jnp.concatenate([jnp.concatenate([p['pi_w3'], z], 1),
                                 jnp.concatenate([z, p['vf_w3']], 1)], 0)
    kp['h3b'] = jnp.concatenate([p['pi_b3'], p['vf_b3']]).reshape(1, N)
    return kp


# ------------------------------- forward glue ---------------------------------

def custom_network_forward(kp, features):
    B = features.shape[0]
    S = SEQ
    img_flat = features[:, :147]
    # direction = features[:, 147]   # read but unused in the reference forward
    formula = features[:, 148:158].astype(jnp.int32)                 # [B, 10]
    rels = features[:, 158:].reshape(B, S, S).astype(jnp.int32)      # [B, 10, 10]

    # seq-major token order (row = s*B + b): keeps every in-kernel reshape leading-dim only
    formula_sb = jnp.transpose(formula, (1, 0)).reshape(S * B, 1)
    same_b = jnp.eye(B, dtype=jnp.bool_)
    rels_sb = jnp.where(same_b[None, :, None, :],                    # [1,B,1,B]
                        jnp.transpose(rels, (1, 0, 2))[:, :, :, None],  # [S,B,S,1]
                        jnp.int32(NUM_REL)).reshape(S * B, S * B)

    out = fused_forward(kp, img_flat, formula_sb, rels_sb)           # [B, 128]
    return out[:, :64], out[:, 64:]


def reference_forward(params, features):
    """Pure-JAX reference of the same forward pass (for correctness checking)."""
    B = features.shape[0]
    img = features[:, :147].reshape(B, 7, 7, 3)
    formula = features[:, 148:158].astype(jnp.int32)
    rels = features[:, 158:].reshape(B, 10, 10).astype(jnp.int32)

    x = img
    for w, b in ((params['conv1_w'], params['conv1_b']),
                 (params['conv2_w'], params['conv2_b']),
                 (params['conv3_w'], params['conv3_b'])):
        x = jax.lax.conv_general_dilated(x, w, (1, 1), 'VALID',
                                         dimension_numbers=('NHWC', 'HWIO', 'NHWC'))
        x = jax.nn.relu(x + b)
    emb_img = jnp.transpose(x, (0, 3, 1, 2)).reshape(B, -1)          # channel-major flatten

    e = params['ltl_emb'][formula]                                   # [B,10,16]
    bias = params['ga_rel'][:, rels]                                 # [3,B,10,10]
    scale = 1.0 / math.sqrt(float(D_MODEL))
    for l in range(NUM_LAYERS):
        q = e @ params['ga_wq'][l]; k = e @ params['ga_wk'][l]; v = e @ params['ga_wv'][l]
        logits = jnp.einsum('bse,bte->bst', q, k) * scale + bias[l]
        p = jax.nn.softmax(logits, axis=-1)
        attn = jnp.einsum('bst,btd->bsd', p, v)
        e = jax.nn.relu(e + attn @ params['ga_wo'][l])

    composed = jnp.concatenate([emb_img, e.reshape(B, -1)], axis=1)

    def mlp(x, w1, b1, w2, b2, w3, b3):
        h = jax.nn.relu(x @ w1 + b1)
        h = jax.nn.relu(h @ w2 + b2)
        return h @ w3 + b3

    pi = mlp(composed, params['pi_w1'], params['pi_b1'], params['pi_w2'],
             params['pi_b2'], params['pi_w3'], params['pi_b3'])
    vf = mlp(composed, params['vf_w1'], params['vf_b1'], params['vf_w2'],
             params['vf_b2'], params['vf_w3'], params['vf_b3'])
    return pi, vf


if __name__ == "__main__":
    B = 2
    key = jax.random.PRNGKey(0)
    k_img, k_dir, k_form, k_rel = jax.random.split(key, 4)
    img_flat = jax.random.uniform(k_img, (B, 147), dtype=jnp.float32)
    direction = jax.random.randint(k_dir, (B, 1), 0, 4).astype(jnp.float32)
    formula = jax.random.randint(k_form, (B, 10), 0, 14).astype(jnp.float32)
    rels = jax.random.randint(k_rel, (B, 100), 0, 8).astype(jnp.float32)
    features = jnp.concatenate([img_flat, direction, formula, rels], axis=1)   # [B, 258]

    params = init_params(jax.random.PRNGKey(42))
    packed = pack_params(params)

    fwd = jax.jit(functools.partial(custom_network_forward, packed))
    latent_pi, latent_vf = fwd(features)
    jax.block_until_ready((latent_pi, latent_vf))

    assert latent_pi.shape == (B, 64) and latent_vf.shape == (B, 64)
    assert latent_pi.dtype == jnp.float32 and latent_vf.dtype == jnp.float32

    # cross-check the fused Pallas kernel against the pure-JAX reference
    pi_ref, vf_ref = jax.jit(functools.partial(reference_forward, params))(features)
    assert bool(jnp.allclose(latent_pi, pi_ref, rtol=2e-2, atol=2e-2)), "policy head mismatch"
    assert bool(jnp.allclose(latent_vf, vf_ref, rtol=2e-2, atol=2e-2)), "value head mismatch"

    print("KERNEL_OK")
</pallas_src>

<mosaic_0001>
module attributes {stable_mosaic.version = 11 : i64} {
  func.func @_fused_kernel(%arg0: memref<2x147xf32, #tpu.memory_space<vmem>>, %arg1: memref<20x1xi32, #tpu.memory_space<vmem>>, %arg2: memref<20x20xi32, #tpu.memory_space<vmem>>, %arg3: memref<27x16xf32, #tpu.memory_space<vmem>>, %arg4: memref<1x16xf32, #tpu.memory_space<vmem>>, %arg5: memref<144x32xf32, #tpu.memory_space<vmem>>, %arg6: memref<1x32xf32, #tpu.memory_space<vmem>>, %arg7: memref<128x32xf32, #tpu.memory_space<vmem>>, %arg8: memref<1x32xf32, #tpu.memory_space<vmem>>, %arg9: memref<14x16xf32, #tpu.memory_space<vmem>>, %arg10: memref<3x16x48xf32, #tpu.memory_space<vmem>>, %arg11: memref<3x16x16xf32, #tpu.memory_space<vmem>>, %arg12: memref<24xf32, #tpu.memory_space<smem>>, %arg13: memref<288x128xf32, #tpu.memory_space<vmem>>, %arg14: memref<1x128xf32, #tpu.memory_space<vmem>>, %arg15: memref<128x128xf32, #tpu.memory_space<vmem>>, %arg16: memref<1x128xf32, #tpu.memory_space<vmem>>, %arg17: memref<128x128xf32, #tpu.memory_space<vmem>>, %arg18: memref<1x128xf32, #tpu.memory_space<vmem>>, %arg19: memref<2x128xf32, #tpu.memory_space<vmem>>) attributes {dimension_semantics = [], scalar_prefetch = 0 : i64, scratch_operands = 0 : i64, tpu.core_type = #tpu.core_type<tc>} {
    %c0 = arith.constant 0 : index
    %c0_0 = arith.constant 0 : index
    %0 = vector.load %arg0[%c0, %c0_0] : memref<2x147xf32, #tpu.memory_space<vmem>>, vector<2x147xf32>
    %1 = vector.extract_strided_slice %0 {offsets = [0, 0], sizes = [2, 9], strides = [1, 1]} : vector<2x147xf32> to vector<2x9xf32>
    %2 = vector.extract_strided_slice %0 {offsets = [0, 21], sizes = [2, 9], strides = [1, 1]} : vector<2x147xf32> to vector<2x9xf32>
    %3 = vector.extract_strided_slice %0 {offsets = [0, 42], sizes = [2, 9], strides = [1, 1]} : vector<2x147xf32> to vector<2x9xf32>
    %4 = tpu.concatenate %1, %2, %3 in 1 : vector<2x9xf32>, vector<2x9xf32>, vector<2x9xf32> -> vector<2x27xf32>
    %5 = vector.extract_strided_slice %0 {offsets = [0, 3], sizes = [2, 9], strides = [1, 1]} : vector<2x147xf32> to vector<2x9xf32>
    %6 = vector.extract_strided_slice %0 {offsets = [0, 24], sizes = [2, 9], strides = [1, 1]} : vector<2x147xf32> to vector<2x9xf32>
    %7 = vector.extract_strided_slice %0 {offsets = [0, 45], sizes = [2, 9], strides = [1, 1]} : vector<2x147xf32> to vector<2x9xf32>
    %8 = tpu.concatenate %5, %6, %7 in 1 : vector<2x9xf32>, vector<2x9xf32>, vector<2x9xf32> -> vector<2x27xf32>
    %9 = vector.extract_strided_slice %0 {offsets = [0, 6], sizes = [2, 9], strides = [1, 1]} : vector<2x147xf32> to vector<2x9xf32>
    %10 = vector.extract_strided_slice %0 {offsets = [0, 27], sizes = [2, 9], strides = [1, 1]} : vector<2x147xf32> to vector<2x9xf32>
    %11 = vector.extract_strided_slice %0 {offsets = [0, 48], sizes = [2, 9], strides = [1, 1]} : vector<2x147xf32> to vector<2x9xf32>
    %12 = tpu.concatenate %9, %10, %11 in 1 : vector<2x9xf32>, vector<2x9xf32>, vector<2x9xf32> -> vector<2x27xf32>
    %13 = vector.extract_strided_slice %0 {offsets = [0, 9], sizes = [2, 9], strides = [1, 1]} : vector<2x147xf32> to vector<2x9xf32>
    %14 = vector.extract_strided_slice %0 {offsets = [0, 30], sizes = [2, 9], strides = [1, 1]} : vector<2x147xf32> to vector<2x9xf32>
    %15 = vector.extract_strided_slice %0 {offsets = [0, 51], sizes = [2, 9], strides = [1, 1]} : vector<2x147xf32> to vector<2x9xf32>
    %16 = tpu.concatenate %13, %14, %15 in 1 : vector<2x9xf32>, vector<2x9xf32>, vector<2x9xf32> -> vector<2x27xf32>
    %17 = vector.extract_strided_slice %0 {offsets = [0, 12], sizes = [2, 9], strides = [1, 1]} : vector<2x147xf32> to vector<2x9xf32>
    %18 = vector.extract_strided_slice %0 {offsets = [0, 33], sizes = [2, 9], strides = [1, 1]} : vector<2x147xf32> to vector<2x9xf32>
    %19 = vector.extract_strided_slice %0 {offsets = [0, 54], sizes = [2, 9], strides = [1, 1]} : vector<2x147xf32> to vector<2x9xf32>
    %20 = tpu.concatenate %17, %18, %19 in 1 : vector<2x9xf32>, vector<2x9xf32>, vector<2x9xf32> -> vector<2x27xf32>
    %21 = vector.extract_strided_slice %0 {offsets = [0, 21], sizes = [2, 9], strides = [1, 1]} : vector<2x147xf32> to vector<2x9xf32>
    %22 = vector.extract_strided_slice %0 {offsets = [0, 42], sizes = [2, 9], strides = [1, 1]} : vector<2x147xf32> to vector<2x9xf32>
    %23 = vector.extract_strided_slice %0 {offsets = [0, 63], sizes = [2, 9], strides = [1, 1]} : vector<2x147xf32> to vector<2x9xf32>
    %24 = tpu.concatenate %21, %22, %23 in 1 : vector<2x9xf32>, vector<2x9xf32>, vector<2x9xf32> -> vector<2x27xf32>
    %25 = vector.extract_strided_slice %0 {offsets = [0, 24], sizes = [2, 9], strides = [1, 1]} : vector<2x147xf32> to vector<2x9xf32>
    %26 = vector.extract_strided_slice %0 {offsets = [0, 45], sizes = [2, 9], strides = [1, 1]} : vector<2x147xf32> to vector<2x9xf32>
    %27 = vector.extract_strided_slice %0 {offsets = [0, 66], sizes = [2, 9], strides = [1, 1]} : vector<2x147xf32> to vector<2x9xf32>
    %28 = tpu.concatenate %25, %26, %27 in 1 : vector<2x9xf32>, vector<2x9xf32>, vector<2x9xf32> -> vector<2x27xf32>
    %29 = vector.extract_strided_slice %0 {offsets = [0, 27], sizes = [2, 9], strides = [1, 1]} : vector<2x147xf32> to vector<2x9xf32>
    %30 = vector.extract_strided_slice %0 {offsets = [0, 48], sizes = [2, 9], strides = [1, 1]} : vector<2x147xf32> to vector<2x9xf32>
    %31 = vector.extract_strided_slice %0 {offsets = [0, 69], sizes = [2, 9], strides = [1, 1]} : vector<2x147xf32> to vector<2x9xf32>
    %32 = tpu.concatenate %29, %30, %31 in 1 : vector<2x9xf32>, vector<2x9xf32>, vector<2x9xf32> -> vector<2x27xf32>
    %33 = vector.extract_strided_slice %0 {offsets = [0, 30], sizes = [2, 9], strides = [1, 1]} : vector<2x147xf32> to vector<2x9xf32>
    %34 = vector.extract_strided_slice %0 {offsets = [0, 51], sizes = [2, 9], strides = [1, 1]} : vector<2x147xf32> to vector<2x9xf32>
    %35 = vector.extract_strided_slice %0 {offsets = [0, 72], sizes = [2, 9], strides = [1, 1]} : vector<2x147xf32> to vector<2x9xf32>
    %36 = tpu.concatenate %33, %34, %35 in 1 : vector<2x9xf32>, vector<2x9xf32>, vector<2x9xf32> -> vector<2x27xf32>
    %37 = vector.extract_strided_slice %0 {offsets = [0, 33], sizes = [2, 9], strides = [1, 1]} : vector<2x147xf32> to vector<2x9xf32>
    %38 = vector.extract_strided_slice %0 {offsets = [0, 54], sizes = [2, 9], strides = [1, 1]} : vector<2x147xf32> to vector<2x9xf32>
    %39 = vector.extract_strided_slice %0 {offsets = [0, 75], sizes = [2, 9], strides = [1, 1]} : vector<2x147xf32> to vector<2x9xf32>
    %40 = tpu.concatenate %37, %38, %39 in 1 : vector<2x9xf32>, vector<2x9xf32>, vector<2x9xf32> -> vector<2x27xf32>
    %41 = vector.extract_strided_slice %0 {offsets = [0, 42], sizes = [2, 9], strides = [1, 1]} : vector<2x147xf32> to vector<2x9xf32>
    %42 = vector.extract_strided_slice %0 {offsets = [0, 63], sizes = [2, 9], strides = [1, 1]} : vector<2x147xf32> to vector<2x9xf32>
    %43 = vector.extract_strided_slice %0 {offsets = [0, 84], sizes = [2, 9], strides = [1, 1]} : vector<2x147xf32> to vector<2x9xf32>
    %44 = tpu.concatenate %41, %42, %43 in 1 : vector<2x9xf32>, vector<2x9xf32>, vector<2x9xf32> -> vector<2x27xf32>
    %45 = vector.extract_strided_slice %0 {offsets = [0, 45], sizes = [2, 9], strides = [1, 1]} : vector<2x147xf32> to vector<2x9xf32>
    %46 = vector.extract_strided_slice %0 {offsets = [0, 66], sizes = [2, 9], strides = [1, 1]} : vector<2x147xf32> to vector<2x9xf32>
    %47 = vector.extract_strided_slice %0 {offsets = [0, 87], sizes = [2, 9], strides = [1, 1]} : vector<2x147xf32> to vector<2x9xf32>
    %48 = tpu.concatenate %45, %46, %47 in 1 : vector<2x9xf32>, vector<2x9xf32>, vector<2x9xf32> -> vector<2x27xf32>
    %49 = vector.extract_strided_slice %0 {offsets = [0, 48], sizes = [2, 9], strides = [1, 1]} : vector<2x147xf32> to vector<2x9xf32>
    %50 = vector.extract_strided_slice %0 {offsets = [0, 69], sizes = [2, 9], strides = [1, 1]} : vector<2x147xf32> to vector<2x9xf32>
    %51 = vector.extract_strided_slice %0 {offsets = [0, 90], sizes = [2, 9], strides = [1, 1]} : vector<2x147xf32> to vector<2x9xf32>
    %52 = tpu.concatenate %49, %50, %51 in 1 : vector<2x9xf32>, vector<2x9xf32>, vector<2x9xf32> -> vector<2x27xf32>
    %53 = vector.extract_strided_slice %0 {offsets = [0, 51], sizes = [2, 9], strides = [1, 1]} : vector<2x147xf32> to vector<2x9xf32>
    %54 = vector.extract_strided_slice %0 {offsets = [0, 72], sizes = [2, 9], strides = [1, 1]} : vector<2x147xf32> to vector<2x9xf32>
    %55 = vector.extract_strided_slice %0 {offsets = [0, 93], sizes = [2, 9], strides = [1, 1]} : vector<2x147xf32> to vector<2x9xf32>
    %56 = tpu.concatenate %53, %54, %55 in 1 : vector<2x9xf32>, vector<2x9xf32>, vector<2x9xf32> -> vector<2x27xf32>
    %57 = vector.extract_strided_slice %0 {offsets = [0, 54], sizes = [2, 9], strides = [1, 1]} : vector<2x147xf32> to vector<2x9xf32>
    %58 = vector.extract_strided_slice %0 {offsets = [0, 75], sizes = [2, 9], strides = [1, 1]} : vector<2x147xf32> to vector<2x9xf32>
    %59 = vector.extract_strided_slice %0 {offsets = [0, 96], sizes = [2, 9], strides = [1, 1]} : vector<2x147xf32> to vector<2x9xf32>
    %60 = tpu.concatenate %57, %58, %59 in 1 : vector<2x9xf32>, vector<2x9xf32>, vector<2x9xf32> -> vector<2x27xf32>
    %61 = vector.extract_strided_slice %0 {offsets = [0, 63], sizes = [2, 9], strides = [1, 1]} : vector<2x147xf32> to vector<2x9xf32>
    %62 = vector.extract_strided_slice %0 {offsets = [0, 84], sizes = [2, 9], strides = [1, 1]} : vector<2x147xf32> to vector<2x9xf32>
    %63 = vector.extract_strided_slice %0 {offsets = [0, 105], sizes = [2, 9], strides = [1, 1]} : vector<2x147xf32> to vector<2x9xf32>
    %64 = tpu.concatenate %61, %62, %63 in 1 : vector<2x9xf32>, vector<2x9xf32>, vector<2x9xf32> -> vector<2x27xf32>
    %65 = vector.extract_strided_slice %0 {offsets = [0, 66], sizes = [2, 9], strides = [1, 1]} : vector<2x147xf32> to vector<2x9xf32>
    %66 = vector.extract_strided_slice %0 {offsets = [0, 87], sizes = [2, 9], strides = [1, 1]} : vector<2x147xf32> to vector<2x9xf32>
    %67 = vector.extract_strided_slice %0 {offsets = [0, 108], sizes = [2, 9], strides = [1, 1]} : vector<2x147xf32> to vector<2x9xf32>
    %68 = tpu.concatenate %65, %66, %67 in 1 : vector<2x9xf32>, vector<2x9xf32>, vector<2x9xf32> -> vector<2x27xf32>
    %69 = vector.extract_strided_slice %0 {offsets = [0, 69], sizes = [2, 9], strides = [1, 1]} : vector<2x147xf32> to vector<2x9xf32>
    %70 = vector.extract_strided_slice %0 {offsets = [0, 90], sizes = [2, 9], strides = [1, 1]} : vector<2x147xf32> to vector<2x9xf32>
    %71 = vector.extract_strided_slice %0 {offsets = [0, 111], sizes = [2, 9], strides = [1, 1]} : vector<2x147xf32> to vector<2x9xf32>
    %72 = tpu.concatenate %69, %70, %71 in 1 : vector<2x9xf32>, vector<2x9xf32>, vector<2x9xf32> -> vector<2x27xf32>
    %73 = vector.extract_strided_slice %0 {offsets = [0, 72], sizes = [2, 9], strides = [1, 1]} : vector<2x147xf32> to vector<2x9xf32>
    %74 = vector.extract_strided_slice %0 {offsets = [0, 93], sizes = [2, 9], strides = [1, 1]} : vector<2x147xf32> to vector<2x9xf32>
    %75 = vector.extract_strided_slice %0 {offsets = [0, 114], sizes = [2, 9], strides = [1, 1]} : vector<2x147xf32> to vector<2x9xf32>
    %76 = tpu.concatenate %73, %74, %75 in 1 : vector<2x9xf32>, vector<2x9xf32>, vector<2x9xf32> -> vector<2x27xf32>
    %77 = vector.extract_strided_slice %0 {offsets = [0, 75], sizes = [2, 9], strides = [1, 1]} : vector<2x147xf32> to vector<2x9xf32>
    %78 = vector.extract_strided_slice %0 {offsets = [0, 96], sizes = [2, 9], strides = [1, 1]} : vector<2x147xf32> to vector<2x9xf32>
    %79 = vector.extract_strided_slice %0 {offsets = [0, 117], sizes = [2, 9], strides = [1, 1]} : vector<2x147xf32> to vector<2x9xf32>
    %80 = tpu.concatenate %77, %78, %79 in 1 : vector<2x9xf32>, vector<2x9xf32>, vector<2x9xf32> -> vector<2x27xf32>
    %81 = vector.extract_strided_slice %0 {offsets = [0, 84], sizes = [2, 9], strides = [1, 1]} : vector<2x147xf32> to vector<2x9xf32>
    %82 = vector.extract_strided_slice %0 {offsets = [0, 105], sizes = [2, 9], strides = [1, 1]} : vector<2x147xf32> to vector<2x9xf32>
    %83 = vector.extract_strided_slice %0 {offsets = [0, 126], sizes = [2, 9], strides = [1, 1]} : vector<2x147xf32> to vector<2x9xf32>
    %84 = tpu.concatenate %81, %82, %83 in 1 : vector<2x9xf32>, vector<2x9xf32>, vector<2x9xf32> -> vector<2x27xf32>
    %85 = vector.extract_strided_slice %0 {offsets = [0, 87], sizes = [2, 9], strides = [1, 1]} : vector<2x147xf32> to vector<2x9xf32>
    %86 = vector.extract_strided_slice %0 {offsets = [0, 108], sizes = [2, 9], strides = [1, 1]} : vector<2x147xf32> to vector<2x9xf32>
    %87 = vector.extract_strided_slice %0 {offsets = [0, 129], sizes = [2, 9], strides = [1, 1]} : vector<2x147xf32> to vector<2x9xf32>
    %88 = tpu.concatenate %85, %86, %87 in 1 : vector<2x9xf32>, vector<2x9xf32>, vector<2x9xf32> -> vector<2x27xf32>
    %89 = vector.extract_strided_slice %0 {offsets = [0, 90], sizes = [2, 9], strides = [1, 1]} : vector<2x147xf32> to vector<2x9xf32>
    %90 = vector.extract_strided_slice %0 {offsets = [0, 111], sizes = [2, 9], strides = [1, 1]} : vector<2x147xf32> to vector<2x9xf32>
    %91 = vector.extract_strided_slice %0 {offsets = [0, 132], sizes = [2, 9], strides = [1, 1]} : vector<2x147xf32> to vector<2x9xf32>
    %92 = tpu.concatenate %89, %90, %91 in 1 : vector<2x9xf32>, vector<2x9xf32>, vector<2x9xf32> -> vector<2x27xf32>
    %93 = vector.extract_strided_slice %0 {offsets = [0, 93], sizes = [2, 9], strides = [1, 1]} : vector<2x147xf32> to vector<2x9xf32>
    %94 = vector.extract_strided_slice %0 {offsets = [0, 114], sizes = [2, 9], strides = [1, 1]} : vector<2x147xf32> to vector<2x9xf32>
    %95 = vector.extract_strided_slice %0 {offsets = [0, 135], sizes = [2, 9], strides = [1, 1]} : vector<2x147xf32> to vector<2x9xf32>
    %96 = tpu.concatenate %93, %94, %95 in 1 : vector<2x9xf32>, vector<2x9xf32>, vector<2x9xf32> -> vector<2x27xf32>
    %97 = vector.extract_strided_slice %0 {offsets = [0, 96], sizes = [2, 9], strides = [1, 1]} : vector<2x147xf32> to vector<2x9xf32>
    %98 = vector.extract_strided_slice %0 {offsets = [0, 117], sizes = [2, 9], strides = [1, 1]} : vector<2x147xf32> to vector<2x9xf32>
    %99 = vector.extract_strided_slice %0 {offsets = [0, 138], sizes = [2, 9], strides = [1, 1]} : vector<2x147xf32> to vector<2x9xf32>
    %100 = tpu.concatenate %97, %98, %99 in 1 : vector<2x9xf32>, vector<2x9xf32>, vector<2x9xf32> -> vector<2x27xf32>
    %101 = vector.shape_cast %4 : vector<2x27xf32> to vector<1x2x27xf32>
    %102 = vector.shape_cast %8 : vector<2x27xf32> to vector<1x2x27xf32>
    %103 = vector.shape_cast %12 : vector<2x27xf32> to vector<1x2x27xf32>
    %104 = vector.shape_cast %16 : vector<2x27xf32> to vector<1x2x27xf32>
    %105 = vector.shape_cast %20 : vector<2x27xf32> to vector<1x2x27xf32>
    %106 = vector.shape_cast %24 : vector<2x27xf32> to vector<1x2x27xf32>
    %107 = vector.shape_cast %28 : vector<2x27xf32> to vector<1x2x27xf32>
    %108 = vector.shape_cast %32 : vector<2x27xf32> to vector<1x2x27xf32>
    %109 = vector.shape_cast %36 : vector<2x27xf32> to vector<1x2x27xf32>
    %110 = vector.shape_cast %40 : vector<2x27xf32> to vector<1x2x27xf32>
    %111 = vector.shape_cast %44 : vector<2x27xf32> to vector<1x2x27xf32>
    %112 = vector.shape_cast %48 : vector<2x27xf32> to vector<1x2x27xf32>
    %113 = vector.shape_cast %52 : vector<2x27xf32> to vector<1x2x27xf32>
    %114 = vector.shape_cast %56 : vector<2x27xf32> to vector<1x2x27xf32>
    %115 = vector.shape_cast %60 : vector<2x27xf32> to vector<1x2x27xf32>
    %116 = vector.shape_cast %64 : vector<2x27xf32> to vector<1x2x27xf32>
    %117 = vector.shape_cast %68 : vector<2x27xf32> to vector<1x2x27xf32>
    %118 = vector.shape_cast %72 : vector<2x27xf32> to vector<1x2x27xf32>
    %119 = vector.shape_cast %76 : vector<2x27xf32> to vector<1x2x27xf32>
    %120 = vector.shape_cast %80 : vector<2x27xf32> to vector<1x2x27xf32>
    %121 = vector.shape_cast %84 : vector<2x27xf32> to vector<1x2x27xf32>
    %122 = vector.shape_cast %88 : vector<2x27xf32> to vector<1x2x27xf32>
    %123 = vector.shape_cast %92 : vector<2x27xf32> to vector<1x2x27xf32>
    %124 = vector.shape_cast %96 : vector<2x27xf32> to vector<1x2x27xf32>
    %125 = vector.shape_cast %100 : vector<2x27xf32> to vector<1x2x27xf32>
    %126 = tpu.concatenate %101, %102, %103, %104, %105, %106, %107, %108, %109, %110, %111, %112, %113, %114, %115, %116 in 0 : vector<1x2x27xf32>, vector<1x2x27xf32>, vector<1x2x27xf32>, vector<1x2x27xf32>, vector<1x2x27xf32>, vector<1x2x27xf32>, vector<1x2x27xf32>, vector<1x2x27xf32>, vector<1x2x27xf32>, vector<1x2x27xf32>, vector<1x2x27xf32>, vector<1x2x27xf32>, vector<1x2x27xf32>, vector<1x2x27xf32>, vector<1x2x27xf32>, vector<1x2x27xf32> -> vector<16x2x27xf32>
    %127 = tpu.concatenate %117, %118, %119, %120, %121, %122, %123, %124, %125 in 0 : vector<1x2x27xf32>, vector<1x2x27xf32>, vector<1x2x27xf32>, vector<1x2x27xf32>, vector<1x2x27xf32>, vector<1x2x27xf32>, vector<1x2x27xf32>, vector<1x2x27xf32>, vector<1x2x27xf32> -> vector<9x2x27xf32>
    %128 = tpu.concatenate %126, %127 in 0 : vector<16x2x27xf32>, vector<9x2x27xf32> -> vector<25x2x27xf32>
    %c0_1 = arith.constant 0 : index
    %c0_2 = arith.constant 0 : index
    %129 = vector.load %arg3[%c0_1, %c0_2] : memref<27x16xf32, #tpu.memory_space<vmem>>, vector<27x16xf32>
    "tpu.trace_start"() <{level = 10 : i32, message = "pbk,kn->pbn"}> : () -> ()
    %cst = arith.constant dense<0.000000e+00> : vector<25x2x16xf32>
    %130 = tpu.matmul %128, %129, %cst {dimension_numbers = #tpu.dot_dimension_numbers<[2], [0], [0, 1], [1], [0, 0, 0, 1, 1, 1], [], []>} : vector<25x2x27xf32>, vector<27x16xf32>, vector<25x2x16xf32> -> vector<25x2x16xf32>
    "tpu.trace_stop"() : () -> ()
    %c0_3 = arith.constant 0 : index
    %c0_4 = arith.constant 0 : index
    %131 = vector.load %arg4[%c0_3, %c0_4] : memref<1x16xf32, #tpu.memory_space<vmem>>, vector<1x16xf32>
    %132 = vector.shape_cast %131 : vector<1x16xf32> to vector<1x1x16xf32>
    %133 = vector.broadcast %132 : vector<1x1x16xf32> to vector<25x2x16xf32>
    %134 = arith.addf %130, %133 : vector<25x2x16xf32>
    %cst_5 = arith.constant 0.000000e+00 : f32
    %135 = vector.broadcast %cst_5 : f32 to vector<25x2x16xf32>
    %136 = arith.maximumf %134, %135 : vector<25x2x16xf32>
    %137 = vector.extract_strided_slice %136 {offsets = [0, 0, 0], sizes = [1, 2, 16], strides = [1, 1, 1]} : vector<25x2x16xf32> to vector<1x2x16xf32>
    %138 = vector.shape_cast %137 : vector<1x2x16xf32> to vector<2x16xf32>
    %139 = vector.extract_strided_slice %136 {offsets = [1, 0, 0], sizes = [1, 2, 16], strides = [1, 1, 1]} : vector<25x2x16xf32> to vector<1x2x16xf32>
    %140 = vector.shape_cast %139 : vector<1x2x16xf32> to vector<2x16xf32>
    %141 = vector.extract_strided_slice %136 {offsets = [2, 0, 0], sizes = [1, 2, 16], strides = [1, 1, 1]} : vector<25x2x16xf32> to vector<1x2x16xf32>
    %142 = vector.shape_cast %141 : vector<1x2x16xf32> to vector<2x16xf32>
    %143 = vector.extract_strided_slice %136 {offsets = [5, 0, 0], sizes = [1, 2, 16], strides = [1, 1, 1]} : vector<25x2x16xf32> to vector<1x2x16xf32>
    %144 = vector.shape_cast %143 : vector<1x2x16xf32> to vector<2x16xf32>
    %145 = vector.extract_strided_slice %136 {offsets = [6, 0, 0], sizes = [1, 2, 16], strides = [1, 1, 1]} : vector<25x2x16xf32> to vector<1x2x16xf32>
    %146 = vector.shape_cast %145 : vector<1x2x16xf32> to vector<2x16xf32>
    %147 = vector.extract_strided_slice %136 {offsets = [7, 0, 0], sizes = [1, 2, 16], strides = [1, 1, 1]} : vector<25x2x16xf32> to vector<1x2x16xf32>
    %148 = vector.shape_cast %147 : vector<1x2x16xf32> to vector<2x16xf32>
    %149 = vector.extract_strided_slice %136 {offsets = [10, 0, 0], sizes = [1, 2, 16], strides = [1, 1, 1]} : vector<25x2x16xf32> to vector<1x2x16xf32>
    %150 = vector.shape_cast %149 : vector<1x2x16xf32> to vector<2x16xf32>
    %151 = vector.extract_strided_slice %136 {offsets = [11, 0, 0], sizes = [1, 2, 16], strides = [1, 1, 1]} : vector<25x2x16xf32> to vector<1x2x16xf32>
    %152 = vector.shape_cast %151 : vector<1x2x16xf32> to vector<2x16xf32>
    %153 = vector.extract_strided_slice %136 {offsets = [12, 0, 0], sizes = [1, 2, 16], strides = [1, 1, 1]} : vector<25x2x16xf32> to vector<1x2x16xf32>
    %154 = vector.shape_cast %153 : vector<1x2x16xf32> to vector<2x16xf32>
    %155 = tpu.concatenate %138, %140, %142, %144, %146, %148, %150, %152, %154 in 1 : vector<2x16xf32>, vector<2x16xf32>, vector<2x16xf32>, vector<2x16xf32>, vector<2x16xf32>, vector<2x16xf32>, vector<2x16xf32>, vector<2x16xf32>, vector<2x16xf32> -> vector<2x144xf32>
    %156 = vector.extract_strided_slice %136 {offsets = [1, 0, 0], sizes = [1, 2, 16], strides = [1, 1, 1]} : vector<25x2x16xf32> to vector<1x2x16xf32>
    %157 = vector.shape_cast %156 : vector<1x2x16xf32> to vector<2x16xf32>
    %158 = vector.extract_strided_slice %136 {offsets = [2, 0, 0], sizes = [1, 2, 16], strides = [1, 1, 1]} : vector<25x2x16xf32> to vector<1x2x16xf32>
    %159 = vector.shape_cast %158 : vector<1x2x16xf32> to vector<2x16xf32>
    %160 = vector.extract_strided_slice %136 {offsets = [3, 0, 0], sizes = [1, 2, 16], strides = [1, 1, 1]} : vector<25x2x16xf32> to vector<1x2x16xf32>
    %161 = vector.shape_cast %160 : vector<1x2x16xf32> to vector<2x16xf32>
    %162 = vector.extract_strided_slice %136 {offsets = [6, 0, 0], sizes = [1, 2, 16], strides = [1, 1, 1]} : vector<25x2x16xf32> to vector<1x2x16xf32>
    %163 = vector.shape_cast %162 : vector<1x2x16xf32> to vector<2x16xf32>
    %164 = vector.extract_strided_slice %136 {offsets = [7, 0, 0], sizes = [1, 2, 16], strides = [1, 1, 1]} : vector<25x2x16xf32> to vector<1x2x16xf32>
    %165 = vector.shape_cast %164 : vector<1x2x16xf32> to vector<2x16xf32>
    %166 = vector.extract_strided_slice %136 {offsets = [8, 0, 0], sizes = [1, 2, 16], strides = [1, 1, 1]} : vector<25x2x16xf32> to vector<1x2x16xf32>
    %167 = vector.shape_cast %166 : vector<1x2x16xf32> to vector<2x16xf32>
    %168 = vector.extract_strided_slice %136 {offsets = [11, 0, 0], sizes = [1, 2, 16], strides = [1, 1, 1]} : vector<25x2x16xf32> to vector<1x2x16xf32>
    %169 = vector.shape_cast %168 : vector<1x2x16xf32> to vector<2x16xf32>
    %170 = vector.extract_strided_slice %136 {offsets = [12, 0, 0], sizes = [1, 2, 16], strides = [1, 1, 1]} : vector<25x2x16xf32> to vector<1x2x16xf32>
    %171 = vector.shape_cast %170 : vector<1x2x16xf32> to vector<2x16xf32>
    %172 = vector.extract_strided_slice %136 {offsets = [13, 0, 0], sizes = [1, 2, 16], strides = [1, 1, 1]} : vector<25x2x16xf32> to vector<1x2x16xf32>
    %173 = vector.shape_cast %172 : vector<1x2x16xf32> to vector<2x16xf32>
    %174 = tpu.concatenate %157, %159, %161, %163, %165, %167, %169, %171, %173 in 1 : vector<2x16xf32>, vector<2x16xf32>, vector<2x16xf32>, vector<2x16xf32>, vector<2x16xf32>, vector<2x16xf32>, vector<2x16xf32>, vector<2x16xf32>, vector<2x16xf32> -> vector<2x144xf32>
    %175 = vector.extract_strided_slice %136 {offsets = [2, 0, 0], sizes = [1, 2, 16], strides = [1, 1, 1]} : vector<25x2x16xf32> to vector<1x2x16xf32>
    %176 = vector.shape_cast %175 : vector<1x2x16xf32> to vector<2x16xf32>
    %177 = vector.extract_strided_slice %136 {offsets = [3, 0, 0], sizes = [1, 2, 16], strides = [1, 1, 1]} : vector<25x2x16xf32> to vector<1x2x16xf32>
    %178 = vector.shape_cast %177 : vector<1x2x16xf32> to vector<2x16xf32>
    %179 = vector.extract_strided_slice %136 {offsets = [4, 0, 0], sizes = [1, 2, 16], strides = [1, 1, 1]} : vector<25x2x16xf32> to vector<1x2x16xf32>
    %180 = vector.shape_cast %179 : vector<1x2x16xf32> to vector<2x16xf32>
    %181 = vector.extract_strided_slice %136 {offsets = [7, 0, 0], sizes = [1, 2, 16], strides = [1, 1, 1]} : vector<25x2x16xf32> to vector<1x2x16xf32>
    %182 = vector.shape_cast %181 : vector<1x2x16xf32> to vector<2x16xf32>
    %183 = vector.extract_strided_slice %136 {offsets = [8, 0, 0], sizes = [1, 2, 16], strides = [1, 1, 1]} : vector<25x2x16xf32> to vector<1x2x16xf32>
    %184 = vector.shape_cast %183 : vector<1x2x16xf32> to vector<2x16xf32>
    %185 = vector.extract_strided_slice %136 {offsets = [9, 0, 0], sizes = [1, 2, 16], strides = [1, 1, 1]} : vector<25x2x16xf32> to vector<1x2x16xf32>
    %186 = vector.shape_cast %185 : vector<1x2x16xf32> to vector<2x16xf32>
    %187 = vector.extract_strided_slice %136 {offsets = [12, 0, 0], sizes = [1, 2, 16], strides = [1, 1, 1]} : vector<25x2x16xf32> to vector<1x2x16xf32>
    %188 = vector.shape_cast %187 : vector<1x2x16xf32> to vector<2x16xf32>
    %189 = vector.extract_strided_slice %136 {offsets = [13, 0, 0], sizes = [1, 2, 16], strides = [1, 1, 1]} : vector<25x2x16xf32> to vector<1x2x16xf32>
    %190 = vector.shape_cast %189 : vector<1x2x16xf32> to vector<2x16xf32>
    %191 = vector.extract_strided_slice %136 {offsets = [14, 0, 0], sizes = [1, 2, 16], strides = [1, 1, 1]} : vector<25x2x16xf32> to vector<1x2x16xf32>
    %192 = vector.shape_cast %191 : vector<1x2x16xf32> to vector<2x16xf32>
    %193 = tpu.concatenate %176, %178, %180, %182, %184, %186, %188, %190, %192 in 1 : vector<2x16xf32>, vector<2x16xf32>, vector<2x16xf32>, vector<2x16xf32>, vector<2x16xf32>, vector<2x16xf32>, vector<2x16xf32>, vector<2x16xf32>, vector<2x16xf32> -> vector<2x144xf32>
    %194 = vector.extract_strided_slice %136 {offsets = [5, 0, 0], sizes = [1, 2, 16], strides = [1, 1, 1]} : vector<25x2x16xf32> to vector<1x2x16xf32>
    %195 = vector.shape_cast %194 : vector<1x2x16xf32> to vector<2x16xf32>
    %196 = vector.extract_strided_slice %136 {offsets = [6, 0, 0], sizes = [1, 2, 16], strides = [1, 1, 1]} : vector<25x2x16xf32> to vector<1x2x16xf32>
    %197 = vector.shape_cast %196 : vector<1x2x16xf32> to vector<2x16xf32>
    %198 = vector.extract_strided_slice %136 {offsets = [7, 0, 0], sizes = [1, 2, 16], strides = [1, 1, 1]} : vector<25x2x16xf32> to vector<1x2x16xf32>
    %199 = vector.shape_cast %198 : vector<1x2x16xf32> to vector<2x16xf32>
    %200 = vector.extract_strided_slice %136 {offsets = [10, 0, 0], sizes = [1, 2, 16], strides = [1, 1, 1]} : vector<25x2x16xf32> to vector<1x2x16xf32>
    %201 = vector.shape_cast %200 : vector<1x2x16xf32> to vector<2x16xf32>
    %202 = vector.extract_strided_slice %136 {offsets = [11, 0, 0], sizes = [1, 2, 16], strides = [1, 1, 1]} : vector<25x2x16xf32> to vector<1x2x16xf32>
    %203 = vector.shape_cast %202 : vector<1x2x16xf32> to vector<2x16xf32>
    %204 = vector.extract_strided_slice %136 {offsets = [12, 0, 0], sizes = [1, 2, 16], strides = [1, 1, 1]} : vector<25x2x16xf32> to vector<1x2x16xf32>
    %205 = vector.shape_cast %204 : vector<1x2x16xf32> to vector<2x16xf32>
    %206 = vector.extract_strided_slice %136 {offsets = [15, 0, 0], sizes = [1, 2, 16], strides = [1, 1, 1]} : vector<25x2x16xf32> to vector<1x2x16xf32>
    %207 = vector.shape_cast %206 : vector<1x2x16xf32> to vector<2x16xf32>
    %208 = vector.extract_strided_slice %136 {offsets = [16, 0, 0], sizes = [1, 2, 16], strides = [1, 1, 1]} : vector<25x2x16xf32> to vector<1x2x16xf32>
    %209 = vector.shape_cast %208 : vector<1x2x16xf32> to vector<2x16xf32>
    %210 = vector.extract_strided_slice %136 {offsets = [17, 0, 0], sizes = [1, 2, 16], strides = [1, 1, 1]} : vector<25x2x16xf32> to vector<1x2x16xf32>
    %211 = vector.shape_cast %210 : vector<1x2x16xf32> to vector<2x16xf32>
    %212 = tpu.concatenate %195, %197, %199, %201, %203, %205, %207, %209, %211 in 1 : vector<2x16xf32>, vector<2x16xf32>, vector<2x16xf32>, vector<2x16xf32>, vector<2x16xf32>, vector<2x16xf32>, vector<2x16xf32>, vector<2x16xf32>, vector<2x16xf32> -> vector<2x144xf32>
    %213 = vector.extract_strided_slice %136 {offsets = [6, 0, 0], sizes = [1, 2, 16], strides = [1, 1, 1]} : vector<25x2x16xf32> to vector<1x2x16xf32>
    %214 = vector.shape_cast %213 : vector<1x2x16xf32> to vector<2x16xf32>
    %215 = vector.extract_strided_slice %136 {offsets = [7, 0, 0], sizes = [1, 2, 16], strides = [1, 1, 1]} : vector<25x2x16xf32> to vector<1x2x16xf32>
    %216 = vector.shape_cast %215 : vector<1x2x16xf32> to vector<2x16xf32>
    %217 = vector.extract_strided_slice %136 {offsets = [8, 0, 0], sizes = [1, 2, 16], strides = [1, 1, 1]} : vector<25x2x16xf32> to vector<1x2x16xf32>
    %218 = vector.shape_cast %217 : vector<1x2x16xf32> to vector<2x16xf32>
    %219 = vector.extract_strided_slice %136 {offsets = [11, 0, 0], sizes = [1, 2, 16], strides = [1, 1, 1]} : vector<25x2x16xf32> to vector<1x2x16xf32>
    %220 = vector.shape_cast %219 : vector<1x2x16xf32> to vector<2x16xf32>
    %221 = vector.extract_strided_slice %136 {offsets = [12, 0, 0], sizes = [1, 2, 16], strides = [1, 1, 1]} : vector<25x2x16xf32> to vector<1x2x16xf32>
    %222 = vector.shape_cast %221 : vector<1x2x16xf32> to vector<2x16xf32>
    %223 = vector.extract_strided_slice %136 {offsets = [13, 0, 0], sizes = [1, 2, 16], strides = [1, 1, 1]} : vector<25x2x16xf32> to vector<1x2x16xf32>
    %224 = vector.shape_cast %223 : vector<1x2x16xf32> to vector<2x16xf32>
    %225 = vector.extract_strided_slice %136 {offsets = [16, 0, 0], sizes = [1, 2, 16], strides = [1, 1, 1]} : vector<25x2x16xf32> to vector<1x2x16xf32>
    %226 = vector.shape_cast %225 : vector<1x2x16xf32> to vector<2x16xf32>
    %227 = vector.extract_strided_slice %136 {offsets = [17, 0, 0], sizes = [1, 2, 16], strides = [1, 1, 1]} : vector<25x2x16xf32> to vector<1x2x16xf32>
    %228 = vector.shape_cast %227 : vector<1x2x16xf32> to vector<2x16xf32>
    %229 = vector.extract_strided_slice %136 {offsets = [18, 0, 0], sizes = [1, 2, 16], strides = [1, 1, 1]} : vector<25x2x16xf32> to vector<1x2x16xf32>
    %230 = vector.shape_cast %229 : vector<1x2x16xf32> to vector<2x16xf32>
    %231 = tpu.concatenate %214, %216, %218, %220, %222, %224, %226, %228, %230 in 1 : vector<2x16xf32>, vector<2x16xf32>, vector<2x16xf32>, vector<2x16xf32>, vector<2x16xf32>, vector<2x16xf32>, vector<2x16xf32>, vector<2x16xf32>, vector<2x16xf32> -> vector<2x144xf32>
    %232 = vector.extract_strided_slice %136 {offsets = [7, 0, 0], sizes = [1, 2, 16], strides = [1, 1, 1]} : vector<25x2x16xf32> to vector<1x2x16xf32>
    %233 = vector.shape_cast %232 : vector<1x2x16xf32> to vector<2x16xf32>
    %234 = vector.extract_strided_slice %136 {offsets = [8, 0, 0], sizes = [1, 2, 16], strides = [1, 1, 1]} : vector<25x2x16xf32> to vector<1x2x16xf32>
    %235 = vector.shape_cast %234 : vector<1x2x16xf32> to vector<2x16xf32>
    %236 = vector.extract_strided_slice %136 {offsets = [9, 0, 0], sizes = [1, 2, 16], strides = [1, 1, 1]} : vector<25x2x16xf32> to vector<1x2x16xf32>
    %237 = vector.shape_cast %236 : vector<1x2x16xf32> to vector<2x16xf32>
    %238 = vector.extract_strided_slice %136 {offsets = [12, 0, 0], sizes = [1, 2, 16], strides = [1, 1, 1]} : vector<25x2x16xf32> to vector<1x2x16xf32>
    %239 = vector.shape_cast %238 : vector<1x2x16xf32> to vector<2x16xf32>
    %240 = vector.extract_strided_slice %136 {offsets = [13, 0, 0], sizes = [1, 2, 16], strides = [1, 1, 1]} : vector<25x2x16xf32> to vector<1x2x16xf32>
    %241 = vector.shape_cast %240 : vector<1x2x16xf32> to vector<2x16xf32>
    %242 = vector.extract_strided_slice %136 {offsets = [14, 0, 0], sizes = [1, 2, 16], strides = [1, 1, 1]} : vector<25x2x16xf32> to vector<1x2x16xf32>
    %243 = vector.shape_cast %242 : vector<1x2x16xf32> to vector<2x16xf32>
    %244 = vector.extract_strided_slice %136 {offsets = [17, 0, 0], sizes = [1, 2, 16], strides = [1, 1, 1]} : vector<25x2x16xf32> to vector<1x2x16xf32>
    %245 = vector.shape_cast %244 : vector<1x2x16xf32> to vector<2x16xf32>
    %246 = vector.extract_strided_slice %136 {offsets = [18, 0, 0], sizes = [1, 2, 16], strides = [1, 1, 1]} : vector<25x2x16xf32> to vector<1x2x16xf32>
    %247 = vector.shape_cast %246 : vector<1x2x16xf32> to vector<2x16xf32>
    %248 = vector.extract_strided_slice %136 {offsets = [19, 0, 0], sizes = [1, 2, 16], strides = [1, 1, 1]} : vector<25x2x16xf32> to vector<1x2x16xf32>
    %249 = vector.shape_cast %248 : vector<1x2x16xf32> to vector<2x16xf32>
    %250 = tpu.concatenate %233, %235, %237, %239, %241, %243, %245, %247, %249 in 1 : vector<2x16xf32>, vector<2x16xf32>, vector<2x16xf32>, vector<2x16xf32>, vector<2x16xf32>, vector<2x16xf32>, vector<2x16xf32>, vector<2x16xf32>, vector<2x16xf32> -> vector<2x144xf32>
    %251 = vector.extract_strided_slice %136 {offsets = [10, 0, 0], sizes = [1, 2, 16], strides = [1, 1, 1]} : vector<25x2x16xf32> to vector<1x2x16xf32>
    %252 = vector.shape_cast %251 : vector<1x2x16xf32> to vector<2x16xf32>
    %253 = vector.extract_strided_slice %136 {offsets = [11, 0, 0], sizes = [1, 2, 16], strides = [1, 1, 1]} : vector<25x2x16xf32> to vector<1x2x16xf32>
    %254 = vector.shape_cast %253 : vector<1x2x16xf32> to vector<2x16xf32>
    %255 = vector.extract_strided_slice %136 {offsets = [12, 0, 0], sizes = [1, 2, 16], strides = [1, 1, 1]} : vector<25x2x16xf32> to vector<1x2x16xf32>
    %256 = vector.shape_cast %255 : vector<1x2x16xf32> to vector<2x16xf32>
    %257 = vector.extract_strided_slice %136 {offsets = [15, 0, 0], sizes = [1, 2, 16], strides = [1, 1, 1]} : vector<25x2x16xf32> to vector<1x2x16xf32>
    %258 = vector.shape_cast %257 : vector<1x2x16xf32> to vector<2x16xf32>
    %259 = vector.extract_strided_slice %136 {offsets = [16, 0, 0], sizes = [1, 2, 16], strides = [1, 1, 1]} : vector<25x2x16xf32> to vector<1x2x16xf32>
    %260 = vector.shape_cast %259 : vector<1x2x16xf32> to vector<2x16xf32>
    %261 = vector.extract_strided_slice %136 {offsets = [17, 0, 0], sizes = [1, 2, 16], strides = [1, 1, 1]} : vector<25x2x16xf32> to vector<1x2x16xf32>
    %262 = vector.shape_cast %261 : vector<1x2x16xf32> to vector<2x16xf32>
    %263 = vector.extract_strided_slice %136 {offsets = [20, 0, 0], sizes = [1, 2, 16], strides = [1, 1, 1]} : vector<25x2x16xf32> to vector<1x2x16xf32>
    %264 = vector.shape_cast %263 : vector<1x2x16xf32> to vector<2x16xf32>
    %265 = vector.extract_strided_slice %136 {offsets = [21, 0, 0], sizes = [1, 2, 16], strides = [1, 1, 1]} : vector<25x2x16xf32> to vector<1x2x16xf32>
    %266 = vector.shape_cast %265 : vector<1x2x16xf32> to vector<2x16xf32>
    %267 = vector.extract_strided_slice %136 {offsets = [22, 0, 0], sizes = [1, 2, 16], strides = [1, 1, 1]} : vector<25x2x16xf32> to vector<1x2x16xf32>
    %268 = vector.shape_cast %267 : vector<1x2x16xf32> to vector<2x16xf32>
    %269 = tpu.concatenate %252, %254, %256, %258, %260, %262, %264, %266, %268 in 1 : vector<2x16xf32>, vector<2x16xf32>, vector<2x16xf32>, vector<2x16xf32>, vector<2x16xf32>, vector<2x16xf32>, vector<2x16xf32>, vector<2x16xf32>, vector<2x16xf32> -> vector<2x144xf32>
    %270 = vector.extract_strided_slice %136 {offsets = [11, 0, 0], sizes = [1, 2, 16], strides = [1, 1, 1]} : vector<25x2x16xf32> to vector<1x2x16xf32>
    %271 = vector.shape_cast %270 : vector<1x2x16xf32> to vector<2x16xf32>
    %272 = vector.extract_strided_slice %136 {offsets = [12, 0, 0], sizes = [1, 2, 16], strides = [1, 1, 1]} : vector<25x2x16xf32> to vector<1x2x16xf32>
    %273 = vector.shape_cast %272 : vector<1x2x16xf32> to vector<2x16xf32>
    %274 = vector.extract_strided_slice %136 {offsets = [13, 0, 0], sizes = [1, 2, 16], strides = [1, 1, 1]} : vector<25x2x16xf32> to vector<1x2x16xf32>
    %275 = vector.shape_cast %274 : vector<1x2x16xf32> to vector<2x16xf32>
    %276 = vector.extract_strided_slice %136 {offsets = [16, 0, 0], sizes = [1, 2, 16], strides = [1, 1, 1]} : vector<25x2x16xf32> to vector<1x2x16xf32>
    %277 = vector.shape_cast %276 : vector<1x2x16xf32> to vector<2x16xf32>
    %278 = vector.extract_strided_slice %136 {offsets = [17, 0, 0], sizes = [1, 2, 16], strides = [1, 1, 1]} : vector<25x2x16xf32> to vector<1x2x16xf32>
    %279 = vector.shape_cast %278 : vector<1x2x16xf32> to vector<2x16xf32>
    %280 = vector.extract_strided_slice %136 {offsets = [18, 0, 0], sizes = [1, 2, 16], strides = [1, 1, 1]} : vector<25x2x16xf32> to vector<1x2x16xf32>
    %281 = vector.shape_cast %280 : vector<1x2x16xf32> to vector<2x16xf32>
    %282 = vector.extract_strided_slice %136 {offsets = [21, 0, 0], sizes = [1, 2, 16], strides = [1, 1, 1]} : vector<25x2x16xf32> to vector<1x2x16xf32>
    %283 = vector.shape_cast %282 : vector<1x2x16xf32> to vector<2x16xf32>
    %284 = vector.extract_strided_slice %136 {offsets = [22, 0, 0], sizes = [1, 2, 16], strides = [1, 1, 1]} : vector<25x2x16xf32> to vector<1x2x16xf32>
    %285 = vector.shape_cast %284 : vector<1x2x16xf32> to vector<2x16xf32>
    %286 = vector.extract_strided_slice %136 {offsets = [23, 0, 0], sizes = [1, 2, 16], strides = [1, 1, 1]} : vector<25x2x16xf32> to vector<1x2x16xf32>
    %287 = vector.shape_cast %286 : vector<1x2x16xf32> to vector<2x16xf32>
    %288 = tpu.concatenate %271, %273, %275, %277, %279, %281, %283, %285, %287 in 1 : vector<2x16xf32>, vector<2x16xf32>, vector<2x16xf32>, vector<2x16xf32>, vector<2x16xf32>, vector<2x16xf32>, vector<2x16xf32>, vector<2x16xf32>, vector<2x16xf32> -> vector<2x144xf32>
    %289 = vector.extract_strided_slice %136 {offsets = [12, 0, 0], sizes = [1, 2, 16], strides = [1, 1, 1]} : vector<25x2x16xf32> to vector<1x2x16xf32>
    %290 = vector.shape_cast %289 : vector<1x2x16xf32> to vector<2x16xf32>
    %291 = vector.extract_strided_slice %136 {offsets = [13, 0, 0], sizes = [1, 2, 16], strides = [1, 1, 1]} : vector<25x2x16xf32> to vector<1x2x16xf32>
    %292 = vector.shape_cast %291 : vector<1x2x16xf32> to vector<2x16xf32>
    %293 = vector.extract_strided_slice %136 {offsets = [14, 0, 0], sizes = [1, 2, 16], strides = [1, 1, 1]} : vector<25x2x16xf32> to vector<1x2x16xf32>
    %294 = vector.shape_cast %293 : vector<1x2x16xf32> to vector<2x16xf32>
    %295 = vector.extract_strided_slice %136 {offsets = [17, 0, 0], sizes = [1, 2, 16], strides = [1, 1, 1]} : vector<25x2x16xf32> to vector<1x2x16xf32>
    %296 = vector.shape_cast %295 : vector<1x2x16xf32> to vector<2x16xf32>
    %297 = vector.extract_strided_slice %136 {offsets = [18, 0, 0], sizes = [1, 2, 16], strides = [1, 1, 1]} : vector<25x2x16xf32> to vector<1x2x16xf32>
    %298 = vector.shape_cast %297 : vector<1x2x16xf32> to vector<2x16xf32>
    %299 = vector.extract_strided_slice %136 {offsets = [19, 0, 0], sizes = [1, 2, 16], strides = [1, 1, 1]} : vector<25x2x16xf32> to vector<1x2x16xf32>
    %300 = vector.shape_cast %299 : vector<1x2x16xf32> to vector<2x16xf32>
    %301 = vector.extract_strided_slice %136 {offsets = [22, 0, 0], sizes = [1, 2, 16], strides = [1, 1, 1]} : vector<25x2x16xf32> to vector<1x2x16xf32>
    %302 = vector.shape_cast %301 : vector<1x2x16xf32> to vector<2x16xf32>
    %303 = vector.extract_strided_slice %136 {offsets = [23, 0, 0], sizes = [1, 2, 16], strides = [1, 1, 1]} : vector<25x2x16xf32> to vector<1x2x16xf32>
    %304 = vector.shape_cast %303 : vector<1x2x16xf32> to vector<2x16xf32>
    %305 = vector.extract_strided_slice %136 {offsets = [24, 0, 0], sizes = [1, 2, 16], strides = [1, 1, 1]} : vector<25x2x16xf32> to vector<1x2x16xf32>
    %306 = vector.shape_cast %305 : vector<1x2x16xf32> to vector<2x16xf32>
    %307 = tpu.concatenate %290, %292, %294, %296, %298, %300, %302, %304, %306 in 1 : vector<2x16xf32>, vector<2x16xf32>, vector<2x16xf32>, vector<2x16xf32>, vector<2x16xf32>, vector<2x16xf32>, vector<2x16xf32>, vector<2x16xf32>, vector<2x16xf32> -> vector<2x144xf32>
    %308 = vector.shape_cast %155 : vector<2x144xf32> to vector<1x2x144xf32>
    %309 = vector.shape_cast %174 : vector<2x144xf32> to vector<1x2x144xf32>
    %310 = vector.shape_cast %193 : vector<2x144xf32> to vector<1x2x144xf32>
    %311 = vector.shape_cast %212 : vector<2x144xf32> to vector<1x2x144xf32>
    %312 = vector.shape_cast %231 : vector<2x144xf32> to vector<1x2x144xf32>
    %313 = vector.shape_cast %250 : vector<2x144xf32> to vector<1x2x144xf32>
    %314 = vector.shape_cast %269 : vector<2x144xf32> to vector<1x2x144xf32>
    %315 = vector.shape_cast %288 : vector<2x144xf32> to vector<1x2x144xf32>
    %316 = vector.shape_cast %307 : vector<2x144xf32> to vector<1x2x144xf32>
    %317 = tpu.concatenate %308, %309, %310, %311, %312, %313, %314, %315, %316 in 0 : vector<1x2x144xf32>, vector<1x2x144xf32>, vector<1x2x144xf32>, vector<1x2x144xf32>, vector<1x2x144xf32>, vector<1x2x144xf32>, vector<1x2x144xf32>, vector<1x2x144xf32>, vector<1x2x144xf32> -> vector<9x2x144xf32>
    %c0_6 = arith.constant 0 : index
    %c0_7 = arith.constant 0 : index
    %318 = vector.load %arg5[%c0_6, %c0_7] : memref<144x32xf32, #tpu.memory_space<vmem>>, vector<144x32xf32>
    "tpu.trace_start"() <{level = 10 : i32, message = "pbk,kn->pbn"}> : () -> ()
    %cst_8 = arith.constant dense<0.000000e+00> : vector<9x2x32xf32>
    %319 = tpu.matmul %317, %318, %cst_8 {dimension_numbers = #tpu.dot_dimension_numbers<[2], [0], [0, 1], [1], [0, 0, 0, 1, 1, 1], [], []>} : vector<9x2x144xf32>, vector<144x32xf32>, vector<9x2x32xf32> -> vector<9x2x32xf32>
    "tpu.trace_stop"() : () -> ()
    %c0_9 = arith.constant 0 : index
    %c0_10 = arith.constant 0 : index
    %320 = vector.load %arg6[%c0_9, %c0_10] : memref<1x32xf32, #tpu.memory_space<vmem>>, vector<1x32xf32>
    %321 = vector.shape_cast %320 : vector<1x32xf32> to vector<1x1x32xf32>
    %322 = vector.broadcast %321 : vector<1x1x32xf32> to vector<9x2x32xf32>
    %323 = arith.addf %319, %322 : vector<9x2x32xf32>
    %cst_11 = arith.constant 0.000000e+00 : f32
    %324 = vector.broadcast %cst_11 : f32 to vector<9x2x32xf32>
    %325 = arith.maximumf %323, %324 : vector<9x2x32xf32>
    %326 = vector.extract_strided_slice %325 {offsets = [0, 0, 0], sizes = [1, 2, 32], strides = [1, 1, 1]} : vector<9x2x32xf32> to vector<1x2x32xf32>
    %327 = vector.shape_cast %326 : vector<1x2x32xf32> to vector<2x32xf32>
    %328 = vector.extract_strided_slice %325 {offsets = [1, 0, 0], sizes = [1, 2, 32], strides = [1, 1, 1]} : vector<9x2x32xf32> to vector<1x2x32xf32>
    %329 = vector.shape_cast %328 : vector<1x2x32xf32> to vector<2x32xf32>
    %330 = vector.extract_strided_slice %325 {offsets = [3, 0, 0], sizes = [1, 2, 32], strides = [1, 1, 1]} : vector<9x2x32xf32> to vector<1x2x32xf32>
    %331 = vector.shape_cast %330 : vector<1x2x32xf32> to vector<2x32xf32>
    %332 = vector.extract_strided_slice %325 {offsets = [4, 0, 0], sizes = [1, 2, 32], strides = [1, 1, 1]} : vector<9x2x32xf32> to vector<1x2x32xf32>
    %333 = vector.shape_cast %332 : vector<1x2x32xf32> to vector<2x32xf32>
    %334 = tpu.concatenate %327, %329, %331, %333 in 1 : vector<2x32xf32>, vector<2x32xf32>, vector<2x32xf32>, vector<2x32xf32> -> vector<2x128xf32>
    %335 = vector.extract_strided_slice %325 {offsets = [1, 0, 0], sizes = [1, 2, 32], strides = [1, 1, 1]} : vector<9x2x32xf32> to vector<1x2x32xf32>
    %336 = vector.shape_cast %335 : vector<1x2x32xf32> to vector<2x32xf32>
    %337 = vector.extract_strided_slice %325 {offsets = [2, 0, 0], sizes = [1, 2, 32], strides = [1, 1, 1]} : vector<9x2x32xf32> to vector<1x2x32xf32>
    %338 = vector.shape_cast %337 : vector<1x2x32xf32> to vector<2x32xf32>
    %339 = vector.extract_strided_slice %325 {offsets = [4, 0, 0], sizes = [1, 2, 32], strides = [1, 1, 1]} : vector<9x2x32xf32> to vector<1x2x32xf32>
    %340 = vector.shape_cast %339 : vector<1x2x32xf32> to vector<2x32xf32>
    %341 = vector.extract_strided_slice %325 {offsets = [5, 0, 0], sizes = [1, 2, 32], strides = [1, 1, 1]} : vector<9x2x32xf32> to vector<1x2x32xf32>
    %342 = vector.shape_cast %341 : vector<1x2x32xf32> to vector<2x32xf32>
    %343 = tpu.concatenate %336, %338, %340, %342 in 1 : vector<2x32xf32>, vector<2x32xf32>, vector<2x32xf32>, vector<2x32xf32> -> vector<2x128xf32>
    %344 = vector.extract_strided_slice %325 {offsets = [3, 0, 0], sizes = [1, 2, 32], strides = [1, 1, 1]} : vector<9x2x32xf32> to vector<1x2x32xf32>
    %345 = vector.shape_cast %344 : vector<1x2x32xf32> to vector<2x32xf32>
    %346 = vector.extract_strided_slice %325 {offsets = [4, 0, 0], sizes = [1, 2, 32], strides = [1, 1, 1]} : vector<9x2x32xf32> to vector<1x2x32xf32>
    %347 = vector.shape_cast %346 : vector<1x2x32xf32> to vector<2x32xf32>
    %348 = vector.extract_strided_slice %325 {offsets = [6, 0, 0], sizes = [1, 2, 32], strides = [1, 1, 1]} : vector<9x2x32xf32> to vector<1x2x32xf32>
    %349 = vector.shape_cast %348 : vector<1x2x32xf32> to vector<2x32xf32>
    %350 = vector.extract_strided_slice %325 {offsets = [7, 0, 0], sizes = [1, 2, 32], strides = [1, 1, 1]} : vector<9x2x32xf32> to vector<1x2x32xf32>
    %351 = vector.shape_cast %350 : vector<1x2x32xf32> to vector<2x32xf32>
    %352 = tpu.concatenate %345, %347, %349, %351 in 1 : vector<2x32xf32>, vector<2x32xf32>, vector<2x32xf32>, vector<2x32xf32> -> vector<2x128xf32>
    %353 = vector.extract_strided_slice %325 {offsets = [4, 0, 0], sizes = [1, 2, 32], strides = [1, 1, 1]} : vector<9x2x32xf32> to vector<1x2x32xf32>
    %354 = vector.shape_cast %353 : vector<1x2x32xf32> to vector<2x32xf32>
    %355 = vector.extract_strided_slice %325 {offsets = [5, 0, 0], sizes = [1, 2, 32], strides = [1, 1, 1]} : vector<9x2x32xf32> to vector<1x2x32xf32>
    %356 = vector.shape_cast %355 : vector<1x2x32xf32> to vector<2x32xf32>
    %357 = vector.extract_strided_slice %325 {offsets = [7, 0, 0], sizes = [1, 2, 32], strides = [1, 1, 1]} : vector<9x2x32xf32> to vector<1x2x32xf32>
    %358 = vector.shape_cast %357 : vector<1x2x32xf32> to vector<2x32xf32>
    %359 = vector.extract_strided_slice %325 {offsets = [8, 0, 0], sizes = [1, 2, 32], strides = [1, 1, 1]} : vector<9x2x32xf32> to vector<1x2x32xf32>
    %360 = vector.shape_cast %359 : vector<1x2x32xf32> to vector<2x32xf32>
    %361 = tpu.concatenate %354, %356, %358, %360 in 1 : vector<2x32xf32>, vector<2x32xf32>, vector<2x32xf32>, vector<2x32xf32> -> vector<2x128xf32>
    %362 = vector.shape_cast %334 : vector<2x128xf32> to vector<1x2x128xf32>
    %363 = vector.shape_cast %343 : vector<2x128xf32> to vector<1x2x128xf32>
    %364 = vector.shape_cast %352 : vector<2x128xf32> to vector<1x2x128xf32>
    %365 = vector.shape_cast %361 : vector<2x128xf32> to vector<1x2x128xf32>
    %366 = tpu.concatenate %362, %363, %364, %365 in 0 : vector<1x2x128xf32>, vector<1x2x128xf32>, vector<1x2x128xf32>, vector<1x2x128xf32> -> vector<4x2x128xf32>
    %c0_12 = arith.constant 0 : index
    %c0_13 = arith.constant 0 : index
    %367 = vector.load %arg7[%c0_12, %c0_13] : memref<128x32xf32, #tpu.memory_space<vmem>>, vector<128x32xf32>
    "tpu.trace_start"() <{level = 10 : i32, message = "pbk,kn->pbn"}> : () -> ()
    %cst_14 = arith.constant dense<0.000000e+00> : vector<4x2x32xf32>
    %368 = tpu.matmul %366, %367, %cst_14 {dimension_numbers = #tpu.dot_dimension_numbers<[2], [0], [0, 1], [1], [0, 0, 0, 1, 1, 1], [], []>} : vector<4x2x128xf32>, vector<128x32xf32>, vector<4x2x32xf32> -> vector<4x2x32xf32>
    "tpu.trace_stop"() : () -> ()
    %c0_15 = arith.constant 0 : index
    %c0_16 = arith.constant 0 : index
    %369 = vector.load %arg8[%c0_15, %c0_16] : memref<1x32xf32, #tpu.memory_space<vmem>>, vector<1x32xf32>
    %370 = vector.shape_cast %369 : vector<1x32xf32> to vector<1x1x32xf32>
    %371 = vector.broadcast %370 : vector<1x1x32xf32> to vector<4x2x32xf32>
    %372 = arith.addf %368, %371 : vector<4x2x32xf32>
    %cst_17 = arith.constant 0.000000e+00 : f32
    %373 = vector.broadcast %cst_17 : f32 to vector<4x2x32xf32>
    %374 = arith.maximumf %372, %373 : vector<4x2x32xf32>
    %375 = vector.extract_strided_slice %374 {offsets = [0, 0, 0], sizes = [1, 2, 32], strides = [1, 1, 1]} : vector<4x2x32xf32> to vector<1x2x32xf32>
    %376 = vector.shape_cast %375 : vector<1x2x32xf32> to vector<2x32xf32>
    %377 = vector.extract_strided_slice %374 {offsets = [1, 0, 0], sizes = [1, 2, 32], strides = [1, 1, 1]} : vector<4x2x32xf32> to vector<1x2x32xf32>
    %378 = vector.shape_cast %377 : vector<1x2x32xf32> to vector<2x32xf32>
    %379 = vector.extract_strided_slice %374 {offsets = [2, 0, 0], sizes = [1, 2, 32], strides = [1, 1, 1]} : vector<4x2x32xf32> to vector<1x2x32xf32>
    %380 = vector.shape_cast %379 : vector<1x2x32xf32> to vector<2x32xf32>
    %381 = vector.extract_strided_slice %374 {offsets = [3, 0, 0], sizes = [1, 2, 32], strides = [1, 1, 1]} : vector<4x2x32xf32> to vector<1x2x32xf32>
    %382 = vector.shape_cast %381 : vector<1x2x32xf32> to vector<2x32xf32>
    %383 = tpu.concatenate %376, %378, %380, %382 in 1 : vector<2x32xf32>, vector<2x32xf32>, vector<2x32xf32>, vector<2x32xf32> -> vector<2x128xf32>
    %c0_18 = arith.constant 0 : index
    %c0_19 = arith.constant 0 : index
    %384 = vector.load %arg1[%c0_18, %c0_19] : memref<20x1xi32, #tpu.memory_space<vmem>>, vector<20x1xi32>
    %385 = tpu.iota {dimensions = array<i32: 1>} : vector<20x14xi32>
    %386 = vector.broadcast %384 : vector<20x1xi32> to vector<20x14xi32>
    %387 = arith.cmpi eq, %386, %385 : vector<20x14xi32>
    %388 = arith.extui %387 : vector<20x14xi1> to vector<20x14xi32>
    %389 = arith.sitofp %388 : vector<20x14xi32> to vector<20x14xf32>
    %c0_20 = arith.constant 0 : index
    %c0_21 = arith.constant 0 : index
    %390 = vector.load %arg9[%c0_20, %c0_21] : memref<14x16xf32, #tpu.memory_space<vmem>>, vector<14x16xf32>
    %cst_22 = arith.constant dense<0.000000e+00> : vector<20x16xf32>
    %391 = tpu.matmul %389, %390, %cst_22 {dimension_numbers = #tpu.dot_dimension_numbers<[1], [0], [0], [1], [0, 0, 1, 1], [], []>} : vector<20x14xf32>, vector<14x16xf32>, vector<20x16xf32> -> vector<20x16xf32>
    %c0_23 = arith.constant 0 : index
    %c0_24 = arith.constant 0 : index
    %392 = vector.load %arg2[%c0_23, %c0_24] : memref<20x20xi32, #tpu.memory_space<vmem>>, vector<20x20xi32>
    %c8_i32 = arith.constant 8 : i32
    %393 = vector.broadcast %c8_i32 : i32 to vector<20x20xi32>
    %394 = arith.cmpi sge, %392, %393 : vector<20x20xi32>
    %cst_25 = arith.constant -1.000000e+09 : f32
    %cst_26 = arith.constant 0.000000e+00 : f32
    %395 = vector.broadcast %cst_25 : f32 to vector<20x20xf32>
    %396 = vector.broadcast %cst_26 : f32 to vector<20x20xf32>
    %397 = arith.select %394, %395, %396 : vector<20x20xi1>, vector<20x20xf32>
    %c0_i32 = arith.constant 0 : i32
    %398 = vector.broadcast %c0_i32 : i32 to vector<20x20xi32>
    %399 = arith.cmpi eq, %392, %398 : vector<20x20xi32>
    %c0_27 = arith.constant 0 : index
    %400 = memref.load %arg12[%c0_27] : memref<24xf32, #tpu.memory_space<smem>>
    %cst_28 = arith.constant 0.000000e+00 : f32
    %401 = vector.broadcast %400 : f32 to vector<20x20xf32>
    %402 = vector.broadcast %cst_28 : f32 to vector<20x20xf32>
    %403 = arith.select %399, %401, %402 : vector<20x20xi1>, vector<20x20xf32>
    %404 = arith.addf %397, %403 : vector<20x20xf32>
    %c1_i32 = arith.constant 1 : i32
    %405 = vector.broadcast %c1_i32 : i32 to vector<20x20xi32>
    %406 = arith.cmpi eq, %392, %405 : vector<20x20xi32>
    %c1 = arith.constant 1 : index
    %407 = memref.load %arg12[%c1] : memref<24xf32, #tpu.memory_space<smem>>
    %cst_29 = arith.constant 0.000000e+00 : f32
    %408 = vector.broadcast %407 : f32 to vector<20x20xf32>
    %409 = vector.broadcast %cst_29 : f32 to vector<20x20xf32>
    %410 = arith.select %406, %408, %409 : vector<20x20xi1>, vector<20x20xf32>
    %411 = arith.addf %404, %410 : vector<20x20xf32>
    %c2_i32 = arith.constant 2 : i32
    %412 = vector.broadcast %c2_i32 : i32 to vector<20x20xi32>
    %413 = arith.cmpi eq, %392, %412 : vector<20x20xi32>
    %c2 = arith.constant 2 : index
    %414 = memref.load %arg12[%c2] : memref<24xf32, #tpu.memory_space<smem>>
    %cst_30 = arith.constant 0.000000e+00 : f32
    %415 = vector.broadcast %414 : f32 to vector<20x20xf32>
    %416 = vector.broadcast %cst_30 : f32 to vector<20x20xf32>
    %417 = arith.select %413, %415, %416 : vector<20x20xi1>, vector<20x20xf32>
    %418 = arith.addf %411, %417 : vector<20x20xf32>
    %c3_i32 = arith.constant 3 : i32
    %419 = vector.broadcast %c3_i32 : i32 to vector<20x20xi32>
    %420 = arith.cmpi eq, %392, %419 : vector<20x20xi32>
    %c3 = arith.constant 3 : index
    %421 = memref.load %arg12[%c3] : memref<24xf32, #tpu.memory_space<smem>>
    %cst_31 = arith.constant 0.000000e+00 : f32
    %422 = vector.broadcast %421 : f32 to vector<20x20xf32>
    %423 = vector.broadcast %cst_31 : f32 to vector<20x20xf32>
    %424 = arith.select %420, %422, %423 : vector<20x20xi1>, vector<20x20xf32>
    %425 = arith.addf %418, %424 : vector<20x20xf32>
    %c4_i32 = arith.constant 4 : i32
    %426 = vector.broadcast %c4_i32 : i32 to vector<20x20xi32>
    %427 = arith.cmpi eq, %392, %426 : vector<20x20xi32>
    %c4 = arith.constant 4 : index
    %428 = memref.load %arg12[%c4] : memref<24xf32, #tpu.memory_space<smem>>
    %cst_32 = arith.constant 0.000000e+00 : f32
    %429 = vector.broadcast %428 : f32 to vector<20x20xf32>
    %430 = vector.broadcast %cst_32 : f32 to vector<20x20xf32>
    %431 = arith.select %427, %429, %430 : vector<20x20xi1>, vector<20x20xf32>
    %432 = arith.addf %425, %431 : vector<20x20xf32>
    %c5_i32 = arith.constant 5 : i32
    %433 = vector.broadcast %c5_i32 : i32 to vector<20x20xi32>
    %434 = arith.cmpi eq, %392, %433 : vector<20x20xi32>
    %c5 = arith.constant 5 : index
    %435 = memref.load %arg12[%c5] : memref<24xf32, #tpu.memory_space<smem>>
    %cst_33 = arith.constant 0.000000e+00 : f32
    %436 = vector.broadcast %435 : f32 to vector<20x20xf32>
    %437 = vector.broadcast %cst_33 : f32 to vector<20x20xf32>
    %438 = arith.select %434, %436, %437 : vector<20x20xi1>, vector<20x20xf32>
    %439 = arith.addf %432, %438 : vector<20x20xf32>
    %c6_i32 = arith.constant 6 : i32
    %440 = vector.broadcast %c6_i32 : i32 to vector<20x20xi32>
    %441 = arith.cmpi eq, %392, %440 : vector<20x20xi32>
    %c6 = arith.constant 6 : index
    %442 = memref.load %arg12[%c6] : memref<24xf32, #tpu.memory_space<smem>>
    %cst_34 = arith.constant 0.000000e+00 : f32
    %443 = vector.broadcast %442 : f32 to vector<20x20xf32>
    %444 = vector.broadcast %cst_34 : f32 to vector<20x20xf32>
    %445 = arith.select %441, %443, %444 : vector<20x20xi1>, vector<20x20xf32>
    %446 = arith.addf %439, %445 : vector<20x20xf32>
    %c7_i32 = arith.constant 7 : i32
    %447 = vector.broadcast %c7_i32 : i32 to vector<20x20xi32>
    %448 = arith.cmpi eq, %392, %447 : vector<20x20xi32>
    %c7 = arith.constant 7 : index
    %449 = memref.load %arg12[%c7] : memref<24xf32, #tpu.memory_space<smem>>
    %cst_35 = arith.constant 0.000000e+00 : f32
    %450 = vector.broadcast %449 : f32 to vector<20x20xf32>
    %451 = vector.broadcast %cst_35 : f32 to vector<20x20xf32>
    %452 = arith.select %448, %450, %451 : vector<20x20xi1>, vector<20x20xf32>
    %453 = arith.addf %446, %452 : vector<20x20xf32>
    %c0_36 = arith.constant 0 : index
    %c0_37 = arith.constant 0 : index
    %c0_38 = arith.constant 0 : index
    %454 = vector.load %arg10[%c0_36, %c0_37, %c0_38] : memref<3x16x48xf32, #tpu.memory_space<vmem>>, vector<1x16x48xf32>
    %455 = vector.shape_cast %454 : vector<1x16x48xf32> to vector<16x48xf32>
    %cst_39 = arith.constant dense<0.000000e+00> : vector<20x48xf32>
    %456 = tpu.matmul %391, %455, %cst_39 {dimension_numbers = #tpu.dot_dimension_numbers<[1], [0], [0], [1], [0, 0, 1, 1], [], []>} : vector<20x16xf32>, vector<16x48xf32>, vector<20x48xf32> -> vector<20x48xf32>
    %457 = vector.extract_strided_slice %456 {offsets = [0, 0], sizes = [20, 16], strides = [1, 1]} : vector<20x48xf32> to vector<20x16xf32>
    %458 = vector.extract_strided_slice %456 {offsets = [0, 16], sizes = [20, 16], strides = [1, 1]} : vector<20x48xf32> to vector<20x16xf32>
    %459 = vector.extract_strided_slice %456 {offsets = [0, 32], sizes = [20, 16], strides = [1, 1]} : vector<20x48xf32> to vector<20x16xf32>
    "tpu.trace_start"() <{level = 10 : i32, message = "se,te->st"}> : () -> ()
    %cst_40 = arith.constant dense<0.000000e+00> : vector<20x20xf32>
    %460 = tpu.matmul %457, %458, %cst_40 {dimension_numbers = #tpu.dot_dimension_numbers<[1], [1], [0], [0], [0, 0, 1, 0], [], []>} : vector<20x16xf32>, vector<20x16xf32>, vector<20x20xf32> -> vector<20x20xf32>
    "tpu.trace_stop"() : () -> ()
    %cst_41 = arith.constant 2.500000e-01 : f32
    %461 = vector.broadcast %cst_41 : f32 to vector<20x20xf32>
    %462 = arith.mulf %460, %461 : vector<20x20xf32>
    %463 = arith.addf %462, %453 : vector<20x20xf32>
    %cst_42 = arith.constant dense<0xFF800000> : vector<20xf32>
    %464 = vector.multi_reduction <maximumf>, %463, %cst_42 [1] : vector<20x20xf32> to vector<20xf32>
    %465 = vector.shape_cast %464 : vector<20xf32> to vector<20x1xf32>
    %466 = vector.broadcast %465 : vector<20x1xf32> to vector<20x20xf32>
    %467 = arith.subf %463, %466 : vector<20x20xf32>
    %468 = math.exp %467 : vector<20x20xf32>
    %cst_43 = arith.constant dense<0.000000e+00> : vector<20xf32>
    %469 = vector.multi_reduction <add>, %468, %cst_43 [1] : vector<20x20xf32> to vector<20xf32>
    %470 = vector.shape_cast %469 : vector<20xf32> to vector<20x1xf32>
    %471 = tpu.reciprocal %470 {approx = true} : vector<20x1xf32> -> vector<20x1xf32>
    %472 = vector.broadcast %471 : vector<20x1xf32> to vector<20x20xf32>
    %473 = arith.mulf %468, %472 : vector<20x20xf32>
    %cst_44 = arith.constant dense<0.000000e+00> : vector<20x16xf32>
    %474 = tpu.matmul %473, %459, %cst_44 {dimension_numbers = #tpu.dot_dimension_numbers<[1], [0], [0], [1], [0, 0, 1, 1], [], []>} : vector<20x20xf32>, vector<20x16xf32>, vector<20x16xf32> -> vector<20x16xf32>
    %c0_45 = arith.constant 0 : index
    %c0_46 = arith.constant 0 : index
    %c0_47 = arith.constant 0 : index
    %475 = vector.load %arg11[%c0_45, %c0_46, %c0_47] : memref<3x16x16xf32, #tpu.memory_space<vmem>>, vector<1x16x16xf32>
    %476 = vector.shape_cast %475 : vector<1x16x16xf32> to vector<16x16xf32>
    %cst_48 = arith.constant dense<0.000000e+00> : vector<20x16xf32>
    %477 = tpu.matmul %474, %476, %cst_48 {dimension_numbers = #tpu.dot_dimension_numbers<[1], [0], [0], [1], [0, 0, 1, 1], [], []>} : vector<20x16xf32>, vector<16x16xf32>, vector<20x16xf32> -> vector<20x16xf32>
    %478 = arith.addf %391, %477 : vector<20x16xf32>
    %cst_49 = arith.constant 0.000000e+00 : f32
    %479 = vector.broadcast %cst_49 : f32 to vector<20x16xf32>
    %480 = arith.maximumf %478, %479 : vector<20x16xf32>
    %c0_i32_50 = arith.constant 0 : i32
    %481 = vector.broadcast %c0_i32_50 : i32 to vector<20x20xi32>
    %482 = arith.cmpi eq, %392, %481 : vector<20x20xi32>
    %c8 = arith.constant 8 : index
    %483 = memref.load %arg12[%c8] : memref<24xf32, #tpu.memory_space<smem>>
    %cst_51 = arith.constant 0.000000e+00 : f32
    %484 = vector.broadcast %483 : f32 to vector<20x20xf32>
    %485 = vector.broadcast %cst_51 : f32 to vector<20x20xf32>
    %486 = arith.select %482, %484, %485 : vector<20x20xi1>, vector<20x20xf32>
    %487 = arith.addf %397, %486 : vector<20x20xf32>
    %c1_i32_52 = arith.constant 1 : i32
    %488 = vector.broadcast %c1_i32_52 : i32 to vector<20x20xi32>
    %489 = arith.cmpi eq, %392, %488 : vector<20x20xi32>
    %c9 = arith.constant 9 : index
    %490 = memref.load %arg12[%c9] : memref<24xf32, #tpu.memory_space<smem>>
    %cst_53 = arith.constant 0.000000e+00 : f32
    %491 = vector.broadcast %490 : f32 to vector<20x20xf32>
    %492 = vector.broadcast %cst_53 : f32 to vector<20x20xf32>
    %493 = arith.select %489, %491, %492 : vector<20x20xi1>, vector<20x20xf32>
    %494 = arith.addf %487, %493 : vector<20x20xf32>
    %c2_i32_54 = arith.constant 2 : i32
    %495 = vector.broadcast %c2_i32_54 : i32 to vector<20x20xi32>
    %496 = arith.cmpi eq, %392, %495 : vector<20x20xi32>
    %c10 = arith.constant 10 : index
    %497 = memref.load %arg12[%c10] : memref<24xf32, #tpu.memory_space<smem>>
    %cst_55 = arith.constant 0.000000e+00 : f32
    %498 = vector.broadcast %497 : f32 to vector<20x20xf32>
    %499 = vector.broadcast %cst_55 : f32 to vector<20x20xf32>
    %500 = arith.select %496, %498, %499 : vector<20x20xi1>, vector<20x20xf32>
    %501 = arith.addf %494, %500 : vector<20x20xf32>
    %c3_i32_56 = arith.constant 3 : i32
    %502 = vector.broadcast %c3_i32_56 : i32 to vector<20x20xi32>
    %503 = arith.cmpi eq, %392, %502 : vector<20x20xi32>
    %c11 = arith.constant 11 : index
    %504 = memref.load %arg12[%c11] : memref<24xf32, #tpu.memory_space<smem>>
    %cst_57 = arith.constant 0.000000e+00 : f32
    %505 = vector.broadcast %504 : f32 to vector<20x20xf32>
    %506 = vector.broadcast %cst_57 : f32 to vector<20x20xf32>
    %507 = arith.select %503, %505, %506 : vector<20x20xi1>, vector<20x20xf32>
    %508 = arith.addf %501, %507 : vector<20x20xf32>
    %c4_i32_58 = arith.constant 4 : i32
    %509 = vector.broadcast %c4_i32_58 : i32 to vector<20x20xi32>
    %510 = arith.cmpi eq, %392, %509 : vector<20x20xi32>
    %c12 = arith.constant 12 : index
    %511 = memref.load %arg12[%c12] : memref<24xf32, #tpu.memory_space<smem>>
    %cst_59 = arith.constant 0.000000e+00 : f32
    %512 = vector.broadcast %511 : f32 to vector<20x20xf32>
    %513 = vector.broadcast %cst_59 : f32 to vector<20x20xf32>
    %514 = arith.select %510, %512, %513 : vector<20x20xi1>, vector<20x20xf32>
    %515 = arith.addf %508, %514 : vector<20x20xf32>
    %c5_i32_60 = arith.constant 5 : i32
    %516 = vector.broadcast %c5_i32_60 : i32 to vector<20x20xi32>
    %517 = arith.cmpi eq, %392, %516 : vector<20x20xi32>
    %c13 = arith.constant 13 : index
    %518 = memref.load %arg12[%c13] : memref<24xf32, #tpu.memory_space<smem>>
    %cst_61 = arith.constant 0.000000e+00 : f32
    %519 = vector.broadcast %518 : f32 to vector<20x20xf32>
    %520 = vector.broadcast %cst_61 : f32 to vector<20x20xf32>
    %521 = arith.select %517, %519, %520 : vector<20x20xi1>, vector<20x20xf32>
    %522 = arith.addf %515, %521 : vector<20x20xf32>
    %c6_i32_62 = arith.constant 6 : i32
    %523 = vector.broadcast %c6_i32_62 : i32 to vector<20x20xi32>
    %524 = arith.cmpi eq, %392, %523 : vector<20x20xi32>
    %c14 = arith.constant 14 : index
    %525 = memref.load %arg12[%c14] : memref<24xf32, #tpu.memory_space<smem>>
    %cst_63 = arith.constant 0.000000e+00 : f32
    %526 = vector.broadcast %525 : f32 to vector<20x20xf32>
    %527 = vector.broadcast %cst_63 : f32 to vector<20x20xf32>
    %528 = arith.select %524, %526, %527 : vector<20x20xi1>, vector<20x20xf32>
    %529 = arith.addf %522, %528 : vector<20x20xf32>
    %c7_i32_64 = arith.constant 7 : i32
    %530 = vector.broadcast %c7_i32_64 : i32 to vector<20x20xi32>
    %531 = arith.cmpi eq, %392, %530 : vector<20x20xi32>
    %c15 = arith.constant 15 : index
    %532 = memref.load %arg12[%c15] : memref<24xf32, #tpu.memory_space<smem>>
    %cst_65 = arith.constant 0.000000e+00 : f32
    %533 = vector.broadcast %532 : f32 to vector<20x20xf32>
    %534 = vector.broadcast %cst_65 : f32 to vector<20x20xf32>
    %535 = arith.select %531, %533, %534 : vector<20x20xi1>, vector<20x20xf32>
    %536 = arith.addf %529, %535 : vector<20x20xf32>
    %c1_66 = arith.constant 1 : index
    %c0_67 = arith.constant 0 : index
    %c0_68 = arith.constant 0 : index
    %537 = vector.load %arg10[%c1_66, %c0_67, %c0_68] : memref<3x16x48xf32, #tpu.memory_space<vmem>>, vector<1x16x48xf32>
    %538 = vector.shape_cast %537 : vector<1x16x48xf32> to vector<16x48xf32>
    %cst_69 = arith.constant dense<0.000000e+00> : vector<20x48xf32>
    %539 = tpu.matmul %480, %538, %cst_69 {dimension_numbers = #tpu.dot_dimension_numbers<[1], [0], [0], [1], [0, 0, 1, 1], [], []>} : vector<20x16xf32>, vector<16x48xf32>, vector<20x48xf32> -> vector<20x48xf32>
    %540 = vector.extract_strided_slice %539 {offsets = [0, 0], sizes = [20, 16], strides = [1, 1]} : vector<20x48xf32> to vector<20x16xf32>
    %541 = vector.extract_strided_slice %539 {offsets = [0, 16], sizes = [20, 16], strides = [1, 1]} : vector<20x48xf32> to vector<20x16xf32>
    %542 = vector.extract_strided_slice %539 {offsets = [0, 32], sizes = [20, 16], strides = [1, 1]} : vector<20x48xf32> to vector<20x16xf32>
    "tpu.trace_start"() <{level = 10 : i32, message = "se,te->st"}> : () -> ()
    %cst_70 = arith.constant dense<0.000000e+00> : vector<20x20xf32>
    %543 = tpu.matmul %540, %541, %cst_70 {dimension_numbers = #tpu.dot_dimension_numbers<[1], [1], [0], [0], [0, 0, 1, 0], [], []>} : vector<20x16xf32>, vector<20x16xf32>, vector<20x20xf32> -> vector<20x20xf32>
    "tpu.trace_stop"() : () -> ()
    %cst_71 = arith.constant 2.500000e-01 : f32
    %544 = vector.broadcast %cst_71 : f32 to vector<20x20xf32>
    %545 = arith.mulf %543, %544 : vector<20x20xf32>
    %546 = arith.addf %545, %536 : vector<20x20xf32>
    %cst_72 = arith.constant dense<0xFF800000> : vector<20xf32>
    %547 = vector.multi_reduction <maximumf>, %546, %cst_72 [1] : vector<20x20xf32> to vector<20xf32>
    %548 = vector.shape_cast %547 : vector<20xf32> to vector<20x1xf32>
    %549 = vector.broadcast %548 : vector<20x1xf32> to vector<20x20xf32>
    %550 = arith.subf %546, %549 : vector<20x20xf32>
    %551 = math.exp %550 : vector<20x20xf32>
    %cst_73 = arith.constant dense<0.000000e+00> : vector<20xf32>
    %552 = vector.multi_reduction <add>, %551, %cst_73 [1] : vector<20x20xf32> to vector<20xf32>
    %553 = vector.shape_cast %552 : vector<20xf32> to vector<20x1xf32>
    %554 = tpu.reciprocal %553 {approx = true} : vector<20x1xf32> -> vector<20x1xf32>
    %555 = vector.broadcast %554 : vector<20x1xf32> to vector<20x20xf32>
    %556 = arith.mulf %551, %555 : vector<20x20xf32>
    %cst_74 = arith.constant dense<0.000000e+00> : vector<20x16xf32>
    %557 = tpu.matmul %556, %542, %cst_74 {dimension_numbers = #tpu.dot_dimension_numbers<[1], [0], [0], [1], [0, 0, 1, 1], [], []>} : vector<20x20xf32>, vector<20x16xf32>, vector<20x16xf32> -> vector<20x16xf32>
    %c1_75 = arith.constant 1 : index
    %c0_76 = arith.constant 0 : index
    %c0_77 = arith.constant 0 : index
    %558 = vector.load %arg11[%c1_75, %c0_76, %c0_77] : memref<3x16x16xf32, #tpu.memory_space<vmem>>, vector<1x16x16xf32>
    %559 = vector.shape_cast %558 : vector<1x16x16xf32> to vector<16x16xf32>
    %cst_78 = arith.constant dense<0.000000e+00> : vector<20x16xf32>
    %560 = tpu.matmul %557, %559, %cst_78 {dimension_numbers = #tpu.dot_dimension_numbers<[1], [0], [0], [1], [0, 0, 1, 1], [], []>} : vector<20x16xf32>, vector<16x16xf32>, vector<20x16xf32> -> vector<20x16xf32>
    %561 = arith.addf %480, %560 : vector<20x16xf32>
    %cst_79 = arith.constant 0.000000e+00 : f32
    %562 = vector.broadcast %cst_79 : f32 to vector<20x16xf32>
    %563 = arith.maximumf %561, %562 : vector<20x16xf32>
    %c0_i32_80 = arith.constant 0 : i32
    %564 = vector.broadcast %c0_i32_80 : i32 to vector<20x20xi32>
    %565 = arith.cmpi eq, %392, %564 : vector<20x20xi32>
    %c16 = arith.constant 16 : index
    %566 = memref.load %arg12[%c16] : memref<24xf32, #tpu.memory_space<smem>>
    %cst_81 = arith.constant 0.000000e+00 : f32
    %567 = vector.broadcast %566 : f32 to vector<20x20xf32>
    %568 = vector.broadcast %cst_81 : f32 to vector<20x20xf32>
    %569 = arith.select %565, %567, %568 : vector<20x20xi1>, vector<20x20xf32>
    %570 = arith.addf %397, %569 : vector<20x20xf32>
    %c1_i32_82 = arith.constant 1 : i32
    %571 = vector.broadcast %c1_i32_82 : i32 to vector<20x20xi32>
    %572 = arith.cmpi eq, %392, %571 : vector<20x20xi32>
    %c17 = arith.constant 17 : index
    %573 = memref.load %arg12[%c17] : memref<24xf32, #tpu.memory_space<smem>>
    %cst_83 = arith.constant 0.000000e+00 : f32
    %574 = vector.broadcast %573 : f32 to vector<20x20xf32>
    %575 = vector.broadcast %cst_83 : f32 to vector<20x20xf32>
    %576 = arith.select %572, %574, %575 : vector<20x20xi1>, vector<20x20xf32>
    %577 = arith.addf %570, %576 : vector<20x20xf32>
    %c2_i32_84 = arith.constant 2 : i32
    %578 = vector.broadcast %c2_i32_84 : i32 to vector<20x20xi32>
    %579 = arith.cmpi eq, %392, %578 : vector<20x20xi32>
    %c18 = arith.constant 18 : index
    %580 = memref.load %arg12[%c18] : memref<24xf32, #tpu.memory_space<smem>>
    %cst_85 = arith.constant 0.000000e+00 : f32
    %581 = vector.broadcast %580 : f32 to vector<20x20xf32>
    %582 = vector.broadcast %cst_85 : f32 to vector<20x20xf32>
    %583 = arith.select %579, %581, %582 : vector<20x20xi1>, vector<20x20xf32>
    %584 = arith.addf %577, %583 : vector<20x20xf32>
    %c3_i32_86 = arith.constant 3 : i32
    %585 = vector.broadcast %c3_i32_86 : i32 to vector<20x20xi32>
    %586 = arith.cmpi eq, %392, %585 : vector<20x20xi32>
    %c19 = arith.constant 19 : index
    %587 = memref.load %arg12[%c19] : memref<24xf32, #tpu.memory_space<smem>>
    %cst_87 = arith.constant 0.000000e+00 : f32
    %588 = vector.broadcast %587 : f32 to vector<20x20xf32>
    %589 = vector.broadcast %cst_87 : f32 to vector<20x20xf32>
    %590 = arith.select %586, %588, %589 : vector<20x20xi1>, vector<20x20xf32>
    %591 = arith.addf %584, %590 : vector<20x20xf32>
    %c4_i32_88 = arith.constant 4 : i32
    %592 = vector.broadcast %c4_i32_88 : i32 to vector<20x20xi32>
    %593 = arith.cmpi eq, %392, %592 : vector<20x20xi32>
    %c20 = arith.constant 20 : index
    %594 = memref.load %arg12[%c20] : memref<24xf32, #tpu.memory_space<smem>>
    %cst_89 = arith.constant 0.000000e+00 : f32
    %595 = vector.broadcast %594 : f32 to vector<20x20xf32>
    %596 = vector.broadcast %cst_89 : f32 to vector<20x20xf32>
    %597 = arith.select %593, %595, %596 : vector<20x20xi1>, vector<20x20xf32>
    %598 = arith.addf %591, %597 : vector<20x20xf32>
    %c5_i32_90 = arith.constant 5 : i32
    %599 = vector.broadcast %c5_i32_90 : i32 to vector<20x20xi32>
    %600 = arith.cmpi eq, %392, %599 : vector<20x20xi32>
    %c21 = arith.constant 21 : index
    %601 = memref.load %arg12[%c21] : memref<24xf32, #tpu.memory_space<smem>>
    %cst_91 = arith.constant 0.000000e+00 : f32
    %602 = vector.broadcast %601 : f32 to vector<20x20xf32>
    %603 = vector.broadcast %cst_91 : f32 to vector<20x20xf32>
    %604 = arith.select %600, %602, %603 : vector<20x20xi1>, vector<20x20xf32>
    %605 = arith.addf %598, %604 : vector<20x20xf32>
    %c6_i32_92 = arith.constant 6 : i32
    %606 = vector.broadcast %c6_i32_92 : i32 to vector<20x20xi32>
    %607 = arith.cmpi eq, %392, %606 : vector<20x20xi32>
    %c22 = arith.constant 22 : index
    %608 = memref.load %arg12[%c22] : memref<24xf32, #tpu.memory_space<smem>>
    %cst_93 = arith.constant 0.000000e+00 : f32
    %609 = vector.broadcast %608 : f32 to vector<20x20xf32>
    %610 = vector.broadcast %cst_93 : f32 to vector<20x20xf32>
    %611 = arith.select %607, %609, %610 : vector<20x20xi1>, vector<20x20xf32>
    %612 = arith.addf %605, %611 : vector<20x20xf32>
    %c7_i32_94 = arith.constant 7 : i32
    %613 = vector.broadcast %c7_i32_94 : i32 to vector<20x20xi32>
    %614 = arith.cmpi eq, %392, %613 : vector<20x20xi32>
    %c23 = arith.constant 23 : index
    %615 = memref.load %arg12[%c23] : memref<24xf32, #tpu.memory_space<smem>>
    %cst_95 = arith.constant 0.000000e+00 : f32
    %616 = vector.broadcast %615 : f32 to vector<20x20xf32>
    %617 = vector.broadcast %cst_95 : f32 to vector<20x20xf32>
    %618 = arith.select %614, %616, %617 : vector<20x20xi1>, vector<20x20xf32>
    %619 = arith.addf %612, %618 : vector<20x20xf32>
    %c2_96 = arith.constant 2 : index
    %c0_97 = arith.constant 0 : index
    %c0_98 = arith.constant 0 : index
    %620 = vector.load %arg10[%c2_96, %c0_97, %c0_98] : memref<3x16x48xf32, #tpu.memory_space<vmem>>, vector<1x16x48xf32>
    %621 = vector.shape_cast %620 : vector<1x16x48xf32> to vector<16x48xf32>
    %cst_99 = arith.constant dense<0.000000e+00> : vector<20x48xf32>
    %622 = tpu.matmul %563, %621, %cst_99 {dimension_numbers = #tpu.dot_dimension_numbers<[1], [0], [0], [1], [0, 0, 1, 1], [], []>} : vector<20x16xf32>, vector<16x48xf32>, vector<20x48xf32> -> vector<20x48xf32>
    %623 = vector.extract_strided_slice %622 {offsets = [0, 0], sizes = [20, 16], strides = [1, 1]} : vector<20x48xf32> to vector<20x16xf32>
    %624 = vector.extract_strided_slice %622 {offsets = [0, 16], sizes = [20, 16], strides = [1, 1]} : vector<20x48xf32> to vector<20x16xf32>
    %625 = vector.extract_strided_slice %622 {offsets = [0, 32], sizes = [20, 16], strides = [1, 1]} : vector<20x48xf32> to vector<20x16xf32>
    "tpu.trace_start"() <{level = 10 : i32, message = "se,te->st"}> : () -> ()
    %cst_100 = arith.constant dense<0.000000e+00> : vector<20x20xf32>
    %626 = tpu.matmul %623, %624, %cst_100 {dimension_numbers = #tpu.dot_dimension_numbers<[1], [1], [0], [0], [0, 0, 1, 0], [], []>} : vector<20x16xf32>, vector<20x16xf32>, vector<20x20xf32> -> vector<20x20xf32>
    "tpu.trace_stop"() : () -> ()
    %cst_101 = arith.constant 2.500000e-01 : f32
    %627 = vector.broadcast %cst_101 : f32 to vector<20x20xf32>
    %628 = arith.mulf %626, %627 : vector<20x20xf32>
    %629 = arith.addf %628, %619 : vector<20x20xf32>
    %cst_102 = arith.constant dense<0xFF800000> : vector<20xf32>
    %630 = vector.multi_reduction <maximumf>, %629, %cst_102 [1] : vector<20x20xf32> to vector<20xf32>
    %631 = vector.shape_cast %630 : vector<20xf32> to vector<20x1xf32>
    %632 = vector.broadcast %631 : vector<20x1xf32> to vector<20x20xf32>
    %633 = arith.subf %629, %632 : vector<20x20xf32>
    %634 = math.exp %633 : vector<20x20xf32>
    %cst_103 = arith.constant dense<0.000000e+00> : vector<20xf32>
    %635 = vector.multi_reduction <add>, %634, %cst_103 [1] : vector<20x20xf32> to vector<20xf32>
    %636 = vector.shape_cast %635 : vector<20xf32> to vector<20x1xf32>
    %637 = tpu.reciprocal %636 {approx = true} : vector<20x1xf32> -> vector<20x1xf32>
    %638 = vector.broadcast %637 : vector<20x1xf32> to vector<20x20xf32>
    %639 = arith.mulf %634, %638 : vector<20x20xf32>
    %cst_104 = arith.constant dense<0.000000e+00> : vector<20x16xf32>
    %640 = tpu.matmul %639, %625, %cst_104 {dimension_numbers = #tpu.dot_dimension_numbers<[1], [0], [0], [1], [0, 0, 1, 1], [], []>} : vector<20x20xf32>, vector<20x16xf32>, vector<20x16xf32> -> vector<20x16xf32>
    %c2_105 = arith.constant 2 : index
    %c0_106 = arith.constant 0 : index
    %c0_107 = arith.constant 0 : index
    %641 = vector.load %arg11[%c2_105, %c0_106, %c0_107] : memref<3x16x16xf32, #tpu.memory_space<vmem>>, vector<1x16x16xf32>
    %642 = vector.shape_cast %641 : vector<1x16x16xf32> to vector<16x16xf32>
    %cst_108 = arith.constant dense<0.000000e+00> : vector<20x16xf32>
    %643 = tpu.matmul %640, %642, %cst_108 {dimension_numbers = #tpu.dot_dimension_numbers<[1], [0], [0], [1], [0, 0, 1, 1], [], []>} : vector<20x16xf32>, vector<16x16xf32>, vector<20x16xf32> -> vector<20x16xf32>
    %644 = arith.addf %563, %643 : vector<20x16xf32>
    %cst_109 = arith.constant 0.000000e+00 : f32
    %645 = vector.broadcast %cst_109 : f32 to vector<20x16xf32>
    %646 = arith.maximumf %644, %645 : vector<20x16xf32>
    %647 = vector.extract_strided_slice %646 {offsets = [0, 0], sizes = [2, 16], strides = [1, 1]} : vector<20x16xf32> to vector<2x16xf32>
    %648 = vector.extract_strided_slice %646 {offsets = [2, 0], sizes = [2, 16], strides = [1, 1]} : vector<20x16xf32> to vector<2x16xf32>
    %649 = vector.extract_strided_slice %646 {offsets = [4, 0], sizes = [2, 16], strides = [1, 1]} : vector<20x16xf32> to vector<2x16xf32>
    %650 = vector.extract_strided_slice %646 {offsets = [6, 0], sizes = [2, 16], strides = [1, 1]} : vector<20x16xf32> to vector<2x16xf32>
    %651 = vector.extract_strided_slice %646 {offsets = [8, 0], sizes = [2, 16], strides = [1, 1]} : vector<20x16xf32> to vector<2x16xf32>
    %652 = vector.extract_strided_slice %646 {offsets = [10, 0], sizes = [2, 16], strides = [1, 1]} : vector<20x16xf32> to vector<2x16xf32>
    %653 = vector.extract_strided_slice %646 {offsets = [12, 0], sizes = [2, 16], strides = [1, 1]} : vector<20x16xf32> to vector<2x16xf32>
    %654 = vector.extract_strided_slice %646 {offsets = [14, 0], sizes = [2, 16], strides = [1, 1]} : vector<20x16xf32> to vector<2x16xf32>
    %655 = vector.extract_strided_slice %646 {offsets = [16, 0], sizes = [2, 16], strides = [1, 1]} : vector<20x16xf32> to vector<2x16xf32>
    %656 = vector.extract_strided_slice %646 {offsets = [18, 0], sizes = [2, 16], strides = [1, 1]} : vector<20x16xf32> to vector<2x16xf32>
    %657 = tpu.concatenate %647, %648, %649, %650, %651, %652, %653, %654, %655, %656 in 1 : vector<2x16xf32>, vector<2x16xf32>, vector<2x16xf32>, vector<2x16xf32>, vector<2x16xf32>, vector<2x16xf32>, vector<2x16xf32>, vector<2x16xf32>, vector<2x16xf32>, vector<2x16xf32> -> vector<2x160xf32>
    %658 = tpu.concatenate %383, %657 in 1 : vector<2x128xf32>, vector<2x160xf32> -> vector<2x288xf32>
    %c0_110 = arith.constant 0 : index
    %c0_111 = arith.constant 0 : index
    %659 = vector.load %arg13[%c0_110, %c0_111] : memref<288x128xf32, #tpu.memory_space<vmem>>, vector<288x128xf32>
    %cst_112 = arith.constant dense<0.000000e+00> : vector<2x128xf32>
    %660 = tpu.matmul %658, %659, %cst_112 {dimension_numbers = #tpu.dot_dimension_numbers<[1], [0], [0], [1], [0, 0, 1, 1], [], []>} : vector<2x288xf32>, vector<288x128xf32>, vector<2x128xf32> -> vector<2x128xf32>
    %c0_113 = arith.constant 0 : index
    %c0_114 = arith.constant 0 : index
    %661 = vector.load %arg14[%c0_113, %c0_114] : memref<1x128xf32, #tpu.memory_space<vmem>>, vector<1x128xf32>
    %662 = vector.broadcast %661 : vector<1x128xf32> to vector<2x128xf32>
    %663 = arith.addf %660, %662 : vector<2x128xf32>
    %cst_115 = arith.constant 0.000000e+00 : f32
    %664 = vector.broadcast %cst_115 : f32 to vector<2x128xf32>
    %665 = arith.maximumf %663, %664 : vector<2x128xf32>
    %c0_116 = arith.constant 0 : index
    %c0_117 = arith.constant 0 : index
    %666 = vector.load %arg15[%c0_116, %c0_117] : memref<128x128xf32, #tpu.memory_space<vmem>>, vector<128x128xf32>
    %cst_118 = arith.constant dense<0.000000e+00> : vector<2x128xf32>
    %667 = tpu.matmul %665, %666, %cst_118 {dimension_numbers = #tpu.dot_dimension_numbers<[1], [0], [0], [1], [0, 0, 1, 1], [], []>} : vector<2x128xf32>, vector<128x128xf32>, vector<2x128xf32> -> vector<2x128xf32>
    %c0_119 = arith.constant 0 : index
    %c0_120 = arith.constant 0 : index
    %668 = vector.load %arg16[%c0_119, %c0_120] : memref<1x128xf32, #tpu.memory_space<vmem>>, vector<1x128xf32>
    %669 = vector.broadcast %668 : vector<1x128xf32> to vector<2x128xf32>
    %670 = arith.addf %667, %669 : vector<2x128xf32>
    %cst_121 = arith.constant 0.000000e+00 : f32
    %671 = vector.broadcast %cst_121 : f32 to vector<2x128xf32>
    %672 = arith.maximumf %670, %671 : vector<2x128xf32>
    %c0_122 = arith.constant 0 : index
    %c0_123 = arith.constant 0 : index
    %673 = vector.load %arg17[%c0_122, %c0_123] : memref<128x128xf32, #tpu.memory_space<vmem>>, vector<128x128xf32>
    %cst_124 = arith.constant dense<0.000000e+00> : vector<2x128xf32>
    %674 = tpu.matmul %672, %673, %cst_124 {dimension_numbers = #tpu.dot_dimension_numbers<[1], [0], [0], [1], [0, 0, 1, 1], [], []>} : vector<2x128xf32>, vector<128x128xf32>, vector<2x128xf32> -> vector<2x128xf32>
    %c0_125 = arith.constant 0 : index
    %c0_126 = arith.constant 0 : index
    %675 = vector.load %arg18[%c0_125, %c0_126] : memref<1x128xf32, #tpu.memory_space<vmem>>, vector<1x128xf32>
    %676 = vector.broadcast %675 : vector<1x128xf32> to vector<2x128xf32>
    %677 = arith.addf %674, %676 : vector<2x128xf32>
    %c0_127 = arith.constant 0 : index
    %c0_128 = arith.constant 0 : index
    %678 = vector.load %arg19[%c0_127, %c0_128] : memref<2x128xf32, #tpu.memory_space<vmem>>, vector<2x128xf32>
    tpu.vector_store %arg19[%c0_127, %c0_128], %677 {strides = array<i32>} : memref<2x128xf32, #tpu.memory_space<vmem>>, vector<2x128xf32>,
    return
  }
}

</mosaic_0001>

<llo_original>
// kernel: custom_network_forward.1
$region0: #{custom_network_forward.1}
  #allocation0 [shape = 'u32[]', space=smem, size = 0x4, offset = 0x4, fixed_abs, tag = 'smem constant byte address 0x4 - core index']
  #allocation1 [shape = 'u32[144,128]{1,0:T(1,128)}', space=vmem, size = 0x12000, scoped, tag = 'internal scratch']
  %s0 = inlined_call_operand.vmem [shape: f32[2,147], index: 0, kind: input, shape index: {}]
  %s1 = inlined_call_operand.vmem [shape: s32[20,1], index: 1, kind: input, shape index: {}]
  %s2 = inlined_call_operand.vmem [shape: s32[20,20], index: 2, kind: input, shape index: {}]
  %s3 = inlined_call_operand.vmem [shape: f32[27,16], index: 3, kind: input, shape index: {}]
  %s4 = inlined_call_operand.vmem [shape: f32[1,16], index: 4, kind: input, shape index: {}]
  %s5 = inlined_call_operand.vmem [shape: f32[144,32], index: 5, kind: input, shape index: {}]
  %s6 = inlined_call_operand.vmem [shape: f32[1,32], index: 6, kind: input, shape index: {}]
  %s7 = inlined_call_operand.vmem [shape: f32[128,32], index: 7, kind: input, shape index: {}]
  %s8 = inlined_call_operand.vmem [shape: f32[1,32], index: 8, kind: input, shape index: {}]
  %s9 = inlined_call_operand.hbm [shape: f32[14,16], index: 9, kind: input, shape index: {}]
  %s10 = inlined_call_operand.hbm [shape: f32[3,16,48], index: 10, kind: input, shape index: {}]
  %s11 = inlined_call_operand.hbm [shape: f32[3,16,16], index: 11, kind: input, shape index: {}]
  %s12 = inlined_call_operand.hbm [shape: f32[24], index: 12, kind: input, shape index: {}]
  %s13 = inlined_call_operand.vmem [shape: f32[288,128], index: 13, kind: input, shape index: {}]
  %s14 = inlined_call_operand.hbm [shape: f32[1,128], index: 14, kind: input, shape index: {}]
  %s15 = inlined_call_operand.vmem [shape: f32[128,128], index: 15, kind: input, shape index: {}]
  %s16 = inlined_call_operand.hbm [shape: f32[1,128], index: 16, kind: input, shape index: {}]
  %s17 = inlined_call_operand.vmem [shape: f32[128,128], index: 17, kind: input, shape index: {}]
  %s18 = inlined_call_operand.hbm [shape: f32[1,128], index: 18, kind: input, shape index: {}]
  %s19 = inlined_call_operand.vmem [shape: f32[2,128], index: 19, kind: output, shape index: {}]
  %s20 = sld [smem:[#allocation0]]
  $region114: #{custom_network_forward.1} parent=0
    _
  %s22 = ssub.s32 1, %s20
  %s23 = scalar_select 0, %s22, %s20
  $region1: #{custom_network_forward.1} parent=0
    #allocation2 [shape = 'u8[8192]{0}', space=vmem, size = 0x2000, scoped, tag = 'input window, operand 9, single buffered']
    #allocation3 [shape = 's32[1]{0}', space=sflag, size = 0x4, scoped, tag = 'scoped memory for custom_network_forward.1']
    #allocation4 [shape = 's32[1]{0}', space=sflag, size = 0x4, scoped, tag = 'scoped memory for custom_network_forward.1']
    #allocation5 [shape = 'u8[24576]{0}', space=vmem, size = 0x6000, scoped, tag = 'input window, operand 10, single buffered']
    #allocation6 [shape = 's32[1]{0}', space=sflag, size = 0x4, scoped, tag = 'scoped memory for custom_network_forward.1']
    #allocation7 [shape = 'u8[24576]{0}', space=vmem, size = 0x6000, scoped, tag = 'input window, operand 11, single buffered']
    #allocation8 [shape = 'u8[512]{0}', space=smem, size = 0x200, scoped, tag = 'input window, operand 12, single buffered']
    #allocation9 [shape = 'u8[512]{0}', space=vmem, size = 0x400, scoped, tag = 'input window, operand 14, single buffered']
    #allocation10 [shape = 's32[1]{0}', space=sflag, size = 0x4, scoped, tag = 'scoped memory for custom_network_forward.1']
    #allocation11 [shape = 'u8[512]{0}', space=vmem, size = 0x400, scoped, tag = 'input window, operand 16, single buffered']
    #allocation12 [shape = 'u8[512]{0}', space=vmem, size = 0x400, scoped, tag = 'input window, operand 18, single buffered']
    #allocation13 [shape = 's32[1]{0}', space=sflag, size = 0x4, scoped, tag = 'scoped memory for custom_network_forward.1']
    %24 = vsyncpa [#allocation3], 0
    %25 = vsyncpa [#allocation6], 0
    %26 = vsyncpa [#allocation4], 0
    %27 = vsyncpa [#allocation10], 0
    %28 = vsyncpa [#allocation13], 0
    // Predicated region
    $region2: #{custom_network_forward.1} parent=1 // pred_check
      _
    $region3: #{custom_network_forward.1} parent=1 // pred_check_branch
      %30 = sbr.rel (0) target = $region5
    $region4: #{custom_network_forward.1} parent=1 // pred_region
      _
    $region5: #{custom_network_forward.1} parent=1 // pred_fallthru
      _
    // Predicated region
    $region6: #{custom_network_forward.1} parent=1 // pred_check
      _
    $region7: #{custom_network_forward.1} parent=1 // pred_check_branch
      %32 = sbr.rel (0) target = $region9
    $region8: #{custom_network_forward.1} parent=1 // pred_region
      _
    $region9: #{custom_network_forward.1} parent=1 // pred_fallthru
      _
    // Predicated region
    $region10: #{custom_network_forward.1} parent=1 // pred_check
      _
    $region11: #{custom_network_forward.1} parent=1 // pred_check_branch
      %34 = sbr.rel (0) target = $region13
    $region12: #{custom_network_forward.1} parent=1 // pred_region
      _
    $region13: #{custom_network_forward.1} parent=1 // pred_fallthru
      _
    // Predicated region
    $region14: #{custom_network_forward.1} parent=1 // pred_check
      _
    $region15: #{custom_network_forward.1} parent=1 // pred_check_branch
      %36 = sbr.rel (0) target = $region17
    $region16: #{custom_network_forward.1} parent=1 // pred_region
      _
    $region17: #{custom_network_forward.1} parent=1 // pred_fallthru
      _
    // Predicated region
    $region18: #{custom_network_forward.1} parent=1 // pred_check
      _
    $region19: #{custom_network_forward.1} parent=1 // pred_check_branch
      %38 = sbr.rel (0) target = $region21
    $region20: #{custom_network_forward.1} parent=1 // pred_region
      _
    $region21: #{custom_network_forward.1} parent=1 // pred_fallthru
      _
    // Predicated region
    $region22: #{custom_network_forward.1} parent=1 // pred_check
      _
    $region23: #{custom_network_forward.1} parent=1 // pred_check_branch
      %40 = sbr.rel (0) target = $region25
    $region24: #{custom_network_forward.1} parent=1 // pred_region
      _
    $region25: #{custom_network_forward.1} parent=1 // pred_fallthru
      _
    // Predicated region
    $region26: #{custom_network_forward.1} parent=1 // pred_check
      _
    $region27: #{custom_network_forward.1} parent=1 // pred_check_branch
      %42 = sbr.rel (0) target = $region29
    $region28: #{custom_network_forward.1} parent=1 // pred_region
      _
    $region29: #{custom_network_forward.1} parent=1 // pred_fallthru
      _
    // Predicated region
    $region30: #{custom_network_forward.1} parent=1 // pred_check
      _
    $region31: #{custom_network_forward.1} parent=1 // pred_check_branch
      %44 = sbr.rel (0) target = $region33
    $region32: #{custom_network_forward.1} parent=1 // pred_region
      _
    $region33: #{custom_network_forward.1} parent=1 // pred_fallthru
      _
    // Predicated region
    $region34: #{custom_network_forward.1} parent=1 // pred_check
      _
    $region35: #{custom_network_forward.1} parent=1 // pred_check_branch
      %46 = sbr.rel (0) target = $region37
    $region36: #{custom_network_forward.1} parent=1 // pred_region
      _
    $region37: #{custom_network_forward.1} parent=1 // pred_fallthru
      _
    // Predicated region
    $region38: #{custom_network_forward.1} parent=1 // pred_check
      _
    $region39: #{custom_network_forward.1} parent=1 // pred_check_branch
      %48 = sbr.rel (0) target = $region41
    $region40: #{custom_network_forward.1} parent=1 // pred_region
      %s50 = ssub.s32 256, 256
      %51 = vsyncadd [#allocation3], %s50
      %s52 = sshll.u32 [#allocation2], 4
      %s53 = int_to_ptr.vmem [resolvable:$true] %s52
      %58 = dma.hbm_to_vmem [thread:$0]  %s9, 256, %s53, [#allocation3], 128, 128, 8
    $region41: #{custom_network_forward.1} parent=1 // pred_fallthru
      _
    // Predicated region
    $region42: #{custom_network_forward.1} parent=1 // pred_check
      _
    $region43: #{custom_network_forward.1} parent=1 // pred_check_branch
      %60 = sbr.rel (0) target = $region45
    $region44: #{custom_network_forward.1} parent=1 // pred_region
      %s62 = ssub.s32 768, 768
      %63 = vsyncadd [#allocation6], %s62
      %s64 = sshll.u32 [#allocation5], 4
      %s65 = int_to_ptr.vmem [resolvable:$true] %s64
      %70 = dma.hbm_to_vmem [thread:$0]  %s10, 768, %s65, [#allocation6], 128, 128, 8
    $region45: #{custom_network_forward.1} parent=1 // pred_fallthru
      _
    // Predicated region
    $region46: #{custom_network_forward.1} parent=1 // pred_check
      _
    $region47: #{custom_network_forward.1} parent=1 // pred_check_branch
      %72 = sbr.rel (0) target = $region49
    $region48: #{custom_network_forward.1} parent=1 // pred_region
      %s74 = ssub.s32 768, 768
      %75 = vsyncadd [#allocation6], %s74
      %s76 = sshll.u32 [#allocation7], 4
      %s77 = int_to_ptr.vmem [resolvable:$true] %s76
      %82 = dma.hbm_to_vmem [thread:$0]  %s11, 768, %s77, [#allocation6], 128, 128, 8
    $region49: #{custom_network_forward.1} parent=1 // pred_fallthru
      _
    // Predicated region
    $region50: #{custom_network_forward.1} parent=1 // pred_check
      _
    $region51: #{custom_network_forward.1} parent=1 // pred_check_branch
      %84 = sbr.rel (0) target = $region53
    $region52: #{custom_network_forward.1} parent=1 // pred_region
      %s86 = ssub.s32 16, 16
      %87 = vsyncadd [#allocation4], %s86
      %90 = dma.hbm_to_smem %s12, 16, [#allocation8], [#allocation4]
    $region53: #{custom_network_forward.1} parent=1 // pred_fallthru
      _
    // Predicated region
    $region54: #{custom_network_forward.1} parent=1 // pred_check
      _
    $region55: #{custom_network_forward.1} parent=1 // pred_check_branch
      %92 = sbr.rel (0) target = $region57
    $region56: #{custom_network_forward.1} parent=1 // pred_region
      _
    $region57: #{custom_network_forward.1} parent=1 // pred_fallthru
      _
    // Predicated region
    $region58: #{custom_network_forward.1} parent=1 // pred_check
      _
    $region59: #{custom_network_forward.1} parent=1 // pred_check_branch
      %94 = sbr.rel (0) target = $region61
    $region60: #{custom_network_forward.1} parent=1 // pred_region
      %s96 = ssub.s32 16, 16
      %97 = vsyncadd [#allocation10], %s96
      %s99 = sshll.u32 [#allocation9], 4
      %s100 = int_to_ptr.vmem [resolvable:$true] %s99
      %102 = dma.hbm_to_vmem [thread:$0]  %s14, 16, %s100, [#allocation10]
    $region61: #{custom_network_forward.1} parent=1 // pred_fallthru
      _
    // Predicated region
    $region62: #{custom_network_forward.1} parent=1 // pred_check
      _
    $region63: #{custom_network_forward.1} parent=1 // pred_check_branch
      %104 = sbr.rel (0) target = $region65
    $region64: #{custom_network_forward.1} parent=1 // pred_region
      _
    $region65: #{custom_network_forward.1} parent=1 // pred_fallthru
      _
    // Predicated region
    $region66: #{custom_network_forward.1} parent=1 // pred_check
      _
    $region67: #{custom_network_forward.1} parent=1 // pred_check_branch
      %106 = sbr.rel (0) target = $region69
    $region68: #{custom_network_forward.1} parent=1 // pred_region
      %s108 = ssub.s32 16, 16
      %109 = vsyncadd [#allocation10], %s108
      %s111 = sshll.u32 [#allocation11], 4
      %s112 = int_to_ptr.vmem [resolvable:$true] %s111
      %114 = dma.hbm_to_vmem [thread:$0]  %s16, 16, %s112, [#allocation10]
    $region69: #{custom_network_forward.1} parent=1 // pred_fallthru
      _
    // Predicated region
    $region70: #{custom_network_forward.1} parent=1 // pred_check
      _
    $region71: #{custom_network_forward.1} parent=1 // pred_check_branch
      %116 = sbr.rel (0) target = $region73
    $region72: #{custom_network_forward.1} parent=1 // pred_region
      _
    $region73: #{custom_network_forward.1} parent=1 // pred_fallthru
      _
    // Predicated region
    $region74: #{custom_network_forward.1} parent=1 // pred_check
      _
    $region75: #{custom_network_forward.1} parent=1 // pred_check_branch
      %118 = sbr.rel (0) target = $region77
    $region76: #{custom_network_forward.1} parent=1 // pred_region
      %s120 = ssub.s32 16, 16
      %121 = vsyncadd [#allocation13], %s120
      %s123 = sshll.u32 [#allocation12], 4
      %s124 = int_to_ptr.vmem [resolvable:$true] %s123
      %126 = dma.hbm_to_vmem [thread:$0]  %s18, 16, %s124, [#allocation13]
    $region77: #{custom_network_forward.1} parent=1 // pred_fallthru
      _
    // Predicated region
    $region78: #{custom_network_forward.1} parent=1 // pred_check
      _
    $region79: #{custom_network_forward.1} parent=1 // pred_check_branch
      %128 = sbr.rel (0) target = $region81
    $region80: #{custom_network_forward.1} parent=1 // pred_region
      %129 = dma.done [#allocation3], 256
    $region81: #{custom_network_forward.1} parent=1 // pred_fallthru
      _
    // Predicated region
    $region82: #{custom_network_forward.1} parent=1 // pred_check
      _
    $region83: #{custom_network_forward.1} parent=1 // pred_check_branch
      %131 = sbr.rel (0) target = $region85
    $region84: #{custom_network_forward.1} parent=1 // pred_region
      %132 = dma.done [#allocation6], 768
    $region85: #{custom_network_forward.1} parent=1 // pred_fallthru
      _
    // Predicated region
    $region86: #{custom_network_forward.1} parent=1 // pred_check
      _
    $region87: #{custom_network_forward.1} parent=1 // pred_check_branch
      %134 = sbr.rel (0) target = $region89
    $region88: #{custom_network_forward.1} parent=1 // pred_region
      %135 = dma.done [#allocation6], 768
    $region89: #{custom_network_forward.1} parent=1 // pred_fallthru
      _
    // Predicated region
    $region90: #{custom_network_forward.1} parent=1 // pred_check
      _
    $region91: #{custom_network_forward.1} parent=1 // pred_check_branch
      %137 = sbr.rel (0) target = $region93
    $region92: #{custom_network_forward.1} parent=1 // pred_region
      %138 = dma.done [#allocation4], 16
    $region93: #{custom_network_forward.1} parent=1 // pred_fallthru
      _
    // Predicated region
    $region94: #{custom_network_forward.1} parent=1 // pred_check
      _
    $region95: #{custom_network_forward.1} parent=1 // pred_check_branch
      %140 = sbr.rel (0) target = $region97
    $region96: #{custom_network_forward.1} parent=1 // pred_region
      %141 = dma.done [#allocation10], 16
    $region97: #{custom_network_forward.1} parent=1 // pred_fallthru
      _
    // Predicated region
    $region98: #{custom_network_forward.1} parent=1 // pred_check
      _
    $region99: #{custom_network_forward.1} parent=1 // pred_check_branch
      %143 = sbr.rel (0) target = $region101
    $region100: #{custom_network_forward.1} parent=1 // pred_region
      %144 = dma.done [#allocation10], 16
    $region101: #{custom_network_forward.1} parent=1 // pred_fallthru
      _
    // Predicated region
    $region102: #{custom_network_forward.1} parent=1 // pred_check
      _
    $region103: #{custom_network_forward.1} parent=1 // pred_check_branch
      %146 = sbr.rel (0) target = $region105
    $region104: #{custom_network_forward.1} parent=1 // pred_region
      %147 = dma.done [#allocation13], 16
    $region105: #{custom_network_forward.1} parent=1 // pred_fallthru
      _
    %148 = sfence
    %v149 = vld [vmem:[%s0] sm:$0xf]
    %v152 = vunpack.c.l.s4 1983009808
    %v153 = vunpack.c.0.s8 %v152
    %v154 = vlaneseq
    %v155 = vshrl.u32 %v154, 7
    %v156 = vsub.s32 %v153, %v155
    %v157 = vrot.slane %v149, %v156
    %158 = vrot.lane.b32.xlu0 %v157, 116
    %v159 = vpop.permute.xlu0 %158
    %161 = vrot.lane.b32.xlu0 %v157, 104
    %v162 = vpop.permute.xlu0 %161
    %vm164 = vcmask 72704
    %v165 = vsel %vm164, %v149, %v159
    %vm166 = vcmask 146432
    %v167 = vsel %vm166, %v165, %v162
    %168 = vrot.lane.b32.xlu0 %v157, 125
    %v169 = vpop.permute.xlu0 %168
    %171 = vrot.lane.b32.xlu0 %v157, 113
    %v172 = vpop.permute.xlu0 %171
    %174 = vrot.lane.b32.xlu0 %v157, 101
    %v175 = vpop.permute.xlu0 %174
    %v177 = vsel %vm164, %v169, %v172
    %v178 = vsel %vm166, %v177, %v175
    %179 = vrot.lane.b32.xlu0 %v157, 122
    %v180 = vpop.permute.xlu0 %179
    %182 = vrot.lane.b32.xlu0 %v157, 110
    %v183 = vpop.permute.xlu0 %182
    %185 = vrot.lane.b32.xlu0 %v157, 98
    %v186 = vpop.permute.xlu0 %185
    %v188 = vsel %vm164, %v180, %v183
    %v189 = vsel %vm166, %v188, %v186
    %190 = vrot.lane.b32.xlu0 %v157, 119
    %v191 = vpop.permute.xlu0 %190
    %193 = vrot.lane.b32.xlu0 %v157, 107
    %v194 = vpop.permute.xlu0 %193
    %196 = vrot.lane.b32.xlu0 %v157, 95
    %v197 = vpop.permute.xlu0 %196
    %v199 = vsel %vm164, %v191, %v194
    %v200 = vsel %vm166, %v199, %v197
    %201 = vrot.lane.b32.xlu0 %v157, 92
    %v202 = vpop.permute.xlu0 %201
    %v204 = vsel %vm164, %v159, %v162
    %v205 = vsel %vm166, %v204, %v202
    %206 = vrot.lane.b32.xlu0 %v157, 83
    %v207 = vpop.permute.xlu0 %206
    %v209 = vsel %vm164, %v194, %v197
    %v210 = vsel %vm166, %v209, %v207
    %211 = vrot.lane.b32.xlu0 %v157, 80
    %v212 = vpop.permute.xlu0 %211
    %v214 = vsel %vm164, %v162, %v202
    %v215 = vsel %vm166, %v214, %v212
    %216 = vrot.lane.b32.xlu0 %v157, 89
    %v217 = vpop.permute.xlu0 %216
    %219 = vrot.lane.b32.xlu0 %v157, 77
    %v220 = vpop.permute.xlu0 %219
    %v222 = vsel %vm164, %v175, %v217
    %v223 = vsel %vm166, %v222, %v220
    %224 = vrot.lane.b32.xlu0 %v157, 86
    %v225 = vpop.permute.xlu0 %224
    %227 = vrot.lane.b32.xlu0 %v157, 74
    %v228 = vpop.permute.xlu0 %227
    %v230 = vsel %vm164, %v186, %v225
    %v231 = vsel %vm166, %v230, %v228
    %232 = vrot.lane.b32.xlu0 %v157, 71
    %v233 = vpop.permute.xlu0 %232
    %v235 = vsel %vm164, %v197, %v207
    %v236 = vsel %vm166, %v235, %v233
    %237 = vrot.lane.b32.xlu0 %v157, 62
    %v238 = vpop.permute.xlu0 %237
    %v240 = vsel %vm164, %v225, %v228
    %v241 = vsel %vm166, %v240, %v238
    %242 = vrot.lane.b32.xlu0 %v157, 59
    %v243 = vpop.permute.xlu0 %242
    %v245 = vsel %vm164, %v207, %v233
    %v246 = vsel %vm166, %v245, %v243
    %247 = vrot.lane.b32.xlu0 %v157, 68
    %v248 = vpop.permute.xlu0 %247
    %250 = vrot.lane.b32.xlu0 %v157, 56
    %v251 = vpop.permute.xlu0 %250
    %v253 = vsel %vm164, %v212, %v248
    %v254 = vsel %vm166, %v253, %v251
    %255 = vrot.lane.b32.xlu0 %v157, 65
    %v256 = vpop.permute.xlu0 %255
    %258 = vrot.lane.b32.xlu0 %v157, 53
    %v259 = vpop.permute.xlu0 %258
    %v261 = vsel %vm164, %v220, %v256
    %v262 = vsel %vm166, %v261, %v259
    %263 = vrot.lane.b32.xlu0 %v157, 50
    %v264 = vpop.permute.xlu0 %263
    %v266 = vsel %vm164, %v228, %v238
    %v267 = vsel %vm166, %v266, %v264
    %268 = vrot.lane.b32.xlu0 %v157, 41
    %v269 = vpop.permute.xlu0 %268
    %v271 = vsel %vm164, %v256, %v259
    %v272 = vsel %vm166, %v271, %v269
    %273 = vrot.lane.b32.xlu0 %v157, 38
    %v274 = vpop.permute.xlu0 %273
    %v276 = vsel %vm164, %v238, %v264
    %v277 = vsel %vm166, %v276, %v274
    %278 = vrot.lane.b32.xlu0 %v157, 47
    %v279 = vpop.permute.xlu0 %278
    %281 = vrot.lane.b32.xlu0 %v157, 35
    %v282 = vpop.permute.xlu0 %281
    %v284 = vsel %vm164, %v243, %v279
    %v285 = vsel %vm166, %v284, %v282
    %286 = vrot.lane.b32.xlu0 %v157, 44
    %v287 = vpop.permute.xlu0 %286
    %289 = vrot.lane.b32.xlu0 %v157, 32
    %v290 = vpop.permute.xlu0 %289
    %v292 = vsel %vm164, %v251, %v287
    %v293 = vsel %vm166, %v292, %v290
    %294 = vrot.lane.b32.xlu0 %v157, 29
    %v295 = vpop.permute.xlu0 %294
    %v297 = vsel %vm164, %v259, %v269
    %v298 = vsel %vm166, %v297, %v295
    %v299 = vcombine.high %v157, %v157
    %300 = vrot.lane.b32.xlu0 %v157, 20
    %v301 = vpop.permute.xlu0 %300
    %302 = vrot.lane.b32.xlu0 %v299, 20
    %v303 = vpop.permute.xlu0 %302
    %vm304 = vcmask 162816
    %v305 = vsel %vm304, %v301, %v303
    %v307 = vsel %vm164, %v287, %v290
    %v308 = vsel %vm166, %v307, %v305
    %309 = vrot.lane.b32.xlu0 %v299, 17
    %v310 = vpop.permute.xlu0 %309
    %v312 = vsel %vm164, %v269, %v295
    %v313 = vsel %vm166, %v312, %v310
    %314 = vrot.lane.b32.xlu0 %v157, 26
    %v315 = vpop.permute.xlu0 %314
    %317 = vrot.lane.b32.xlu0 %v299, 14
    %v318 = vpop.permute.xlu0 %317
    %v320 = vsel %vm164, %v274, %v315
    %v321 = vsel %vm166, %v320, %v318
    %322 = vrot.lane.b32.xlu0 %v157, 23
    %v323 = vpop.permute.xlu0 %322
    %325 = vrot.lane.b32.xlu0 %v299, 11
    %v326 = vpop.permute.xlu0 %325
    %v328 = vsel %vm164, %v282, %v323
    %v329 = vsel %vm166, %v328, %v326
    %331 = vrot.lane.b32.xlu0 %v299, 8
    %v332 = vpop.permute.xlu0 %331
    %v334 = vsel %vm164, %v290, %v301
    %v335 = vsel %vm166, %v334, %v332
    %v336 = vld [vmem:[%s3] sm:$0xff]
    %v337 = vld [vmem:[%s3 + $0x8] sm:$0xff]
    %v338 = vld [vmem:[%s3 + $0x10] sm:$0xff]
    %v339 = vld [vmem:[%s3 + $0x18] sm:$0x7]
    %v340 = vld [vmem:[%s4] sm:$0x1]
    %v342 = vlaneseq
    %v343 = vshrl.u32 %v342, 7
    %v344 = vsub.s32 0, %v343
    %v345 = vrot.slane %v340, %v344
    %v371 = vcombine.low %v167, %v178
    %v372 = vcombine.low %v189, %v200
    %v374 = vunpack.c.l.s4 1983009808
    %v375 = vunpack.c.0.s8 %v374
    %v376 = vlaneseq
    %v377 = vshrl.u32 %v376, 7
    %v378 = vsub.s32 %v375, %v377
    %v379 = vrot.slane %v371, %v378
    %v381 = vunpack.c.l.s4 1983009808
    %v382 = vunpack.c.0.s8 %v381
    %v383 = vlaneseq
    %v384 = vshrl.u32 %v383, 7
    %v385 = vsub.s32 %v382, %v384
    %v386 = vrot.slane %v372, %v385
    %v387 = vcombine.low %v379, %v386
    %v388 = vcombine.low %v205, %v210
    %v389 = vcombine.low %v215, %v223
    %v391 = vunpack.c.l.s4 1983009808
    %v392 = vunpack.c.0.s8 %v391
    %v393 = vlaneseq
    %v394 = vshrl.u32 %v393, 7
    %v395 = vsub.s32 %v392, %v394
    %v396 = vrot.slane %v388, %v395
    %v398 = vunpack.c.l.s4 1983009808
    %v399 = vunpack.c.0.s8 %v398
    %v400 = vlaneseq
    %v401 = vshrl.u32 %v400, 7
    %v402 = vsub.s32 %v399, %v401
    %v403 = vrot.slane %v389, %v402
    %v404 = vcombine.low %v396, %v403
    %v405 = vcombine.low %v231, %v236
    %v406 = vcombine.low %v241, %v246
    %v408 = vunpack.c.l.s4 1983009808
    %v409 = vunpack.c.0.s8 %v408
    %v410 = vlaneseq
    %v411 = vshrl.u32 %v410, 7
    %v412 = vsub.s32 %v409, %v411
    %v413 = vrot.slane %v405, %v412
    %v415 = vunpack.c.l.s4 1983009808
    %v416 = vunpack.c.0.s8 %v415
    %v417 = vlaneseq
    %v418 = vshrl.u32 %v417, 7
    %v419 = vsub.s32 %v416, %v418
    %v420 = vrot.slane %v406, %v419
    %v421 = vcombine.low %v413, %v420
    %v422 = vcombine.low %v254, %v262
    %v423 = vcombine.low %v267, %v272
    %v425 = vunpack.c.l.s4 1983009808
    %v426 = vunpack.c.0.s8 %v425
    %v427 = vlaneseq
    %v428 = vshrl.u32 %v427, 7
    %v429 = vsub.s32 %v426, %v428
    %v430 = vrot.slane %v422, %v429
    %v432 = vunpack.c.l.s4 1983009808
    %v433 = vunpack.c.0.s8 %v432
    %v434 = vlaneseq
    %v435 = vshrl.u32 %v434, 7
    %v436 = vsub.s32 %v433, %v435
    %v437 = vrot.slane %v423, %v436
    %v438 = vcombine.low %v430, %v437
    %v439 = vcombine.low %v277, %v285
    %v440 = vcombine.low %v293, %v298
    %v442 = vunpack.c.l.s4 1983009808
    %v443 = vunpack.c.0.s8 %v442
    %v444 = vlaneseq
    %v445 = vshrl.u32 %v444, 7
    %v446 = vsub.s32 %v443, %v445
    %v447 = vrot.slane %v439, %v446
    %v449 = vunpack.c.l.s4 1983009808
    %v450 = vunpack.c.0.s8 %v449
    %v451 = vlaneseq
    %v452 = vshrl.u32 %v451, 7
    %v453 = vsub.s32 %v450, %v452
    %v454 = vrot.slane %v440, %v453
    %v455 = vcombine.low %v447, %v454
    %v456 = vcombine.low %v308, %v313
    %v457 = vcombine.low %v321, %v329
    %v459 = vunpack.c.l.s4 1983009808
    %v460 = vunpack.c.0.s8 %v459
    %v461 = vlaneseq
    %v462 = vshrl.u32 %v461, 7
    %v463 = vsub.s32 %v460, %v462
    %v464 = vrot.slane %v456, %v463
    %v466 = vunpack.c.l.s4 1983009808
    %v467 = vunpack.c.0.s8 %v466
    %v468 = vlaneseq
    %v469 = vshrl.u32 %v468, 7
    %v470 = vsub.s32 %v467, %v469
    %v471 = vrot.slane %v457, %v470
    %v472 = vcombine.low %v464, %v471
    %v474 = vunpack.c.l.s4 1983009808
    %v475 = vunpack.c.0.s8 %v474
    %v476 = vlaneseq
    %v477 = vshrl.u32 %v476, 7
    %v478 = vsub.s32 %v475, %v477
    %v479 = vrot.slane %v335, %v478
    %v480 = vcombine.low %v345, %v345
    %v482 = vunpack.c.l.s4 1983009808
    %v483 = vunpack.c.0.s8 %v482
    %v484 = vlaneseq
    %v485 = vshrl.u32 %v484, 7
    %v486 = vsub.s32 %v483, %v485
    %v487 = vrot.slane %v480, %v486
    %v488 = vcombine.low %v487, %v487
    %v490 = vunpack.c.l.s4 1983009808
    %v491 = vunpack.c.0.s8 %v490
    %v492 = vlaneseq
    %v493 = vshrl.u32 %v492, 7
    %v494 = vsub.s32 %v491, %v493
    %v495 = vrot.slane %v345, %v494
    %vm498 = vcmask 220160
    %v499 = vsel %vm498, %v387, 0
    %v501 = vsel %vm498, %v404, 0
    %v503 = vsel %vm498, %v421, 0
    %v505 = vsel %vm498, %v438, 0
    %v507 = vsel %vm498, %v455, 0
    %v509 = vsel %vm498, %v472, 0
    %v511 = vsel %vm498, %v479, 0
    %vm513 = vcmask 1042432
    %v515 = vsel %vm513, %v339, 0
    %517 = vmatprep.subr.mxu0 0.0
    %518 = vmatpush1.msra.mxu0 0.0
    %519 = vmatprep.subr.mxu0 0.0
    %520 = vmatpush1.msra.mxu0 0.0
    %521 = vmatprep.subr.mxu0 0.0
    %522 = vmatpush1.msra.mxu0 0.0
    %523 = vmatprep.subr.mxu0 0.0
    %524 = vmatpush1.msra.mxu0 0.0
    %525 = vmatprep.subr.mxu0 0.0
    %526 = vmatpush1.msra.mxu0 0.0
    %527 = vmatprep.subr.mxu0 0.0
    %528 = vmatpush1.msra.mxu0 0.0
    %529 = vmatprep.subr.mxu0 0.0
    %530 = vmatpush1.msra.mxu0 0.0
    %531 = vmatprep.subr.mxu0 0.0
    %532 = vmatpush1.msra.mxu0 0.0
    %533 = vmatprep.subr.mxu0 0.0
    %534 = vmatpush1.msra.mxu0 0.0
    %535 = vmatprep.subr.mxu0 0.0
    %536 = vmatpush1.msra.mxu0 0.0
    %537 = vmatprep.subr.mxu0 0.0
    %538 = vmatpush1.msra.mxu0 0.0
    %539 = vmatprep.subr.mxu0 0.0
    %540 = vmatpush1.msra.mxu0 0.0
    %541 = vmatprep.subr.mxu0 0.0
    %542 = vmatpush1.msra.mxu0 %v515
    %543 = vmatprep.subr.mxu0 0.0
    %544 = vmatpush1.msra.mxu0 %v338
    %545 = vmatprep.subr.mxu0 0.0
    %546 = vmatpush1.msra.mxu0 %v337
    %547 = vmatprep.subr.mxu0 0.0
    %548 = vmatpush1.msra.mxu0 %v336
    %549 = vmatprep.subr.mxu0 0.0
    %550 = vmatpush2.msra.mxu0 0.0
    %551 = vmatprep.subr.mxu0 0.0
    %552 = vmatpush2.msra.mxu0 0.0
    %553 = vmatprep.subr.mxu0 0.0
    %554 = vmatpush2.msra.mxu0 0.0
    %555 = vmatprep.subr.mxu0 0.0
    %556 = vmatpush2.msra.mxu0 0.0
    %557 = vmatprep.subr.mxu0 0.0
    %558 = vmatpush2.msra.mxu0 0.0
    %559 = vmatprep.subr.mxu0 0.0
    %560 = vmatpush2.msra.mxu0 0.0
    %561 = vmatprep.subr.mxu0 0.0
    %562 = vmatpush2.msra.mxu0 0.0
    %563 = vmatprep.subr.mxu0 0.0
    %564 = vmatpush2.msra.mxu0 0.0
    %565 = vmatprep.subr.mxu0 0.0
    %566 = vmatpush2.msra.mxu0 0.0
    %567 = vmatprep.subr.mxu0 0.0
    %568 = vmatpush2.msra.mxu0 0.0
    %569 = vmatprep.subr.mxu0 0.0
    %570 = vmatpush2.msra.mxu0 0.0
    %571 = vmatprep.subr.mxu0 0.0
    %572 = vmatpush2.msra.mxu0 0.0
    %573 = vmatprep.subr.mxu0 0.0
    %574 = vmatpush2.msra.mxu0 0.0
    %575 = vmatprep.subr.mxu0 0.0
    %576 = vmatpush2.msra.mxu0 0.0
    %577 = vmatprep.subr.mxu0 0.0
    %578 = vmatpush2.msra.mxu0 0.0
    %579 = vmatprep.subr.mxu0 0.0
    %580 = vmatpush2.msra.mxu0 0.0
    %581 = vmatprep.mubr.f32.mxu0 0.0
    %582 = vmatmul.mubr.f32.gmra.mxu0 %v499
    %v583 = vpop.f32.mrf.mxu0
    %v584 = vadd.f32 %v488, %v583
    %v585 = vpop.f32.mrf.mxu0
    %586 = vmatprep.mubr.f32.mxu0 0.0
    %587 = vmatmul.mubr.f32.gmra.mxu0 %v501
    %v588 = vpop.f32.mrf.mxu0
    %v589 = vadd.f32 %v488, %v588
    %v590 = vpop.f32.mrf.mxu0
    %591 = vmatprep.mubr.f32.mxu0 0.0
    %592 = vmatmul.mubr.f32.gmra.mxu0 %v503
    %v593 = vpop.f32.mrf.mxu0
    %v594 = vadd.f32 %v488, %v593
    %v595 = vpop.f32.mrf.mxu0
    %596 = vmatprep.mubr.f32.mxu0 0.0
    %597 = vmatmul.mubr.f32.gmra.mxu0 %v505
    %v598 = vpop.f32.mrf.mxu0
    %v599 = vadd.f32 %v488, %v598
    %v600 = vpop.f32.mrf.mxu0
    %601 = vmatprep.mubr.f32.mxu0 0.0
    %602 = vmatmul.mubr.f32.gmra.mxu0 %v507
    %v603 = vpop.f32.mrf.mxu0
    %v604 = vadd.f32 %v488, %v603
    %v605 = vpop.f32.mrf.mxu0
    %606 = vmatprep.mubr.f32.mxu0 0.0
    %607 = vmatmul.mubr.f32.gmra.mxu0 %v509
    %v608 = vpop.f32.mrf.mxu0
    %v609 = vadd.f32 %v488, %v608
    %v610 = vpop.f32.mrf.mxu0
    %611 = vmatprep.mubr.f32.mxu0 0.0
    %612 = vmatmul.mubr.f32.gmra.mxu0 %v511
    %v613 = vpop.f32.mrf.mxu0
    %v614 = vadd.f32 %v495, %v613
    %v615 = vpop.f32.mrf.mxu0
    %616 = vdwg.mxu0
    %v624 = vcombine.high %v584, %v584
    %v626 = vunpack.c.l.s4 1983009808
    %v627 = vunpack.c.0.s8 %v626
    %v628 = vlaneseq
    %v629 = vshrl.u32 %v628, 7
    %v630 = vsub.s32 %v627, %v629
    %v631 = vrot.slane %v584, %v630
    %v633 = vunpack.c.l.s4 1983009808
    %v634 = vunpack.c.0.s8 %v633
    %v635 = vlaneseq
    %v636 = vshrl.u32 %v635, 7
    %v637 = vsub.s32 %v634, %v636
    %v638 = vrot.slane %v624, %v637
    %v639 = vcombine.high %v631, %v631
    %v640 = vcombine.high %v638, %v638
    %v641 = vcombine.high %v589, %v589
    %v643 = vunpack.c.l.s4 1983009808
    %v644 = vunpack.c.0.s8 %v643
    %v645 = vlaneseq
    %v646 = vshrl.u32 %v645, 7
    %v647 = vsub.s32 %v644, %v646
    %v648 = vrot.slane %v589, %v647
    %v650 = vunpack.c.l.s4 1983009808
    %v651 = vunpack.c.0.s8 %v650
    %v652 = vlaneseq
    %v653 = vshrl.u32 %v652, 7
    %v654 = vsub.s32 %v651, %v653
    %v655 = vrot.slane %v641, %v654
    %v656 = vcombine.high %v648, %v648
    %v657 = vcombine.high %v655, %v655
    %v658 = vcombine.high %v594, %v594
    %v660 = vunpack.c.l.s4 1983009808
    %v661 = vunpack.c.0.s8 %v660
    %v662 = vlaneseq
    %v663 = vshrl.u32 %v662, 7
    %v664 = vsub.s32 %v661, %v663
    %v665 = vrot.slane %v594, %v664
    %v667 = vunpack.c.l.s4 1983009808
    %v668 = vunpack.c.0.s8 %v667
    %v669 = vlaneseq
    %v670 = vshrl.u32 %v669, 7
    %v671 = vsub.s32 %v668, %v670
    %v672 = vrot.slane %v658, %v671
    %v673 = vcombine.high %v665, %v665
    %v674 = vcombine.high %v672, %v672
    %v675 = vcombine.high %v599, %v599
    %v677 = vunpack.c.l.s4 1983009808
    %v678 = vunpack.c.0.s8 %v677
    %v679 = vlaneseq
    %v680 = vshrl.u32 %v679, 7
    %v681 = vsub.s32 %v678, %v680
    %v682 = vrot.slane %v599, %v681
    %v684 = vunpack.c.l.s4 1983009808
    %v685 = vunpack.c.0.s8 %v684
    %v686 = vlaneseq
    %v687 = vshrl.u32 %v686, 7
    %v688 = vsub.s32 %v685, %v687
    %v689 = vrot.slane %v675, %v688
    %v690 = vcombine.high %v682, %v682
    %v691 = vcombine.high %v689, %v689
    %v692 = vcombine.high %v604, %v604
    %v694 = vunpack.c.l.s4 1983009808
    %v695 = vunpack.c.0.s8 %v694
    %v696 = vlaneseq
    %v697 = vshrl.u32 %v696, 7
    %v698 = vsub.s32 %v695, %v697
    %v699 = vrot.slane %v604, %v698
    %v701 = vunpack.c.l.s4 1983009808
    %v702 = vunpack.c.0.s8 %v701
    %v703 = vlaneseq
    %v704 = vshrl.u32 %v703, 7
    %v705 = vsub.s32 %v702, %v704
    %v706 = vrot.slane %v692, %v705
    %v707 = vcombine.high %v699, %v699
    %v708 = vcombine.high %v706, %v706
    %v709 = vcombine.high %v609, %v609
    %v711 = vunpack.c.l.s4 1983009808
    %v712 = vunpack.c.0.s8 %v711
    %v713 = vlaneseq
    %v714 = vshrl.u32 %v713, 7
    %v715 = vsub.s32 %v712, %v714
    %v716 = vrot.slane %v609, %v715
    %v718 = vunpack.c.l.s4 1983009808
    %v719 = vunpack.c.0.s8 %v718
    %v720 = vlaneseq
    %v721 = vshrl.u32 %v720, 7
    %v722 = vsub.s32 %v719, %v721
    %v723 = vrot.slane %v709, %v722
    %v724 = vcombine.high %v716, %v716
    %v725 = vcombine.high %v723, %v723
    %v727 = vunpack.c.l.s4 1983009808
    %v728 = vunpack.c.0.s8 %v727
    %v729 = vlaneseq
    %v730 = vshrl.u32 %v729, 7
    %v731 = vsub.s32 %v728, %v730
    %v732 = vrot.slane %v614, %v731
    %v758 = vmax.f32 %v631, 0.0
    %v759 = vmax.f32 %v639, 0.0
    %v760 = vmax.f32 %v638, 0.0
    %v761 = vmax.f32 %v640, 0.0
    %v762 = vmax.f32 %v648, 0.0
    %v763 = vmax.f32 %v656, 0.0
    %v764 = vmax.f32 %v655, 0.0
    %v765 = vmax.f32 %v657, 0.0
    %v766 = vmax.f32 %v665, 0.0
    %v767 = vmax.f32 %v673, 0.0
    %v768 = vmax.f32 %v672, 0.0
    %v769 = vmax.f32 %v674, 0.0
    %v770 = vmax.f32 %v682, 0.0
    %v771 = vmax.f32 %v690, 0.0
    %v772 = vmax.f32 %v689, 0.0
    %v773 = vmax.f32 %v691, 0.0
    %v774 = vmax.f32 %v699, 0.0
    %v775 = vmax.f32 %v707, 0.0
    %v776 = vmax.f32 %v706, 0.0
    %v777 = vmax.f32 %v708, 0.0
    %v778 = vmax.f32 %v716, 0.0
    %v779 = vmax.f32 %v724, 0.0
    %v780 = vmax.f32 %v723, 0.0
    %v781 = vmax.f32 %v725, 0.0
    %v782 = vmax.f32 %v732, 0.0
    %v785 = vunpack.c.l.s4 1983009808
    %v786 = vunpack.c.0.s8 %v785
    %v787 = vlaneseq
    %v788 = vshrl.u32 %v787, 7
    %v789 = vsub.s32 %v786, %v788
    %v790 = vrot.slane %v759, %v789
    %791 = vrot.lane.b32.xlu0 %v790, 16
    %v792 = vpop.permute.xlu0 %791
    %v796 = vunpack.c.l.s4 1983009808
    %v797 = vunpack.c.0.s8 %v796
    %v798 = vlaneseq
    %v799 = vshrl.u32 %v798, 7
    %v800 = vsub.s32 %v797, %v799
    %v801 = vrot.slane %v760, %v800
    %802 = vrot.lane.b32.xlu0 %v801, 32
    %v803 = vpop.permute.xlu0 %802
    %v807 = vunpack.c.l.s4 1983009808
    %v808 = vunpack.c.0.s8 %v807
    %v809 = vlaneseq
    %v810 = vshrl.u32 %v809, 7
    %v811 = vsub.s32 %v808, %v810
    %v812 = vrot.slane %v763, %v811
    %813 = vrot.lane.b32.xlu0 %v812, 48
    %v814 = vpop.permute.xlu0 %813
    %v818 = vunpack.c.l.s4 1983009808
    %v819 = vunpack.c.0.s8 %v818
    %v820 = vlaneseq
    %v821 = vshrl.u32 %v820, 7
    %v822 = vsub.s32 %v819, %v821
    %v823 = vrot.slane %v764, %v822
    %824 = vrot.lane.b32.xlu0 %v823, 64
    %v825 = vpop.permute.xlu0 %824
    %v829 = vunpack.c.l.s4 1983009808
    %v830 = vunpack.c.0.s8 %v829
    %v831 = vlaneseq
    %v832 = vshrl.u32 %v831, 7
    %v833 = vsub.s32 %v830, %v832
    %v834 = vrot.slane %v765, %v833
    %835 = vrot.lane.b32.xlu0 %v834, 80
    %v836 = vpop.permute.xlu0 %835
    %v840 = vunpack.c.l.s4 1983009808
    %v841 = vunpack.c.0.s8 %v840
    %v842 = vlaneseq
    %v843 = vshrl.u32 %v842, 7
    %v844 = vsub.s32 %v841, %v843
    %v845 = vrot.slane %v768, %v844
    %846 = vrot.lane.b32.xlu0 %v845, 96
    %v847 = vpop.permute.xlu0 %846
    %v851 = vunpack.c.l.s4 1983009808
    %v852 = vunpack.c.0.s8 %v851
    %v853 = vlaneseq
    %v854 = vshrl.u32 %v853, 7
    %v855 = vsub.s32 %v852, %v854
    %v856 = vrot.slane %v769, %v855
    %857 = vrot.lane.b32.xlu0 %v856, 112
    %v858 = vpop.permute.xlu0 %857
    %vm860 = vcmask 130048
    %v861 = vsel %vm860, %v758, %v792
    %vm862 = vcmask 261120
    %v863 = vsel %vm862, %v861, %v803
    %vm864 = vcmask 392192
    %v865 = vsel %vm864, %v863, %v814
    %vm866 = vcmask 523264
    %v867 = vsel %vm866, %v865, %v825
    %vm868 = vcmask 654336
    %v869 = vsel %vm868, %v867, %v836
    %vm870 = vcmask 785408
    %v871 = vsel %vm870, %v869, %v847
    %vm872 = vcmask 916480
    %v873 = vsel %vm872, %v871, %v858
    %874 = vrot.lane.b32.xlu0 %v801, 16
    %v875 = vpop.permute.xlu0 %874
    %v879 = vunpack.c.l.s4 1983009808
    %v880 = vunpack.c.0.s8 %v879
    %v881 = vlaneseq
    %v882 = vshrl.u32 %v881, 7
    %v883 = vsub.s32 %v880, %v882
    %v884 = vrot.slane %v761, %v883
    %885 = vrot.lane.b32.xlu0 %v884, 32
    %v886 = vpop.permute.xlu0 %885
    %888 = vrot.lane.b32.xlu0 %v823, 48
    %v889 = vpop.permute.xlu0 %888
    %891 = vrot.lane.b32.xlu0 %v834, 64
    %v892 = vpop.permute.xlu0 %891
    %v896 = vunpack.c.l.s4 1983009808
    %v897 = vunpack.c.0.s8 %v896
    %v898 = vlaneseq
    %v899 = vshrl.u32 %v898, 7
    %v900 = vsub.s32 %v897, %v899
    %v901 = vrot.slane %v766, %v900
    %902 = vrot.lane.b32.xlu0 %v901, 80
    %v903 = vpop.permute.xlu0 %902
    %905 = vrot.lane.b32.xlu0 %v856, 96
    %v906 = vpop.permute.xlu0 %905
    %v910 = vunpack.c.l.s4 1983009808
    %v911 = vunpack.c.0.s8 %v910
    %v912 = vlaneseq
    %v913 = vshrl.u32 %v912, 7
    %v914 = vsub.s32 %v911, %v913
    %v915 = vrot.slane %v770, %v914
    %916 = vrot.lane.b32.xlu0 %v915, 112
    %v917 = vpop.permute.xlu0 %916
    %v919 = vsel %vm860, %v759, %v875
    %v920 = vsel %vm862, %v919, %v886
    %v921 = vsel %vm864, %v920, %v889
    %v922 = vsel %vm866, %v921, %v892
    %v923 = vsel %vm868, %v922, %v903
    %v924 = vsel %vm870, %v923, %v906
    %v925 = vsel %vm872, %v924, %v917
    %926 = vrot.lane.b32.xlu0 %v884, 16
    %v927 = vpop.permute.xlu0 %926
    %v931 = vunpack.c.l.s4 1983009808
    %v932 = vunpack.c.0.s8 %v931
    %v933 = vlaneseq
    %v934 = vshrl.u32 %v933, 7
    %v935 = vsub.s32 %v932, %v934
    %v936 = vrot.slane %v762, %v935
    %937 = vrot.lane.b32.xlu0 %v936, 32
    %v938 = vpop.permute.xlu0 %937
    %940 = vrot.lane.b32.xlu0 %v834, 48
    %v941 = vpop.permute.xlu0 %940
    %943 = vrot.lane.b32.xlu0 %v901, 64
    %v944 = vpop.permute.xlu0 %943
    %v948 = vunpack.c.l.s4 1983009808
    %v949 = vunpack.c.0.s8 %v948
    %v950 = vlaneseq
    %v951 = vshrl.u32 %v950, 7
    %v952 = vsub.s32 %v949, %v951
    %v953 = vrot.slane %v767, %v952
    %954 = vrot.lane.b32.xlu0 %v953, 80
    %v955 = vpop.permute.xlu0 %954
    %957 = vrot.lane.b32.xlu0 %v915, 96
    %v958 = vpop.permute.xlu0 %957
    %v962 = vunpack.c.l.s4 1983009808
    %v963 = vunpack.c.0.s8 %v962
    %v964 = vlaneseq
    %v965 = vshrl.u32 %v964, 7
    %v966 = vsub.s32 %v963, %v965
    %v967 = vrot.slane %v771, %v966
    %968 = vrot.lane.b32.xlu0 %v967, 112
    %v969 = vpop.permute.xlu0 %968
    %v971 = vsel %vm860, %v760, %v927
    %v972 = vsel %vm862, %v971, %v938
    %v973 = vsel %vm864, %v972, %v941
    %v974 = vsel %vm866, %v973, %v944
    %v975 = vsel %vm868, %v974, %v955
    %v976 = vsel %vm870, %v975, %v958
    %v977 = vsel %vm872, %v976, %v969
    %978 = vrot.lane.b32.xlu0 %v823, 16
    %v979 = vpop.permute.xlu0 %978
    %981 = vrot.lane.b32.xlu0 %v834, 32
    %v982 = vpop.permute.xlu0 %981
    %984 = vrot.lane.b32.xlu0 %v845, 48
    %v985 = vpop.permute.xlu0 %984
    %987 = vrot.lane.b32.xlu0 %v856, 64
    %v988 = vpop.permute.xlu0 %987
    %990 = vrot.lane.b32.xlu0 %v915, 80
    %v991 = vpop.permute.xlu0 %990
    %v995 = vunpack.c.l.s4 1983009808
    %v996 = vunpack.c.0.s8 %v995
    %v997 = vlaneseq
    %v998 = vshrl.u32 %v997, 7
    %v999 = vsub.s32 %v996, %v998
    %v1000 = vrot.slane %v773, %v999
    %1001 = vrot.lane.b32.xlu0 %v1000, 96
    %v1002 = vpop.permute.xlu0 %1001
    %v1006 = vunpack.c.l.s4 1983009808
    %v1007 = vunpack.c.0.s8 %v1006
    %v1008 = vlaneseq
    %v1009 = vshrl.u32 %v1008, 7
    %v1010 = vsub.s32 %v1007, %v1009
    %v1011 = vrot.slane %v774, %v1010
    %1012 = vrot.lane.b32.xlu0 %v1011, 112
    %v1013 = vpop.permute.xlu0 %1012
    %v1015 = vsel %vm860, %v763, %v979
    %v1016 = vsel %vm862, %v1015, %v982
    %v1017 = vsel %vm864, %v1016, %v985
    %v1018 = vsel %vm866, %v1017, %v988
    %v1019 = vsel %vm868, %v1018, %v991
    %v1020 = vsel %vm870, %v1019, %v1002
    %v1021 = vsel %vm872, %v1020, %v1013
    %1022 = vrot.lane.b32.xlu0 %v834, 16
    %v1023 = vpop.permute.xlu0 %1022
    %1025 = vrot.lane.b32.xlu0 %v901, 32
    %v1026 = vpop.permute.xlu0 %1025
    %1028 = vrot.lane.b32.xlu0 %v856, 48
    %v1029 = vpop.permute.xlu0 %1028
    %1031 = vrot.lane.b32.xlu0 %v915, 64
    %v1032 = vpop.permute.xlu0 %1031
    %1034 = vrot.lane.b32.xlu0 %v967, 80
    %v1035 = vpop.permute.xlu0 %1034
    %1037 = vrot.lane.b32.xlu0 %v1011, 96
    %v1038 = vpop.permute.xlu0 %1037
    %v1042 = vunpack.c.l.s4 1983009808
    %v1043 = vunpack.c.0.s8 %v1042
    %v1044 = vlaneseq
    %v1045 = vshrl.u32 %v1044, 7
    %v1046 = vsub.s32 %v1043, %v1045
    %v1047 = vrot.slane %v775, %v1046
    %1048 = vrot.lane.b32.xlu0 %v1047, 112
    %v1049 = vpop.permute.xlu0 %1048
    %v1051 = vsel %vm860, %v764, %v1023
    %v1052 = vsel %vm862, %v1051, %v1026
    %v1053 = vsel %vm864, %v1052, %v1029
    %v1054 = vsel %vm866, %v1053, %v1032
    %v1055 = vsel %vm868, %v1054, %v1035
    %v1056 = vsel %vm870, %v1055, %v1038
    %v1057 = vsel %vm872, %v1056, %v1049
    %1058 = vrot.lane.b32.xlu0 %v901, 16
    %v1059 = vpop.permute.xlu0 %1058
    %1061 = vrot.lane.b32.xlu0 %v953, 32
    %v1062 = vpop.permute.xlu0 %1061
    %1064 = vrot.lane.b32.xlu0 %v915, 48
    %v1065 = vpop.permute.xlu0 %1064
    %1067 = vrot.lane.b32.xlu0 %v967, 64
    %v1068 = vpop.permute.xlu0 %1067
    %v1072 = vunpack.c.l.s4 1983009808
    %v1073 = vunpack.c.0.s8 %v1072
    %v1074 = vlaneseq
    %v1075 = vshrl.u32 %v1074, 7
    %v1076 = vsub.s32 %v1073, %v1075
    %v1077 = vrot.slane %v772, %v1076
    %1078 = vrot.lane.b32.xlu0 %v1077, 80
    %v1079 = vpop.permute.xlu0 %1078
    %1081 = vrot.lane.b32.xlu0 %v1047, 96
    %v1082 = vpop.permute.xlu0 %1081
    %v1086 = vunpack.c.l.s4 1983009808
    %v1087 = vunpack.c.0.s8 %v1086
    %v1088 = vlaneseq
    %v1089 = vshrl.u32 %v1088, 7
    %v1090 = vsub.s32 %v1087, %v1089
    %v1091 = vrot.slane %v776, %v1090
    %1092 = vrot.lane.b32.xlu0 %v1091, 112
    %v1093 = vpop.permute.xlu0 %1092
    %v1095 = vsel %vm860, %v765, %v1059
    %v1096 = vsel %vm862, %v1095, %v1062
    %v1097 = vsel %vm864, %v1096, %v1065
    %v1098 = vsel %vm866, %v1097, %v1068
    %v1099 = vsel %vm868, %v1098, %v1079
    %v1100 = vsel %vm870, %v1099, %v1082
    %v1101 = vsel %vm872, %v1100, %v1093
    %1102 = vrot.lane.b32.xlu0 %v856, 16
    %v1103 = vpop.permute.xlu0 %1102
    %1105 = vrot.lane.b32.xlu0 %v915, 32
    %v1106 = vpop.permute.xlu0 %1105
    %1108 = vrot.lane.b32.xlu0 %v1000, 48
    %v1109 = vpop.permute.xlu0 %1108
    %1111 = vrot.lane.b32.xlu0 %v1011, 64
    %v1112 = vpop.permute.xlu0 %1111
    %1114 = vrot.lane.b32.xlu0 %v1047, 80
    %v1115 = vpop.permute.xlu0 %1114
    %v1119 = vunpack.c.l.s4 1983009808
    %v1120 = vunpack.c.0.s8 %v1119
    %v1121 = vlaneseq
    %v1122 = vshrl.u32 %v1121, 7
    %v1123 = vsub.s32 %v1120, %v1122
    %v1124 = vrot.slane %v778, %v1123
    %1125 = vrot.lane.b32.xlu0 %v1124, 96
    %v1126 = vpop.permute.xlu0 %1125
    %v1130 = vunpack.c.l.s4 1983009808
    %v1131 = vunpack.c.0.s8 %v1130
    %v1132 = vlaneseq
    %v1133 = vshrl.u32 %v1132, 7
    %v1134 = vsub.s32 %v1131, %v1133
    %v1135 = vrot.slane %v779, %v1134
    %1136 = vrot.lane.b32.xlu0 %v1135, 112
    %v1137 = vpop.permute.xlu0 %1136
    %v1139 = vsel %vm860, %v768, %v1103
    %v1140 = vsel %vm862, %v1139, %v1106
    %v1141 = vsel %vm864, %v1140, %v1109
    %v1142 = vsel %vm866, %v1141, %v1112
    %v1143 = vsel %vm868, %v1142, %v1115
    %v1144 = vsel %vm870, %v1143, %v1126
    %v1145 = vsel %vm872, %v1144, %v1137
    %1146 = vrot.lane.b32.xlu0 %v915, 16
    %v1147 = vpop.permute.xlu0 %1146
    %1149 = vrot.lane.b32.xlu0 %v967, 32
    %v1150 = vpop.permute.xlu0 %1149
    %1152 = vrot.lane.b32.xlu0 %v1011, 48
    %v1153 = vpop.permute.xlu0 %1152
    %1155 = vrot.lane.b32.xlu0 %v1047, 64
    %v1156 = vpop.permute.xlu0 %1155
    %1158 = vrot.lane.b32.xlu0 %v1091, 80
    %v1159 = vpop.permute.xlu0 %1158
    %1161 = vrot.lane.b32.xlu0 %v1135, 96
    %v1162 = vpop.permute.xlu0 %1161
    %v1166 = vunpack.c.l.s4 1983009808
    %v1167 = vunpack.c.0.s8 %v1166
    %v1168 = vlaneseq
    %v1169 = vshrl.u32 %v1168, 7
    %v1170 = vsub.s32 %v1167, %v1169
    %v1171 = vrot.slane %v780, %v1170
    %1172 = vrot.lane.b32.xlu0 %v1171, 112
    %v1173 = vpop.permute.xlu0 %1172
    %v1175 = vsel %vm860, %v769, %v1147
    %v1176 = vsel %vm862, %v1175, %v1150
    %v1177 = vsel %vm864, %v1176, %v1153
    %v1178 = vsel %vm866, %v1177, %v1156
    %v1179 = vsel %vm868, %v1178, %v1159
    %v1180 = vsel %vm870, %v1179, %v1162
    %v1181 = vsel %vm872, %v1180, %v1173
    %1182 = vrot.lane.b32.xlu0 %v967, 16
    %v1183 = vpop.permute.xlu0 %1182
    %1185 = vrot.lane.b32.xlu0 %v1077, 32
    %v1186 = vpop.permute.xlu0 %1185
    %1188 = vrot.lane.b32.xlu0 %v1047, 48
    %v1189 = vpop.permute.xlu0 %1188
    %1191 = vrot.lane.b32.xlu0 %v1091, 64
    %v1192 = vpop.permute.xlu0 %1191
    %v1196 = vunpack.c.l.s4 1983009808
    %v1197 = vunpack.c.0.s8 %v1196
    %v1198 = vlaneseq
    %v1199 = vshrl.u32 %v1198, 7
    %v1200 = vsub.s32 %v1197, %v1199
    %v1201 = vrot.slane %v777, %v1200
    %1202 = vrot.lane.b32.xlu0 %v1201, 80
    %v1203 = vpop.permute.xlu0 %1202
    %1205 = vrot.lane.b32.xlu0 %v1171, 96
    %v1206 = vpop.permute.xlu0 %1205
    %v1210 = vunpack.c.l.s4 1983009808
    %v1211 = vunpack.c.0.s8 %v1210
    %v1212 = vlaneseq
    %v1213 = vshrl.u32 %v1212, 7
    %v1214 = vsub.s32 %v1211, %v1213
    %v1215 = vrot.slane %v781, %v1214
    %1216 = vrot.lane.b32.xlu0 %v1215, 112
    %v1217 = vpop.permute.xlu0 %1216
    %v1219 = vsel %vm860, %v770, %v1183
    %v1220 = vsel %vm862, %v1219, %v1186
    %v1221 = vsel %vm864, %v1220, %v1189
    %v1222 = vsel %vm866, %v1221, %v1192
    %v1223 = vsel %vm868, %v1222, %v1203
    %v1224 = vsel %vm870, %v1223, %v1206
    %v1225 = vsel %vm872, %v1224, %v1217
    %v1226 = vld [vmem:[%s5] sm:$0xff]
    %v1227 = vld [vmem:[%s5 + $0x8] sm:$0xff]
    %v1228 = vld [vmem:[%s5 + $0x10] sm:$0xff]
    %v1229 = vld [vmem:[%s5 + $0x18] sm:$0xff]
    %v1230 = vld [vmem:[%s5 + $0x20] sm:$0xff]
    %v1231 = vld [vmem:[%s5 + $0x28] sm:$0xff]
    %v1232 = vld [vmem:[%s5 + $0x30] sm:$0xff]
    %v1233 = vld [vmem:[%s5 + $0x38] sm:$0xff]
    %v1234 = vld [vmem:[%s5 + $0x40] sm:$0xff]
    %v1235 = vld [vmem:[%s5 + $0x48] sm:$0xff]
    %v1236 = vld [vmem:[%s5 + $0x50] sm:$0xff]
    %v1237 = vld [vmem:[%s5 + $0x58] sm:$0xff]
    %v1238 = vld [vmem:[%s5 + $0x60] sm:$0xff]
    %v1239 = vld [vmem:[%s5 + $0x68] sm:$0xff]
    %v1240 = vld [vmem:[%s5 + $0x70] sm:$0xff]
    %v1241 = vld [vmem:[%s5 + $0x78] sm:$0xff]
    %v1242 = vld [vmem:[%s5 + $0x80] sm:$0xff]
    %v1243 = vld [vmem:[%s5 + $0x88] sm:$0xff]
    %v1244 = vld [vmem:[%s6] sm:$0x1]
    %v1246 = vlaneseq
    %v1247 = vshrl.u32 %v1246, 7
    %v1248 = vsub.s32 0, %v1247
    %v1249 = vrot.slane %v1244, %v1248
    %v1260 = vcombine.low %v873, %v770
    %v1262 = vunpack.c.l.s4 1983009808
    %v1263 = vunpack.c.0.s8 %v1262
    %v1264 = vlaneseq
    %v1265 = vshrl.u32 %v1264, 7
    %v1266 = vsub.s32 %v1263, %v1265
    %v1267 = vrot.slane %v1260, %v1266
    %v1268 = vcombine.low %v925, %v771
    %v1270 = vunpack.c.l.s4 1983009808
    %v1271 = vunpack.c.0.s8 %v1270
    %v1272 = vlaneseq
    %v1273 = vshrl.u32 %v1272, 7
    %v1274 = vsub.s32 %v1271, %v1273
    %v1275 = vrot.slane %v1268, %v1274
    %v1276 = vcombine.low %v977, %v772
    %v1278 = vunpack.c.l.s4 1983009808
    %v1279 = vunpack.c.0.s8 %v1278
    %v1280 = vlaneseq
    %v1281 = vshrl.u32 %v1280, 7
    %v1282 = vsub.s32 %v1279, %v1281
    %v1283 = vrot.slane %v1276, %v1282
    %v1284 = vcombine.low %v1021, %v775
    %v1286 = vunpack.c.l.s4 1983009808
    %v1287 = vunpack.c.0.s8 %v1286
    %v1288 = vlaneseq
    %v1289 = vshrl.u32 %v1288, 7
    %v1290 = vsub.s32 %v1287, %v1289
    %v1291 = vrot.slane %v1284, %v1290
    %v1292 = vcombine.low %v1057, %v776
    %v1294 = vunpack.c.l.s4 1983009808
    %v1295 = vunpack.c.0.s8 %v1294
    %v1296 = vlaneseq
    %v1297 = vshrl.u32 %v1296, 7
    %v1298 = vsub.s32 %v1295, %v1297
    %v1299 = vrot.slane %v1292, %v1298
    %v1300 = vcombine.low %v1101, %v777
    %v1302 = vunpack.c.l.s4 1983009808
    %v1303 = vunpack.c.0.s8 %v1302
    %v1304 = vlaneseq
    %v1305 = vshrl.u32 %v1304, 7
    %v1306 = vsub.s32 %v1303, %v1305
    %v1307 = vrot.slane %v1300, %v1306
    %v1308 = vcombine.low %v1145, %v780
    %v1310 = vunpack.c.l.s4 1983009808
    %v1311 = vunpack.c.0.s8 %v1310
    %v1312 = vlaneseq
    %v1313 = vshrl.u32 %v1312, 7
    %v1314 = vsub.s32 %v1311, %v1313
    %v1315 = vrot.slane %v1308, %v1314
    %v1316 = vcombine.low %v1181, %v781
    %v1318 = vunpack.c.l.s4 1983009808
    %v1319 = vunpack.c.0.s8 %v1318
    %v1320 = vlaneseq
    %v1321 = vshrl.u32 %v1320, 7
    %v1322 = vsub.s32 %v1319, %v1321
    %v1323 = vrot.slane %v1316, %v1322
    %v1324 = vcombine.low %v1225, %v782
    %v1326 = vunpack.c.l.s4 1983009808
    %v1327 = vunpack.c.0.s8 %v1326
    %v1328 = vlaneseq
    %v1329 = vshrl.u32 %v1328, 7
    %v1330 = vsub.s32 %v1327, %v1329
    %v1331 = vrot.slane %v1324, %v1330
    %v1332 = vcombine.low %v1267, %v1275
    %v1333 = vcombine.low %v1283, %v1291
    %v1335 = vunpack.c.l.s4 1983009808
    %v1336 = vunpack.c.0.s8 %v1335
    %v1337 = vlaneseq
    %v1338 = vshrl.u32 %v1337, 7
    %v1339 = vsub.s32 %v1336, %v1338
    %v1340 = vrot.slane %v1332, %v1339
    %v1342 = vunpack.c.l.s4 1983009808
    %v1343 = vunpack.c.0.s8 %v1342
    %v1344 = vlaneseq
    %v1345 = vshrl.u32 %v1344, 7
    %v1346 = vsub.s32 %v1343, %v1345
    %v1347 = vrot.slane %v1333, %v1346
    %v1348 = vcombine.low %v1340, %v1347
    %v1349 = vcombine.high %v1340, %v1347
    %v1350 = vcombine.low %v1299, %v1307
    %v1351 = vcombine.low %v1315, %v1323
    %v1353 = vunpack.c.l.s4 1983009808
    %v1354 = vunpack.c.0.s8 %v1353
    %v1355 = vlaneseq
    %v1356 = vshrl.u32 %v1355, 7
    %v1357 = vsub.s32 %v1354, %v1356
    %v1358 = vrot.slane %v1350, %v1357
    %v1360 = vunpack.c.l.s4 1983009808
    %v1361 = vunpack.c.0.s8 %v1360
    %v1362 = vlaneseq
    %v1363 = vshrl.u32 %v1362, 7
    %v1364 = vsub.s32 %v1361, %v1363
    %v1365 = vrot.slane %v1351, %v1364
    %v1366 = vcombine.low %v1358, %v1365
    %v1367 = vcombine.high %v1358, %v1365
    %v1369 = vunpack.c.l.s4 1983009808
    %v1370 = vunpack.c.0.s8 %v1369
    %v1371 = vlaneseq
    %v1372 = vshrl.u32 %v1371, 7
    %v1373 = vsub.s32 %v1370, %v1372
    %v1374 = vrot.slane %v1331, %v1373
    %v1375 = vcombine.high %v1374, %v1374
    %v1379 = vcombine.low %v1249, %v1249
    %v1381 = vunpack.c.l.s4 1983009808
    %v1382 = vunpack.c.0.s8 %v1381
    %v1383 = vlaneseq
    %v1384 = vshrl.u32 %v1383, 7
    %v1385 = vsub.s32 %v1382, %v1384
    %v1386 = vrot.slane %v1379, %v1385
    %v1387 = vcombine.low %v1386, %v1386
    %v1389 = vunpack.c.l.s4 1983009808
    %v1390 = vunpack.c.0.s8 %v1389
    %v1391 = vlaneseq
    %v1392 = vshrl.u32 %v1391, 7
    %v1393 = vsub.s32 %v1390, %v1392
    %v1394 = vrot.slane %v1249, %v1393
    %v1397 = vsel %vm860, %v1349, 0
    %v1399 = vsel %vm860, %v1367, 0
    %v1401 = vsel %vm860, %v1375, 0
    %1403 = vmatprep.subr.mxu0 0.0
    %1404 = vmatpush1.msra.mxu0 %v1241
    %1405 = vmatprep.subr.mxu0 0.0
    %1406 = vmatpush1.msra.mxu0 %v1240
    %1407 = vmatprep.subr.mxu0 0.0
    %1408 = vmatpush1.msra.mxu0 %v1239
    %1409 = vmatprep.subr.mxu0 0.0
    %1410 = vmatpush1.msra.mxu0 %v1238
    %1411 = vmatprep.subr.mxu0 0.0
    %1412 = vmatpush1.msra.mxu0 %v1237
    %1413 = vmatprep.subr.mxu0 0.0
    %1414 = vmatpush1.msra.mxu0 %v1236
    %1415 = vmatprep.subr.mxu0 0.0
    %1416 = vmatpush1.msra.mxu0 %v1235
    %1417 = vmatprep.subr.mxu0 0.0
    %1418 = vmatpush1.msra.mxu0 %v1234
    %1419 = vmatprep.subr.mxu0 0.0
    %1420 = vmatpush1.msra.mxu0 %v1233
    %1421 = vmatprep.subr.mxu0 0.0
    %1422 = vmatpush1.msra.mxu0 %v1232
    %1423 = vmatprep.subr.mxu0 0.0
    %1424 = vmatpush1.msra.mxu0 %v1231
    %1425 = vmatprep.subr.mxu0 0.0
    %1426 = vmatpush1.msra.mxu0 %v1230
    %1427 = vmatprep.subr.mxu0 0.0
    %1428 = vmatpush1.msra.mxu0 %v1229
    %1429 = vmatprep.subr.mxu0 0.0
    %1430 = vmatpush1.msra.mxu0 %v1228
    %1431 = vmatprep.subr.mxu0 0.0
    %1432 = vmatpush1.msra.mxu0 %v1227
    %1433 = vmatprep.subr.mxu0 0.0
    %1434 = vmatpush1.msra.mxu0 %v1226
    %1435 = vmatprep.subr.mxu0 0.0
    %1436 = vmatpush2.msra.mxu0 0.0
    %1437 = vmatprep.subr.mxu0 0.0
    %1438 = vmatpush2.msra.mxu0 0.0
    %1439 = vmatprep.subr.mxu0 0.0
    %1440 = vmatpush2.msra.mxu0 0.0
    %1441 = vmatprep.subr.mxu0 0.0
    %1442 = vmatpush2.msra.mxu0 0.0
    %1443 = vmatprep.subr.mxu0 0.0
    %1444 = vmatpush2.msra.mxu0 0.0
    %1445 = vmatprep.subr.mxu0 0.0
    %1446 = vmatpush2.msra.mxu0 0.0
    %1447 = vmatprep.subr.mxu0 0.0
    %1448 = vmatpush2.msra.mxu0 0.0
    %1449 = vmatprep.subr.mxu0 0.0
    %1450 = vmatpush2.msra.mxu0 0.0
    %1451 = vmatprep.subr.mxu0 0.0
    %1452 = vmatpush2.msra.mxu0 0.0
    %1453 = vmatprep.subr.mxu0 0.0
    %1454 = vmatpush2.msra.mxu0 0.0
    %1455 = vmatprep.subr.mxu0 0.0
    %1456 = vmatpush2.msra.mxu0 0.0
    %1457 = vmatprep.subr.mxu0 0.0
    %1458 = vmatpush2.msra.mxu0 0.0
    %1459 = vmatprep.subr.mxu0 0.0
    %1460 = vmatpush2.msra.mxu0 0.0
    %1461 = vmatprep.subr.mxu0 0.0
    %1462 = vmatpush2.msra.mxu0 0.0
    %1463 = vmatprep.subr.mxu0 0.0
    %1464 = vmatpush2.msra.mxu0 %v1243
    %1465 = vmatprep.subr.mxu0 0.0
    %1466 = vmatpush2.msra.mxu0 %v1242
    %1467 = vmatprep.mubr.f32.mxu0 %v1397
    %1468 = vmatmul.mubr.f32.gmra.mxu0 %v1348
    %v1469 = vpop.f32.mrf.mxu0
    %v1470 = vadd.f32 %v1387, %v1469
    %v1471 = vpop.f32.mrf.mxu0
    %1472 = vmatprep.mubr.f32.mxu0 %v1399
    %1473 = vmatmul.mubr.f32.gmra.mxu0 %v1366
    %v1474 = vpop.f32.mrf.mxu0
    %v1475 = vadd.f32 %v1387, %v1474
    %v1476 = vpop.f32.mrf.mxu0
    %1477 = vmatprep.mubr.f32.mxu0 %v1401
    %1478 = vmatmul.mubr.f32.gmra.mxu0 %v1374
    %v1479 = vpop.f32.mrf.mxu0
    %v1480 = vadd.f32 %v1394, %v1479
    %v1481 = vpop.f32.mrf.mxu0
    %1482 = vdwg.mxu0
    %v1486 = vcombine.high %v1470, %v1470
    %v1488 = vunpack.c.l.s4 1983009808
    %v1489 = vunpack.c.0.s8 %v1488
    %v1490 = vlaneseq
    %v1491 = vshrl.u32 %v1490, 7
    %v1492 = vsub.s32 %v1489, %v1491
    %v1493 = vrot.slane %v1470, %v1492
    %v1495 = vunpack.c.l.s4 1983009808
    %v1496 = vunpack.c.0.s8 %v1495
    %v1497 = vlaneseq
    %v1498 = vshrl.u32 %v1497, 7
    %v1499 = vsub.s32 %v1496, %v1498
    %v1500 = vrot.slane %v1486, %v1499
    %v1501 = vcombine.high %v1493, %v1493
    %v1502 = vcombine.high %v1500, %v1500
    %v1503 = vcombine.high %v1475, %v1475
    %v1505 = vunpack.c.l.s4 1983009808
    %v1506 = vunpack.c.0.s8 %v1505
    %v1507 = vlaneseq
    %v1508 = vshrl.u32 %v1507, 7
    %v1509 = vsub.s32 %v1506, %v1508
    %v1510 = vrot.slane %v1475, %v1509
    %v1512 = vunpack.c.l.s4 1983009808
    %v1513 = vunpack.c.0.s8 %v1512
    %v1514 = vlaneseq
    %v1515 = vshrl.u32 %v1514, 7
    %v1516 = vsub.s32 %v1513, %v1515
    %v1517 = vrot.slane %v1503, %v1516
    %v1518 = vcombine.high %v1510, %v1510
    %v1519 = vcombine.high %v1517, %v1517
    %v1521 = vunpack.c.l.s4 1983009808
    %v1522 = vunpack.c.0.s8 %v1521
    %v1523 = vlaneseq
    %v1524 = vshrl.u32 %v1523, 7
    %v1525 = vsub.s32 %v1522, %v1524
    %v1526 = vrot.slane %v1480, %v1525
    %v1536 = vmax.f32 %v1493, 0.0
    %v1537 = vmax.f32 %v1501, 0.0
    %v1538 = vmax.f32 %v1500, 0.0
    %v1539 = vmax.f32 %v1502, 0.0
    %v1540 = vmax.f32 %v1510, 0.0
    %v1541 = vmax.f32 %v1518, 0.0
    %v1542 = vmax.f32 %v1517, 0.0
    %v1543 = vmax.f32 %v1519, 0.0
    %v1544 = vmax.f32 %v1526, 0.0
    %v1547 = vunpack.c.l.s4 1983009808
    %v1548 = vunpack.c.0.s8 %v1547
    %v1549 = vlaneseq
    %v1550 = vshrl.u32 %v1549, 7
    %v1551 = vsub.s32 %v1548, %v1550
    %v1552 = vrot.slane %v1537, %v1551
    %1553 = vrot.lane.b32.xlu0 %v1552, 32
    %v1554 = vpop.permute.xlu0 %1553
    %v1558 = vunpack.c.l.s4 1983009808
    %v1559 = vunpack.c.0.s8 %v1558
    %v1560 = vlaneseq
    %v1561 = vshrl.u32 %v1560, 7
    %v1562 = vsub.s32 %v1559, %v1561
    %v1563 = vrot.slane %v1539, %v1562
    %1564 = vrot.lane.b32.xlu0 %v1563, 64
    %v1565 = vpop.permute.xlu0 %1564
    %v1569 = vunpack.c.l.s4 1983009808
    %v1570 = vunpack.c.0.s8 %v1569
    %v1571 = vlaneseq
    %v1572 = vshrl.u32 %v1571, 7
    %v1573 = vsub.s32 %v1570, %v1572
    %v1574 = vrot.slane %v1540, %v1573
    %1575 = vrot.lane.b32.xlu0 %v1574, 96
    %v1576 = vpop.permute.xlu0 %1575
    %v1578 = vsel %vm862, %v1536, %v1554
    %v1579 = vsel %vm866, %v1578, %v1565
    %v1580 = vsel %vm870, %v1579, %v1576
    %v1583 = vunpack.c.l.s4 1983009808
    %v1584 = vunpack.c.0.s8 %v1583
    %v1585 = vlaneseq
    %v1586 = vshrl.u32 %v1585, 7
    %v1587 = vsub.s32 %v1584, %v1586
    %v1588 = vrot.slane %v1538, %v1587
    %1589 = vrot.lane.b32.xlu0 %v1588, 32
    %v1590 = vpop.permute.xlu0 %1589
    %1592 = vrot.lane.b32.xlu0 %v1574, 64
    %v1593 = vpop.permute.xlu0 %1592
    %v1597 = vunpack.c.l.s4 1983009808
    %v1598 = vunpack.c.0.s8 %v1597
    %v1599 = vlaneseq
    %v1600 = vshrl.u32 %v1599, 7
    %v1601 = vsub.s32 %v1598, %v1600
    %v1602 = vrot.slane %v1541, %v1601
    %1603 = vrot.lane.b32.xlu0 %v1602, 96
    %v1604 = vpop.permute.xlu0 %1603
    %v1606 = vsel %vm862, %v1537, %v1590
    %v1607 = vsel %vm866, %v1606, %v1593
    %v1608 = vsel %vm870, %v1607, %v1604
    %1609 = vrot.lane.b32.xlu0 %v1574, 32
    %v1610 = vpop.permute.xlu0 %1609
    %v1614 = vunpack.c.l.s4 1983009808
    %v1615 = vunpack.c.0.s8 %v1614
    %v1616 = vlaneseq
    %v1617 = vshrl.u32 %v1616, 7
    %v1618 = vsub.s32 %v1615, %v1617
    %v1619 = vrot.slane %v1542, %v1618
    %1620 = vrot.lane.b32.xlu0 %v1619, 64
    %v1621 = vpop.permute.xlu0 %1620
    %v1625 = vunpack.c.l.s4 1983009808
    %v1626 = vunpack.c.0.s8 %v1625
    %v1627 = vlaneseq
    %v1628 = vshrl.u32 %v1627, 7
    %v1629 = vsub.s32 %v1626, %v1628
    %v1630 = vrot.slane %v1543, %v1629
    %1631 = vrot.lane.b32.xlu0 %v1630, 96
    %v1632 = vpop.permute.xlu0 %1631
    %v1634 = vsel %vm862, %v1539, %v1610
    %v1635 = vsel %vm866, %v1634, %v1621
    %v1636 = vsel %vm870, %v1635, %v1632
    %1637 = vrot.lane.b32.xlu0 %v1602, 32
    %v1638 = vpop.permute.xlu0 %1637
    %1640 = vrot.lane.b32.xlu0 %v1630, 64
    %v1641 = vpop.permute.xlu0 %1640
    %v1645 = vunpack.c.l.s4 1983009808
    %v1646 = vunpack.c.0.s8 %v1645
    %v1647 = vlaneseq
    %v1648 = vshrl.u32 %v1647, 7
    %v1649 = vsub.s32 %v1646, %v1648
    %v1650 = vrot.slane %v1544, %v1649
    %1651 = vrot.lane.b32.xlu0 %v1650, 96
    %v1652 = vpop.permute.xlu0 %1651
    %v1654 = vsel %vm862, %v1540, %v1638
    %v1655 = vsel %vm866, %v1654, %v1641
    %v1656 = vsel %vm870, %v1655, %v1652
    %v1657 = vld [vmem:[%s7] sm:$0xff]
    %v1658 = vld [vmem:[%s7 + $0x8] sm:$0xff]
    %v1659 = vld [vmem:[%s7 + $0x10] sm:$0xff]
    %v1660 = vld [vmem:[%s7 + $0x18] sm:$0xff]
    %v1661 = vld [vmem:[%s7 + $0x20] sm:$0xff]
    %v1662 = vld [vmem:[%s7 + $0x28] sm:$0xff]
    %v1663 = vld [vmem:[%s7 + $0x30] sm:$0xff]
    %v1664 = vld [vmem:[%s7 + $0x38] sm:$0xff]
    %v1665 = vld [vmem:[%s7 + $0x40] sm:$0xff]
    %v1666 = vld [vmem:[%s7 + $0x48] sm:$0xff]
    %v1667 = vld [vmem:[%s7 + $0x50] sm:$0xff]
    %v1668 = vld [vmem:[%s7 + $0x58] sm:$0xff]
    %v1669 = vld [vmem:[%s7 + $0x60] sm:$0xff]
    %v1670 = vld [vmem:[%s7 + $0x68] sm:$0xff]
    %v1671 = vld [vmem:[%s7 + $0x70] sm:$0xff]
    %v1672 = vld [vmem:[%s7 + $0x78] sm:$0xff]
    %v1673 = vld [vmem:[%s8] sm:$0x1]
    %v1675 = vlaneseq
    %v1676 = vshrl.u32 %v1675, 7
    %v1677 = vsub.s32 0, %v1676
    %v1678 = vrot.slane %v1673, %v1677
    %v1683 = vcombine.low %v1580, %v1608
    %v1684 = vcombine.low %v1636, %v1656
    %v1686 = vunpack.c.l.s4 1983009808
    %v1687 = vunpack.c.0.s8 %v1686
    %v1688 = vlaneseq
    %v1689 = vshrl.u32 %v1688, 7
    %v1690 = vsub.s32 %v1687, %v1689
    %v1691 = vrot.slane %v1683, %v1690
    %v1693 = vunpack.c.l.s4 1983009808
    %v1694 = vunpack.c.0.s8 %v1693
    %v1695 = vlaneseq
    %v1696 = vshrl.u32 %v1695, 7
    %v1697 = vsub.s32 %v1694, %v1696
    %v1698 = vrot.slane %v1684, %v1697
    %v1699 = vcombine.low %v1691, %v1698
    %v1701 = vcombine.low %v1678, %v1678
    %v1703 = vunpack.c.l.s4 1983009808
    %v1704 = vunpack.c.0.s8 %v1703
    %v1705 = vlaneseq
    %v1706 = vshrl.u32 %v1705, 7
    %v1707 = vsub.s32 %v1704, %v1706
    %v1708 = vrot.slane %v1701, %v1707
    %v1709 = vcombine.low %v1708, %v1708
    %1711 = vmatprep.subr.mxu0 0.0
    %1712 = vmatpush1.msra.mxu0 %v1672
    %1713 = vmatprep.subr.mxu0 0.0
    %1714 = vmatpush1.msra.mxu0 %v1671
    %1715 = vmatprep.subr.mxu0 0.0
    %1716 = vmatpush1.msra.mxu0 %v1670
    %1717 = vmatprep.subr.mxu0 0.0
    %1718 = vmatpush1.msra.mxu0 %v1669
    %1719 = vmatprep.subr.mxu0 0.0
    %1720 = vmatpush1.msra.mxu0 %v1668
    %1721 = vmatprep.subr.mxu0 0.0
    %1722 = vmatpush1.msra.mxu0 %v1667
    %1723 = vmatprep.subr.mxu0 0.0
    %1724 = vmatpush1.msra.mxu0 %v1666
    %1725 = vmatprep.subr.mxu0 0.0
    %1726 = vmatpush1.msra.mxu0 %v1665
    %1727 = vmatprep.subr.mxu0 0.0
    %1728 = vmatpush1.msra.mxu0 %v1664
    %1729 = vmatprep.subr.mxu0 0.0
    %1730 = vmatpush1.msra.mxu0 %v1663
    %1731 = vmatprep.subr.mxu0 0.0
    %1732 = vmatpush1.msra.mxu0 %v1662
    %1733 = vmatprep.subr.mxu0 0.0
    %1734 = vmatpush1.msra.mxu0 %v1661
    %1735 = vmatprep.subr.mxu0 0.0
    %1736 = vmatpush1.msra.mxu0 %v1660
    %1737 = vmatprep.subr.mxu0 0.0
    %1738 = vmatpush1.msra.mxu0 %v1659
    %1739 = vmatprep.subr.mxu0 0.0
    %1740 = vmatpush1.msra.mxu0 %v1658
    %1741 = vmatprep.subr.mxu0 0.0
    %1742 = vmatpush1.msra.mxu0 %v1657
    %1743 = vmatprep.subr.mxu0 0.0
    %1744 = vmatpush2.msra.mxu0 0.0
    %1745 = vmatprep.subr.mxu0 0.0
    %1746 = vmatpush2.msra.mxu0 0.0
    %1747 = vmatprep.subr.mxu0 0.0
    %1748 = vmatpush2.msra.mxu0 0.0
    %1749 = vmatprep.subr.mxu0 0.0
    %1750 = vmatpush2.msra.mxu0 0.0
    %1751 = vmatprep.subr.mxu0 0.0
    %1752 = vmatpush2.msra.mxu0 0.0
    %1753 = vmatprep.subr.mxu0 0.0
    %1754 = vmatpush2.msra.mxu0 0.0
    %1755 = vmatprep.subr.mxu0 0.0
    %1756 = vmatpush2.msra.mxu0 0.0
    %1757 = vmatprep.subr.mxu0 0.0
    %1758 = vmatpush2.msra.mxu0 0.0
    %1759 = vmatprep.subr.mxu0 0.0
    %1760 = vmatpush2.msra.mxu0 0.0
    %1761 = vmatprep.subr.mxu0 0.0
    %1762 = vmatpush2.msra.mxu0 0.0
    %1763 = vmatprep.subr.mxu0 0.0
    %1764 = vmatpush2.msra.mxu0 0.0
    %1765 = vmatprep.subr.mxu0 0.0
    %1766 = vmatpush2.msra.mxu0 0.0
    %1767 = vmatprep.subr.mxu0 0.0
    %1768 = vmatpush2.msra.mxu0 0.0
    %1769 = vmatprep.subr.mxu0 0.0
    %1770 = vmatpush2.msra.mxu0 0.0
    %1771 = vmatprep.subr.mxu0 0.0
    %1772 = vmatpush2.msra.mxu0 0.0
    %1773 = vmatprep.subr.mxu0 0.0
    %1774 = vmatpush2.msra.mxu0 0.0
    %1775 = vmatprep.mubr.f32.mxu0 0.0
    %1776 = vmatmul.mubr.f32.gmra.mxu0 %v1699
    %v1777 = vpop.f32.mrf.mxu0
    %v1778 = vadd.f32 %v1709, %v1777
    %v1779 = vpop.f32.mrf.mxu0
    %1780 = vdwg.mxu0
    %v1782 = vcombine.high %v1778, %v1778
    %v1784 = vunpack.c.l.s4 1983009808
    %v1785 = vunpack.c.0.s8 %v1784
    %v1786 = vlaneseq
    %v1787 = vshrl.u32 %v1786, 7
    %v1788 = vsub.s32 %v1785, %v1787
    %v1789 = vrot.slane %v1778, %v1788
    %v1791 = vunpack.c.l.s4 1983009808
    %v1792 = vunpack.c.0.s8 %v1791
    %v1793 = vlaneseq
    %v1794 = vshrl.u32 %v1793, 7
    %v1795 = vsub.s32 %v1792, %v1794
    %v1796 = vrot.slane %v1782, %v1795
    %v1797 = vcombine.high %v1789, %v1789
    %v1798 = vcombine.high %v1796, %v1796
    %v1803 = vmax.f32 %v1789, 0.0
    %v1804 = vmax.f32 %v1797, 0.0
    %v1805 = vmax.f32 %v1796, 0.0
    %v1806 = vmax.f32 %v1798, 0.0
    %v1809 = vunpack.c.l.s4 1983009808
    %v1810 = vunpack.c.0.s8 %v1809
    %v1811 = vlaneseq
    %v1812 = vshrl.u32 %v1811, 7
    %v1813 = vsub.s32 %v1810, %v1812
    %v1814 = vrot.slane %v1804, %v1813
    %1815 = vrot.lane.b32.xlu0 %v1814, 32
    %v1816 = vpop.permute.xlu0 %1815
    %v1820 = vunpack.c.l.s4 1983009808
    %v1821 = vunpack.c.0.s8 %v1820
    %v1822 = vlaneseq
    %v1823 = vshrl.u32 %v1822, 7
    %v1824 = vsub.s32 %v1821, %v1823
    %v1825 = vrot.slane %v1805, %v1824
    %1826 = vrot.lane.b32.xlu0 %v1825, 64
    %v1827 = vpop.permute.xlu0 %1826
    %v1831 = vunpack.c.l.s4 1983009808
    %v1832 = vunpack.c.0.s8 %v1831
    %v1833 = vlaneseq
    %v1834 = vshrl.u32 %v1833, 7
    %v1835 = vsub.s32 %v1832, %v1834
    %v1836 = vrot.slane %v1806, %v1835
    %1837 = vrot.lane.b32.xlu0 %v1836, 96
    %v1838 = vpop.permute.xlu0 %1837
    %v1840 = vsel %vm862, %v1803, %v1816
    %v1841 = vsel %vm866, %v1840, %v1827
    %v1842 = vsel %vm870, %v1841, %v1838
    %v1843 = vld [vmem:[%s1] sm:$0xff]
    %v1844 = vld [vmem:[%s1 + $0x8] sm:$0xff]
    %v1845 = vld [vmem:[%s1 + $0x10] sm:$0xf]
    %v1846 = vlaneseq
    %v1847 = vand.u32 %v1846, 127
    %1848 = vset.pattern.permute.xlu0 0
    %1849 = vperm.xlu0 %1848, %v1843
    %v1850 = vpop.permute.xlu0 %1849
    %1851 = vset.pattern.permute.xlu0 0
    %1852 = vperm.xlu0 %1851, %v1844
    %v1853 = vpop.permute.xlu0 %1852
    %1854 = vset.pattern.permute.xlu0 0
    %1855 = vperm.xlu0 %1854, %v1845
    %v1856 = vpop.permute.xlu0 %1855
    %vm1857 = vcmp.eq.s32.totalorder %v1850, %v1847
    %vm1858 = vcmp.eq.s32.totalorder %v1853, %v1847
    %vm1859 = vcmp.eq.s32.totalorder %v1856, %v1847
    %v1860 = vsel %vm1857, 1, 0
    %v1861 = vsel %vm1858, 1, 0
    %v1862 = vsel %vm1859, 1, 0
    %v1863 = vcvt.s32.f32 %v1860
    %v1864 = vcvt.s32.f32 %v1861
    %v1865 = vcvt.s32.f32 %v1862
    %v1866 = vld [vmem:[#allocation2] sm:$0xff]
    %v1867 = vld [vmem:[#allocation2 + $0x8] sm:$0x3f]
    %vm1868 = vcmask 113664
    %v1870 = vsel %vm1868, %v1863, 0
    %v1873 = vsel %vm1868, %v1864, 0
    %v1876 = vsel %vm1868, %v1865, 0
    %vm1878 = vcmask 1045504
    %v1880 = vsel %vm1878, %v1867, 0
    %1882 = vmatprep.subr.mxu0 0.0
    %1883 = vmatpush1.msra.mxu0 0.0
    %1884 = vmatprep.subr.mxu0 0.0
    %1885 = vmatpush1.msra.mxu0 0.0
    %1886 = vmatprep.subr.mxu0 0.0
    %1887 = vmatpush1.msra.mxu0 0.0
    %1888 = vmatprep.subr.mxu0 0.0
    %1889 = vmatpush1.msra.mxu0 0.0
    %1890 = vmatprep.subr.mxu0 0.0
    %1891 = vmatpush1.msra.mxu0 0.0
    %1892 = vmatprep.subr.mxu0 0.0
    %1893 = vmatpush1.msra.mxu0 0.0
    %1894 = vmatprep.subr.mxu0 0.0
    %1895 = vmatpush1.msra.mxu0 0.0
    %1896 = vmatprep.subr.mxu0 0.0
    %1897 = vmatpush1.msra.mxu0 0.0
    %1898 = vmatprep.subr.mxu0 0.0
    %1899 = vmatpush1.msra.mxu0 0.0
    %1900 = vmatprep.subr.mxu0 0.0
    %1901 = vmatpush1.msra.mxu0 0.0
    %1902 = vmatprep.subr.mxu0 0.0
    %1903 = vmatpush1.msra.mxu0 0.0
    %1904 = vmatprep.subr.mxu0 0.0
    %1905 = vmatpush1.msra.mxu0 0.0
    %1906 = vmatprep.subr.mxu0 0.0
    %1907 = vmatpush1.msra.mxu0 0.0
    %1908 = vmatprep.subr.mxu0 0.0
    %1909 = vmatpush1.msra.mxu0 0.0
    %1910 = vmatprep.subr.mxu0 0.0
    %1911 = vmatpush1.msra.mxu0 %v1880
    %1912 = vmatprep.subr.mxu0 0.0
    %1913 = vmatpush1.msra.mxu0 %v1866
    %1914 = vmatprep.subr.mxu0 0.0
    %1915 = vmatpush2.msra.mxu0 0.0
    %1916 = vmatprep.subr.mxu0 0.0
    %1917 = vmatpush2.msra.mxu0 0.0
    %1918 = vmatprep.subr.mxu0 0.0
    %1919 = vmatpush2.msra.mxu0 0.0
    %1920 = vmatprep.subr.mxu0 0.0
    %1921 = vmatpush2.msra.mxu0 0.0
    %1922 = vmatprep.subr.mxu0 0.0
    %1923 = vmatpush2.msra.mxu0 0.0
    %1924 = vmatprep.subr.mxu0 0.0
    %1925 = vmatpush2.msra.mxu0 0.0
    %1926 = vmatprep.subr.mxu0 0.0
    %1927 = vmatpush2.msra.mxu0 0.0
    %1928 = vmatprep.subr.mxu0 0.0
    %1929 = vmatpush2.msra.mxu0 0.0
    %1930 = vmatprep.subr.mxu0 0.0
    %1931 = vmatpush2.msra.mxu0 0.0
    %1932 = vmatprep.subr.mxu0 0.0
    %1933 = vmatpush2.msra.mxu0 0.0
    %1934 = vmatprep.subr.mxu0 0.0
    %1935 = vmatpush2.msra.mxu0 0.0
    %1936 = vmatprep.subr.mxu0 0.0
    %1937 = vmatpush2.msra.mxu0 0.0
    %1938 = vmatprep.subr.mxu0 0.0
    %1939 = vmatpush2.msra.mxu0 0.0
    %1940 = vmatprep.subr.mxu0 0.0
    %1941 = vmatpush2.msra.mxu0 0.0
    %1942 = vmatprep.subr.mxu0 0.0
    %1943 = vmatpush2.msra.mxu0 0.0
    %1944 = vmatprep.subr.mxu0 0.0
    %1945 = vmatpush2.msra.mxu0 0.0
    %1946 = vmatprep.mubr.f32.mxu0 0.0
    %1947 = vmatmul.mubr.f32.gmra.mxu0 %v1870
    %v1948 = vpop.f32.mrf.mxu0
    %v1949 = vadd.f32 0.0, %v1948
    %v1950 = vpop.f32.mrf.mxu0
    %1951 = vmatprep.mubr.f32.mxu0 0.0
    %1952 = vmatmul.mubr.f32.gmra.mxu0 %v1873
    %v1953 = vpop.f32.mrf.mxu0
    %v1954 = vadd.f32 0.0, %v1953
    %v1955 = vpop.f32.mrf.mxu0
    %1956 = vmatprep.mubr.f32.mxu0 0.0
    %1957 = vmatmul.mubr.f32.gmra.mxu0 %v1876
    %v1958 = vpop.f32.mrf.mxu0
    %v1959 = vadd.f32 0.0, %v1958
    %v1960 = vpop.f32.mrf.mxu0
    %1961 = vdwg.mxu0
    %v1962 = vld [vmem:[%s2] sm:$0xff]
    %v1963 = vld [vmem:[%s2 + $0x8] sm:$0xff]
    %v1964 = vld [vmem:[%s2 + $0x10] sm:$0xf]
    %vm1965 = vcmp.ge.s32.totalorder %v1962, 8
    %vm1966 = vcmp.ge.s32.totalorder %v1963, 8
    %vm1967 = vcmp.ge.s32.totalorder %v1964, 8
    %v1968 = vsel %vm1965, -1e+09, 0.0
    %v1969 = vsel %vm1966, -1e+09, 0.0
    %v1970 = vsel %vm1967, -1e+09, 0.0
    %vm1971 = vcmp.eq.s32.totalorder %v1962, 0
    %vm1972 = vcmp.eq.s32.totalorder %v1963, 0
    %vm1973 = vcmp.eq.s32.totalorder %v1964, 0
    %s1974 = sld [smem:[#allocation8]]
    %v1975 = vstv %s1974
    %v1976 = vsel %vm1971, %v1975, 0.0
    %v1977 = vsel %vm1972, %v1975, 0.0
    %v1978 = vsel %vm1973, %v1975, 0.0
    %v1979 = vadd.f32 %v1968, %v1976
    %v1980 = vadd.f32 %v1969, %v1977
    %v1981 = vadd.f32 %v1970, %v1978
    %vm1982 = vcmp.eq.s32.totalorder %v1962, 1
    %vm1983 = vcmp.eq.s32.totalorder %v1963, 1
    %vm1984 = vcmp.eq.s32.totalorder %v1964, 1
    %s1985 = sld [smem:[#allocation8 + $0x1]]
    %v1986 = vstv %s1985
    %v1987 = vsel %vm1982, %v1986, 0.0
    %v1988 = vsel %vm1983, %v1986, 0.0
    %v1989 = vsel %vm1984, %v1986, 0.0
    %v1990 = vadd.f32 %v1979, %v1987
    %v1991 = vadd.f32 %v1980, %v1988
    %v1992 = vadd.f32 %v1981, %v1989
    %vm1993 = vcmp.eq.s32.totalorder %v1962, 2
    %vm1994 = vcmp.eq.s32.totalorder %v1963, 2
    %vm1995 = vcmp.eq.s32.totalorder %v1964, 2
    %s1996 = sld [smem:[#allocation8 + $0x2]]
    %v1997 = vstv %s1996
    %v1998 = vsel %vm1993, %v1997, 0.0
    %v1999 = vsel %vm1994, %v1997, 0.0
    %v2000 = vsel %vm1995, %v1997, 0.0
    %v2001 = vadd.f32 %v1990, %v1998
    %v2002 = vadd.f32 %v1991, %v1999
    %v2003 = vadd.f32 %v1992, %v2000
    %vm2004 = vcmp.eq.s32.totalorder %v1962, 3
    %vm2005 = vcmp.eq.s32.totalorder %v1963, 3
    %vm2006 = vcmp.eq.s32.totalorder %v1964, 3
    %s2007 = sld [smem:[#allocation8 + $0x3]]
    %v2008 = vstv %s2007
    %v2009 = vsel %vm2004, %v2008, 0.0
    %v2010 = vsel %vm2005, %v2008, 0.0
    %v2011 = vsel %vm2006, %v2008, 0.0
    %v2012 = vadd.f32 %v2001, %v2009
    %v2013 = vadd.f32 %v2002, %v2010
    %v2014 = vadd.f32 %v2003, %v2011
    %vm2015 = vcmp.eq.s32.totalorder %v1962, 4
    %vm2016 = vcmp.eq.s32.totalorder %v1963, 4
    %vm2017 = vcmp.eq.s32.totalorder %v1964, 4
    %s2018 = sld [smem:[#allocation8 + $0x4]]
    %v2019 = vstv %s2018
    %v2020 = vsel %vm2015, %v2019, 0.0
    %v2021 = vsel %vm2016, %v2019, 0.0
    %v2022 = vsel %vm2017, %v2019, 0.0
    %v2023 = vadd.f32 %v2012, %v2020
    %v2024 = vadd.f32 %v2013, %v2021
    %v2025 = vadd.f32 %v2014, %v2022
    %vm2026 = vcmp.eq.s32.totalorder %v1962, 5
    %vm2027 = vcmp.eq.s32.totalorder %v1963, 5
    %vm2028 = vcmp.eq.s32.totalorder %v1964, 5
    %s2029 = sld [smem:[#allocation8 + $0x5]]
    %v2030 = vstv %s2029
    %v2031 = vsel %vm2026, %v2030, 0.0
    %v2032 = vsel %vm2027, %v2030, 0.0
    %v2033 = vsel %vm2028, %v2030, 0.0
    %v2034 = vadd.f32 %v2023, %v2031
    %v2035 = vadd.f32 %v2024, %v2032
    %v2036 = vadd.f32 %v2025, %v2033
    %vm2037 = vcmp.eq.s32.totalorder %v1962, 6
    %vm2038 = vcmp.eq.s32.totalorder %v1963, 6
    %vm2039 = vcmp.eq.s32.totalorder %v1964, 6
    %s2040 = sld [smem:[#allocation8 + $0x6]]
    %v2041 = vstv %s2040
    %v2042 = vsel %vm2037, %v2041, 0.0
    %v2043 = vsel %vm2038, %v2041, 0.0
    %v2044 = vsel %vm2039, %v2041, 0.0
    %v2045 = vadd.f32 %v2034, %v2042
    %v2046 = vadd.f32 %v2035, %v2043
    %v2047 = vadd.f32 %v2036, %v2044
    %vm2048 = vcmp.eq.s32.totalorder %v1962, 7
    %vm2049 = vcmp.eq.s32.totalorder %v1963, 7
    %vm2050 = vcmp.eq.s32.totalorder %v1964, 7
    %s2051 = sld [smem:[#allocation8 + $0x7]]
    %v2052 = vstv %s2051
    %v2053 = vsel %vm2048, %v2052, 0.0
    %v2054 = vsel %vm2049, %v2052, 0.0
    %v2055 = vsel %vm2050, %v2052, 0.0
    %v2056 = vadd.f32 %v2045, %v2053
    %v2057 = vadd.f32 %v2046, %v2054
    %v2058 = vadd.f32 %v2047, %v2055
    %v2059 = vld [vmem:[#allocation5] sm:$0xff]
    %v2060 = vld [vmem:[#allocation5 + $0x8] sm:$0xff]
    %v2062 = vsel %vm860, %v1949, 0
    %v2065 = vsel %vm860, %v1954, 0
    %v2068 = vsel %vm860, %v1959, 0
    %2070 = vmatprep.subr.mxu0 0.0
    %2071 = vmatpush1.msra.mxu0 0.0
    %2072 = vmatprep.subr.mxu0 0.0
    %2073 = vmatpush1.msra.mxu0 0.0
    %2074 = vmatprep.subr.mxu0 0.0
    %2075 = vmatpush1.msra.mxu0 0.0
    %2076 = vmatprep.subr.mxu0 0.0
    %2077 = vmatpush1.msra.mxu0 0.0
    %2078 = vmatprep.subr.mxu0 0.0
    %2079 = vmatpush1.msra.mxu0 0.0
    %2080 = vmatprep.subr.mxu0 0.0
    %2081 = vmatpush1.msra.mxu0 0.0
    %2082 = vmatprep.subr.mxu0 0.0
    %2083 = vmatpush1.msra.mxu0 0.0
    %2084 = vmatprep.subr.mxu0 0.0
    %2085 = vmatpush1.msra.mxu0 0.0
    %2086 = vmatprep.subr.mxu0 0.0
    %2087 = vmatpush1.msra.mxu0 0.0
    %2088 = vmatprep.subr.mxu0 0.0
    %2089 = vmatpush1.msra.mxu0 0.0
    %2090 = vmatprep.subr.mxu0 0.0
    %2091 = vmatpush1.msra.mxu0 0.0
    %2092 = vmatprep.subr.mxu0 0.0
    %2093 = vmatpush1.msra.mxu0 0.0
    %2094 = vmatprep.subr.mxu0 0.0
    %2095 = vmatpush1.msra.mxu0 0.0
    %2096 = vmatprep.subr.mxu0 0.0
    %2097 = vmatpush1.msra.mxu0 0.0
    %2098 = vmatprep.subr.mxu0 0.0
    %2099 = vmatpush1.msra.mxu0 %v2060
    %2100 = vmatprep.subr.mxu0 0.0
    %2101 = vmatpush1.msra.mxu0 %v2059
    %2102 = vmatprep.subr.mxu0 0.0
    %2103 = vmatpush2.msra.mxu0 0.0
    %2104 = vmatprep.subr.mxu0 0.0
    %2105 = vmatpush2.msra.mxu0 0.0
    %2106 = vmatprep.subr.mxu0 0.0
    %2107 = vmatpush2.msra.mxu0 0.0
    %2108 = vmatprep.subr.mxu0 0.0
    %2109 = vmatpush2.msra.mxu0 0.0
    %2110 = vmatprep.subr.mxu0 0.0
    %2111 = vmatpush2.msra.mxu0 0.0
    %2112 = vmatprep.subr.mxu0 0.0
    %2113 = vmatpush2.msra.mxu0 0.0
    %2114 = vmatprep.subr.mxu0 0.0
    %2115 = vmatpush2.msra.mxu0 0.0
    %2116 = vmatprep.subr.mxu0 0.0
    %2117 = vmatpush2.msra.mxu0 0.0
    %2118 = vmatprep.subr.mxu0 0.0
    %2119 = vmatpush2.msra.mxu0 0.0
    %2120 = vmatprep.subr.mxu0 0.0
    %2121 = vmatpush2.msra.mxu0 0.0
    %2122 = vmatprep.subr.mxu0 0.0
    %2123 = vmatpush2.msra.mxu0 0.0
    %2124 = vmatprep.subr.mxu0 0.0
    %2125 = vmatpush2.msra.mxu0 0.0
    %2126 = vmatprep.subr.mxu0 0.0
    %2127 = vmatpush2.msra.mxu0 0.0
    %2128 = vmatprep.subr.mxu0 0.0
    %2129 = vmatpush2.msra.mxu0 0.0
    %2130 = vmatprep.subr.mxu0 0.0
    %2131 = vmatpush2.msra.mxu0 0.0
    %2132 = vmatprep.subr.mxu0 0.0
    %2133 = vmatpush2.msra.mxu0 0.0
    %2134 = vmatprep.mubr.f32.mxu0 0.0
    %2135 = vmatmul.mubr.f32.gmra.mxu0 %v2062
    %v2136 = vpop.f32.mrf.mxu0
    %v2137 = vadd.f32 0.0, %v2136
    %v2138 = vpop.f32.mrf.mxu0
    %2139 = vmatprep.mubr.f32.mxu0 0.0
    %2140 = vmatmul.mubr.f32.gmra.mxu0 %v2065
    %v2141 = vpop.f32.mrf.mxu0
    %v2142 = vadd.f32 0.0, %v2141
    %v2143 = vpop.f32.mrf.mxu0
    %2144 = vmatprep.mubr.f32.mxu0 0.0
    %2145 = vmatmul.mubr.f32.gmra.mxu0 %v2068
    %v2146 = vpop.f32.mrf.mxu0
    %v2147 = vadd.f32 0.0, %v2146
    %v2148 = vpop.f32.mrf.mxu0
    %2149 = vdwg.mxu0
    %2153 = vrot.lane.b32.xlu0 %v2137, 112
    %v2154 = vpop.permute.xlu0 %2153
    %2155 = vrot.lane.b32.xlu0 %v2142, 112
    %v2156 = vpop.permute.xlu0 %2155
    %2157 = vrot.lane.b32.xlu0 %v2147, 112
    %v2158 = vpop.permute.xlu0 %2157
    %v2159 = vsel %vm860, %v2137, 0
    %v2161 = vsel %vm860, %v2142, 0
    %v2163 = vsel %vm860, %v2147, 0
    %v2165 = vsel %vm860, %v2154, 0
    %v2167 = vsel %vm860, %v2156, 0
    %v2169 = vsel %vm860, %v2158, 0
    %2171 = vmatprep.subr.mxu0 0.0
    %2172 = vmatpush1.xpose.msra.mxu0 0.0
    %2173 = vmatprep.subr.mxu0 0.0
    %2174 = vmatpush1.xpose.msra.mxu0 0.0
    %2175 = vmatprep.subr.mxu0 0.0
    %2176 = vmatpush1.xpose.msra.mxu0 0.0
    %2177 = vmatprep.subr.mxu0 0.0
    %2178 = vmatpush1.xpose.msra.mxu0 0.0
    %2179 = vmatprep.subr.mxu0 0.0
    %2180 = vmatpush1.xpose.msra.mxu0 0.0
    %2181 = vmatprep.subr.mxu0 0.0
    %2182 = vmatpush1.xpose.msra.mxu0 0.0
    %2183 = vmatprep.subr.mxu0 0.0
    %2184 = vmatpush1.xpose.msra.mxu0 0.0
    %2185 = vmatprep.subr.mxu0 0.0
    %2186 = vmatpush1.xpose.msra.mxu0 0.0
    %2187 = vmatprep.subr.mxu0 0.0
    %2188 = vmatpush1.xpose.msra.mxu0 0.0
    %2189 = vmatprep.subr.mxu0 0.0
    %2190 = vmatpush1.xpose.msra.mxu0 0.0
    %2191 = vmatprep.subr.mxu0 0.0
    %2192 = vmatpush1.xpose.msra.mxu0 0.0
    %2193 = vmatprep.subr.mxu0 0.0
    %2194 = vmatpush1.xpose.msra.mxu0 0.0
    %2195 = vmatprep.subr.mxu0 0.0
    %2196 = vmatpush1.xpose.msra.mxu0 0.0
    %2197 = vmatprep.subr.mxu0 0.0
    %2198 = vmatpush1.xpose.msra.mxu0 %v2169
    %2199 = vmatprep.subr.mxu0 0.0
    %2200 = vmatpush1.xpose.msra.mxu0 %v2167
    %2201 = vmatprep.subr.mxu0 0.0
    %2202 = vmatpush1.xpose.msra.mxu0 %v2165
    %2203 = vmatprep.subr.mxu0 0.0
    %2204 = vmatpush2.xpose.msra.mxu0 0.0
    %2205 = vmatprep.subr.mxu0 0.0
    %2206 = vmatpush2.xpose.msra.mxu0 0.0
    %2207 = vmatprep.subr.mxu0 0.0
    %2208 = vmatpush2.xpose.msra.mxu0 0.0
    %2209 = vmatprep.subr.mxu0 0.0
    %2210 = vmatpush2.xpose.msra.mxu0 0.0
    %2211 = vmatprep.subr.mxu0 0.0
    %2212 = vmatpush2.xpose.msra.mxu0 0.0
    %2213 = vmatprep.subr.mxu0 0.0
    %2214 = vmatpush2.xpose.msra.mxu0 0.0
    %2215 = vmatprep.subr.mxu0 0.0
    %2216 = vmatpush2.xpose.msra.mxu0 0.0
    %2217 = vmatprep.subr.mxu0 0.0
    %2218 = vmatpush2.xpose.msra.mxu0 0.0
    %2219 = vmatprep.subr.mxu0 0.0
    %2220 = vmatpush2.xpose.msra.mxu0 0.0
    %2221 = vmatprep.subr.mxu0 0.0
    %2222 = vmatpush2.xpose.msra.mxu0 0.0
    %2223 = vmatprep.subr.mxu0 0.0
    %2224 = vmatpush2.xpose.msra.mxu0 0.0
    %2225 = vmatprep.subr.mxu0 0.0
    %2226 = vmatpush2.xpose.msra.mxu0 0.0
    %2227 = vmatprep.subr.mxu0 0.0
    %2228 = vmatpush2.xpose.msra.mxu0 0.0
    %2229 = vmatprep.subr.mxu0 0.0
    %2230 = vmatpush2.xpose.msra.mxu0 0.0
    %2231 = vmatprep.subr.mxu0 0.0
    %2232 = vmatpush2.xpose.msra.mxu0 0.0
    %2233 = vmatprep.subr.mxu0 0.0
    %2234 = vmatpush2.xpose.msra.mxu0 0.0
    %2235 = vmatprep.mubr.f32.mxu0 0.0
    %2236 = vmatmul.mubr.f32.gmra.mxu0 %v2159
    %v2237 = vpop.f32.mrf.mxu0
    %v2238 = vadd.f32 0.0, %v2237
    %v2239 = vpop.f32.mrf.mxu0
    %2240 = vmatprep.mubr.f32.mxu0 0.0
    %2241 = vmatmul.mubr.f32.gmra.mxu0 %v2161
    %v2242 = vpop.f32.mrf.mxu0
    %v2243 = vadd.f32 0.0, %v2242
    %v2244 = vpop.f32.mrf.mxu0
    %2245 = vmatprep.mubr.f32.mxu0 0.0
    %2246 = vmatmul.mubr.f32.gmra.mxu0 %v2163
    %v2247 = vpop.f32.mrf.mxu0
    %v2248 = vadd.f32 0.0, %v2247
    %v2249 = vpop.f32.mrf.mxu0
    %2250 = vdwg.mxu0
    %v2251 = vmul.f32 %v2238, 0.25
    %v2252 = vmul.f32 %v2243, 0.25
    %v2253 = vmul.f32 %v2248, 0.25
    %v2254 = vadd.f32 %v2251, %v2056
    %v2255 = vadd.f32 %v2252, %v2057
    %v2256 = vadd.f32 %v2253, %v2058
    %v2257 = vsel %vm304, %v2254, -inf
    %2258 = vmax.xlane.f32.xlu0 %v2257
    %v2259 = vpop.xlane.xlu0 %2258
    %v2260 = vsel %vm304, %v2255, -inf
    %2261 = vmax.xlane.f32.xlu0 %v2260
    %v2262 = vpop.xlane.xlu0 %2261
    %vm2263 = vcmask 158720
    %v2264 = vsel %vm2263, %v2256, -inf
    %2265 = vmax.xlane.f32.xlu0 %v2264
    %v2266 = vpop.xlane.xlu0 %2265
    %v2267 = vsub.f32 %v2254, %v2259
    %v2268 = vsub.f32 %v2255, %v2262
    %v2269 = vsub.f32 %v2256, %v2266
    %v2270 = vmul.f32 %v2267, 1.442695
    %v2271 = vpow.pop %v2270
    %v2272 = vmul.f32 %v2268, 1.442695
    %v2273 = vpow.pop %v2272
    %v2274 = vmul.f32 %v2269, 1.442695
    %v2275 = vpow.pop %v2274
    %v2276 = vsel %vm304, %v2271, 0.0
    %2277 = vadd.xlane.f32.xlu0 %v2276
    %v2278 = vpop.xlane.xlu0 %2277
    %v2279 = vsel %vm304, %v2273, 0.0
    %2280 = vadd.xlane.f32.xlu0 %v2279
    %v2281 = vpop.xlane.xlu0 %2280
    %v2282 = vsel %vm2263, %v2275, 0.0
    %2283 = vadd.xlane.f32.xlu0 %v2282
    %v2284 = vpop.xlane.xlu0 %2283
    %v2285 = vrcp.pop %v2278
    %v2286 = vrcp.pop %v2281
    %v2287 = vrcp.pop %v2284
    %v2288 = vmul.f32 %v2271, %v2285
    %v2289 = vmul.f32 %v2273, %v2286
    %v2290 = vmul.f32 %v2275, %v2287
    %2291 = vrot.lane.b32.xlu0 %v2137, 96
    %v2292 = vpop.permute.xlu0 %2291
    %2293 = vrot.lane.b32.xlu0 %v2142, 96
    %v2294 = vpop.permute.xlu0 %2293
    %2295 = vrot.lane.b32.xlu0 %v2147, 96
    %v2296 = vpop.permute.xlu0 %2295
    %v2300 = vsel %vm304, %v2288, 0
    %v2303 = vsel %vm304, %v2289, 0
    %v2306 = vsel %vm304, %v2290, 0
    %vm2308 = vcmask 1043456
    %v2309 = vsel %vm2308, %v2296, 0
    %2311 = vmatprep.subr.mxu0 0.0
    %2312 = vmatpush1.msra.mxu0 0.0
    %2313 = vmatprep.subr.mxu0 0.0
    %2314 = vmatpush1.msra.mxu0 0.0
    %2315 = vmatprep.subr.mxu0 0.0
    %2316 = vmatpush1.msra.mxu0 0.0
    %2317 = vmatprep.subr.mxu0 0.0
    %2318 = vmatpush1.msra.mxu0 0.0
    %2319 = vmatprep.subr.mxu0 0.0
    %2320 = vmatpush1.msra.mxu0 0.0
    %2321 = vmatprep.subr.mxu0 0.0
    %2322 = vmatpush1.msra.mxu0 0.0
    %2323 = vmatprep.subr.mxu0 0.0
    %2324 = vmatpush1.msra.mxu0 0.0
    %2325 = vmatprep.subr.mxu0 0.0
    %2326 = vmatpush1.msra.mxu0 0.0
    %2327 = vmatprep.subr.mxu0 0.0
    %2328 = vmatpush1.msra.mxu0 0.0
    %2329 = vmatprep.subr.mxu0 0.0
    %2330 = vmatpush1.msra.mxu0 0.0
    %2331 = vmatprep.subr.mxu0 0.0
    %2332 = vmatpush1.msra.mxu0 0.0
    %2333 = vmatprep.subr.mxu0 0.0
    %2334 = vmatpush1.msra.mxu0 0.0
    %2335 = vmatprep.subr.mxu0 0.0
    %2336 = vmatpush1.msra.mxu0 0.0
    %2337 = vmatprep.subr.mxu0 0.0
    %2338 = vmatpush1.msra.mxu0 %v2309
    %2339 = vmatprep.subr.mxu0 0.0
    %2340 = vmatpush1.msra.mxu0 %v2294
    %2341 = vmatprep.subr.mxu0 0.0
    %2342 = vmatpush1.msra.mxu0 %v2292
    %2343 = vmatprep.subr.mxu0 0.0
    %2344 = vmatpush2.msra.mxu0 0.0
    %2345 = vmatprep.subr.mxu0 0.0
    %2346 = vmatpush2.msra.mxu0 0.0
    %2347 = vmatprep.subr.mxu0 0.0
    %2348 = vmatpush2.msra.mxu0 0.0
    %2349 = vmatprep.subr.mxu0 0.0
    %2350 = vmatpush2.msra.mxu0 0.0
    %2351 = vmatprep.subr.mxu0 0.0
    %2352 = vmatpush2.msra.mxu0 0.0
    %2353 = vmatprep.subr.mxu0 0.0
    %2354 = vmatpush2.msra.mxu0 0.0
    %2355 = vmatprep.subr.mxu0 0.0
    %2356 = vmatpush2.msra.mxu0 0.0
    %2357 = vmatprep.subr.mxu0 0.0
    %2358 = vmatpush2.msra.mxu0 0.0
    %2359 = vmatprep.subr.mxu0 0.0
    %2360 = vmatpush2.msra.mxu0 0.0
    %2361 = vmatprep.subr.mxu0 0.0
    %2362 = vmatpush2.msra.mxu0 0.0
    %2363 = vmatprep.subr.mxu0 0.0
    %2364 = vmatpush2.msra.mxu0 0.0
    %2365 = vmatprep.subr.mxu0 0.0
    %2366 = vmatpush2.msra.mxu0 0.0
    %2367 = vmatprep.subr.mxu0 0.0
    %2368 = vmatpush2.msra.mxu0 0.0
    %2369 = vmatprep.subr.mxu0 0.0
    %2370 = vmatpush2.msra.mxu0 0.0
    %2371 = vmatprep.subr.mxu0 0.0
    %2372 = vmatpush2.msra.mxu0 0.0
    %2373 = vmatprep.subr.mxu0 0.0
    %2374 = vmatpush2.msra.mxu0 0.0
    %2375 = vmatprep.mubr.f32.mxu0 0.0
    %2376 = vmatmul.mubr.f32.gmra.mxu0 %v2300
    %v2377 = vpop.f32.mrf.mxu0
    %v2378 = vadd.f32 0.0, %v2377
    %v2379 = vpop.f32.mrf.mxu0
    %2380 = vmatprep.mubr.f32.mxu0 0.0
    %2381 = vmatmul.mubr.f32.gmra.mxu0 %v2303
    %v2382 = vpop.f32.mrf.mxu0
    %v2383 = vadd.f32 0.0, %v2382
    %v2384 = vpop.f32.mrf.mxu0
    %2385 = vmatprep.mubr.f32.mxu0 0.0
    %2386 = vmatmul.mubr.f32.gmra.mxu0 %v2306
    %v2387 = vpop.f32.mrf.mxu0
    %v2388 = vadd.f32 0.0, %v2387
    %v2389 = vpop.f32.mrf.mxu0
    %2390 = vdwg.mxu0
    %v2391 = vld [vmem:[#allocation7] sm:$0xff]
    %v2392 = vld [vmem:[#allocation7 + $0x8] sm:$0xff]
    %v2394 = vsel %vm860, %v2378, 0
    %v2397 = vsel %vm860, %v2383, 0
    %v2400 = vsel %vm860, %v2388, 0
    %2402 = vmatprep.subr.mxu0 0.0
    %2403 = vmatpush1.msra.mxu0 0.0
    %2404 = vmatprep.subr.mxu0 0.0
    %2405 = vmatpush1.msra.mxu0 0.0
    %2406 = vmatprep.subr.mxu0 0.0
    %2407 = vmatpush1.msra.mxu0 0.0
    %2408 = vmatprep.subr.mxu0 0.0
    %2409 = vmatpush1.msra.mxu0 0.0
    %2410 = vmatprep.subr.mxu0 0.0
    %2411 = vmatpush1.msra.mxu0 0.0
    %2412 = vmatprep.subr.mxu0 0.0
    %2413 = vmatpush1.msra.mxu0 0.0
    %2414 = vmatprep.subr.mxu0 0.0
    %2415 = vmatpush1.msra.mxu0 0.0
    %2416 = vmatprep.subr.mxu0 0.0
    %2417 = vmatpush1.msra.mxu0 0.0
    %2418 = vmatprep.subr.mxu0 0.0
    %2419 = vmatpush1.msra.mxu0 0.0
    %2420 = vmatprep.subr.mxu0 0.0
    %2421 = vmatpush1.msra.mxu0 0.0
    %2422 = vmatprep.subr.mxu0 0.0
    %2423 = vmatpush1.msra.mxu0 0.0
    %2424 = vmatprep.subr.mxu0 0.0
    %2425 = vmatpush1.msra.mxu0 0.0
    %2426 = vmatprep.subr.mxu0 0.0
    %2427 = vmatpush1.msra.mxu0 0.0
    %2428 = vmatprep.subr.mxu0 0.0
    %2429 = vmatpush1.msra.mxu0 0.0
    %2430 = vmatprep.subr.mxu0 0.0
    %2431 = vmatpush1.msra.mxu0 %v2392
    %2432 = vmatprep.subr.mxu0 0.0
    %2433 = vmatpush1.msra.mxu0 %v2391
    %2434 = vmatprep.subr.mxu0 0.0
    %2435 = vmatpush2.msra.mxu0 0.0
    %2436 = vmatprep.subr.mxu0 0.0
    %2437 = vmatpush2.msra.mxu0 0.0
    %2438 = vmatprep.subr.mxu0 0.0
    %2439 = vmatpush2.msra.mxu0 0.0
    %2440 = vmatprep.subr.mxu0 0.0
    %2441 = vmatpush2.msra.mxu0 0.0
    %2442 = vmatprep.subr.mxu0 0.0
    %2443 = vmatpush2.msra.mxu0 0.0
    %2444 = vmatprep.subr.mxu0 0.0
    %2445 = vmatpush2.msra.mxu0 0.0
    %2446 = vmatprep.subr.mxu0 0.0
    %2447 = vmatpush2.msra.mxu0 0.0
    %2448 = vmatprep.subr.mxu0 0.0
    %2449 = vmatpush2.msra.mxu0 0.0
    %2450 = vmatprep.subr.mxu0 0.0
    %2451 = vmatpush2.msra.mxu0 0.0
    %2452 = vmatprep.subr.mxu0 0.0
    %2453 = vmatpush2.msra.mxu0 0.0
    %2454 = vmatprep.subr.mxu0 0.0
    %2455 = vmatpush2.msra.mxu0 0.0
    %2456 = vmatprep.subr.mxu0 0.0
    %2457 = vmatpush2.msra.mxu0 0.0
    %2458 = vmatprep.subr.mxu0 0.0
    %2459 = vmatpush2.msra.mxu0 0.0
    %2460 = vmatprep.subr.mxu0 0.0
    %2461 = vmatpush2.msra.mxu0 0.0
    %2462 = vmatprep.subr.mxu0 0.0
    %2463 = vmatpush2.msra.mxu0 0.0
    %2464 = vmatprep.subr.mxu0 0.0
    %2465 = vmatpush2.msra.mxu0 0.0
    %2466 = vmatprep.mubr.f32.mxu0 0.0
    %2467 = vmatmul.mubr.f32.gmra.mxu0 %v2394
    %v2468 = vpop.f32.mrf.mxu0
    %v2469 = vadd.f32 0.0, %v2468
    %v2470 = vpop.f32.mrf.mxu0
    %2471 = vmatprep.mubr.f32.mxu0 0.0
    %2472 = vmatmul.mubr.f32.gmra.mxu0 %v2397
    %v2473 = vpop.f32.mrf.mxu0
    %v2474 = vadd.f32 0.0, %v2473
    %v2475 = vpop.f32.mrf.mxu0
    %2476 = vmatprep.mubr.f32.mxu0 0.0
    %2477 = vmatmul.mubr.f32.gmra.mxu0 %v2400
    %v2478 = vpop.f32.mrf.mxu0
    %v2479 = vadd.f32 0.0, %v2478
    %v2480 = vpop.f32.mrf.mxu0
    %2481 = vdwg.mxu0
    %v2482 = vadd.f32 %v1949, %v2469
    %v2483 = vadd.f32 %v1954, %v2474
    %v2484 = vadd.f32 %v1959, %v2479
    %v2485 = vmax.f32 %v2482, 0.0
    %v2486 = vmax.f32 %v2483, 0.0
    %v2487 = vmax.f32 %v2484, 0.0
    %s2488 = sld [smem:[#allocation8 + $0x8]]
    %v2489 = vstv %s2488
    %v2490 = vsel %vm1971, %v2489, 0.0
    %v2491 = vsel %vm1972, %v2489, 0.0
    %v2492 = vsel %vm1973, %v2489, 0.0
    %v2493 = vadd.f32 %v1968, %v2490
    %v2494 = vadd.f32 %v1969, %v2491
    %v2495 = vadd.f32 %v1970, %v2492
    %s2496 = sld [smem:[#allocation8 + $0x9]]
    %v2497 = vstv %s2496
    %v2498 = vsel %vm1982, %v2497, 0.0
    %v2499 = vsel %vm1983, %v2497, 0.0
    %v2500 = vsel %vm1984, %v2497, 0.0
    %v2501 = vadd.f32 %v2493, %v2498
    %v2502 = vadd.f32 %v2494, %v2499
    %v2503 = vadd.f32 %v2495, %v2500
    %s2504 = sld [smem:[#allocation8 + $0xa]]
    %v2505 = vstv %s2504
    %v2506 = vsel %vm1993, %v2505, 0.0
    %v2507 = vsel %vm1994, %v2505, 0.0
    %v2508 = vsel %vm1995, %v2505, 0.0
    %v2509 = vadd.f32 %v2501, %v2506
    %v2510 = vadd.f32 %v2502, %v2507
    %v2511 = vadd.f32 %v2503, %v2508
    %s2512 = sld [smem:[#allocation8 + $0xb]]
    %v2513 = vstv %s2512
    %v2514 = vsel %vm2004, %v2513, 0.0
    %v2515 = vsel %vm2005, %v2513, 0.0
    %v2516 = vsel %vm2006, %v2513, 0.0
    %v2517 = vadd.f32 %v2509, %v2514
    %v2518 = vadd.f32 %v2510, %v2515
    %v2519 = vadd.f32 %v2511, %v2516
    %s2520 = sld [smem:[#allocation8 + $0xc]]
    %v2521 = vstv %s2520
    %v2522 = vsel %vm2015, %v2521, 0.0
    %v2523 = vsel %vm2016, %v2521, 0.0
    %v2524 = vsel %vm2017, %v2521, 0.0
    %v2525 = vadd.f32 %v2517, %v2522
    %v2526 = vadd.f32 %v2518, %v2523
    %v2527 = vadd.f32 %v2519, %v2524
    %s2528 = sld [smem:[#allocation8 + $0xd]]
    %v2529 = vstv %s2528
    %v2530 = vsel %vm2026, %v2529, 0.0
    %v2531 = vsel %vm2027, %v2529, 0.0
    %v2532 = vsel %vm2028, %v2529, 0.0
    %v2533 = vadd.f32 %v2525, %v2530
    %v2534 = vadd.f32 %v2526, %v2531
    %v2535 = vadd.f32 %v2527, %v2532
    %s2536 = sld [smem:[#allocation8 + $0xe]]
    %v2537 = vstv %s2536
    %v2538 = vsel %vm2037, %v2537, 0.0
    %v2539 = vsel %vm2038, %v2537, 0.0
    %v2540 = vsel %vm2039, %v2537, 0.0
    %v2541 = vadd.f32 %v2533, %v2538
    %v2542 = vadd.f32 %v2534, %v2539
    %v2543 = vadd.f32 %v2535, %v2540
    %s2544 = sld [smem:[#allocation8 + $0xf]]
    %v2545 = vstv %s2544
    %v2546 = vsel %vm2048, %v2545, 0.0
    %v2547 = vsel %vm2049, %v2545, 0.0
    %v2548 = vsel %vm2050, %v2545, 0.0
    %v2549 = vadd.f32 %v2541, %v2546
    %v2550 = vadd.f32 %v2542, %v2547
    %v2551 = vadd.f32 %v2543, %v2548
    %s2552 = scalar_lea.vmem [#allocation5], 16
    %v2553 = vld [vmem:[%s2552] sm:$0xff]
    %v2554 = vld [vmem:[%s2552 + $0x8] sm:$0xff]
    %v2556 = vsel %vm860, %v2485, 0
    %v2559 = vsel %vm860, %v2486, 0
    %v2562 = vsel %vm860, %v2487, 0
    %2564 = vmatprep.subr.mxu0 0.0
    %2565 = vmatpush1.msra.mxu0 0.0
    %2566 = vmatprep.subr.mxu0 0.0
    %2567 = vmatpush1.msra.mxu0 0.0
    %2568 = vmatprep.subr.mxu0 0.0
    %2569 = vmatpush1.msra.mxu0 0.0
    %2570 = vmatprep.subr.mxu0 0.0
    %2571 = vmatpush1.msra.mxu0 0.0
    %2572 = vmatprep.subr.mxu0 0.0
    %2573 = vmatpush1.msra.mxu0 0.0
    %2574 = vmatprep.subr.mxu0 0.0
    %2575 = vmatpush1.msra.mxu0 0.0
    %2576 = vmatprep.subr.mxu0 0.0
    %2577 = vmatpush1.msra.mxu0 0.0
    %2578 = vmatprep.subr.mxu0 0.0
    %2579 = vmatpush1.msra.mxu0 0.0
    %2580 = vmatprep.subr.mxu0 0.0
    %2581 = vmatpush1.msra.mxu0 0.0
    %2582 = vmatprep.subr.mxu0 0.0
    %2583 = vmatpush1.msra.mxu0 0.0
    %2584 = vmatprep.subr.mxu0 0.0
    %2585 = vmatpush1.msra.mxu0 0.0
    %2586 = vmatprep.subr.mxu0 0.0
    %2587 = vmatpush1.msra.mxu0 0.0
    %2588 = vmatprep.subr.mxu0 0.0
    %2589 = vmatpush1.msra.mxu0 0.0
    %2590 = vmatprep.subr.mxu0 0.0
    %2591 = vmatpush1.msra.mxu0 0.0
    %2592 = vmatprep.subr.mxu0 0.0
    %2593 = vmatpush1.msra.mxu0 %v2554
    %2594 = vmatprep.subr.mxu0 0.0
    %2595 = vmatpush1.msra.mxu0 %v2553
    %2596 = vmatprep.subr.mxu0 0.0
    %2597 = vmatpush2.msra.mxu0 0.0
    %2598 = vmatprep.subr.mxu0 0.0
    %2599 = vmatpush2.msra.mxu0 0.0
    %2600 = vmatprep.subr.mxu0 0.0
    %2601 = vmatpush2.msra.mxu0 0.0
    %2602 = vmatprep.subr.mxu0 0.0
    %2603 = vmatpush2.msra.mxu0 0.0
    %2604 = vmatprep.subr.mxu0 0.0
    %2605 = vmatpush2.msra.mxu0 0.0
    %2606 = vmatprep.subr.mxu0 0.0
    %2607 = vmatpush2.msra.mxu0 0.0
    %2608 = vmatprep.subr.mxu0 0.0
    %2609 = vmatpush2.msra.mxu0 0.0
    %2610 = vmatprep.subr.mxu0 0.0
    %2611 = vmatpush2.msra.mxu0 0.0
    %2612 = vmatprep.subr.mxu0 0.0
    %2613 = vmatpush2.msra.mxu0 0.0
    %2614 = vmatprep.subr.mxu0 0.0
    %2615 = vmatpush2.msra.mxu0 0.0
    %2616 = vmatprep.subr.mxu0 0.0
    %2617 = vmatpush2.msra.mxu0 0.0
    %2618 = vmatprep.subr.mxu0 0.0
    %2619 = vmatpush2.msra.mxu0 0.0
    %2620 = vmatprep.subr.mxu0 0.0
    %2621 = vmatpush2.msra.mxu0 0.0
    %2622 = vmatprep.subr.mxu0 0.0
    %2623 = vmatpush2.msra.mxu0 0.0
    %2624 = vmatprep.subr.mxu0 0.0
    %2625 = vmatpush2.msra.mxu0 0.0
    %2626 = vmatprep.subr.mxu0 0.0
    %2627 = vmatpush2.msra.mxu0 0.0
    %2628 = vmatprep.mubr.f32.mxu0 0.0
    %2629 = vmatmul.mubr.f32.gmra.mxu0 %v2556
    %v2630 = vpop.f32.mrf.mxu0
    %v2631 = vadd.f32 0.0, %v2630
    %v2632 = vpop.f32.mrf.mxu0
    %2633 = vmatprep.mubr.f32.mxu0 0.0
    %2634 = vmatmul.mubr.f32.gmra.mxu0 %v2559
    %v2635 = vpop.f32.mrf.mxu0
    %v2636 = vadd.f32 0.0, %v2635
    %v2637 = vpop.f32.mrf.mxu0
    %2638 = vmatprep.mubr.f32.mxu0 0.0
    %2639 = vmatmul.mubr.f32.gmra.mxu0 %v2562
    %v2640 = vpop.f32.mrf.mxu0
    %v2641 = vadd.f32 0.0, %v2640
    %v2642 = vpop.f32.mrf.mxu0
    %2643 = vdwg.mxu0
    %2647 = vrot.lane.b32.xlu0 %v2631, 112
    %v2648 = vpop.permute.xlu0 %2647
    %2649 = vrot.lane.b32.xlu0 %v2636, 112
    %v2650 = vpop.permute.xlu0 %2649
    %2651 = vrot.lane.b32.xlu0 %v2641, 112
    %v2652 = vpop.permute.xlu0 %2651
    %v2653 = vsel %vm860, %v2631, 0
    %v2655 = vsel %vm860, %v2636, 0
    %v2657 = vsel %vm860, %v2641, 0
    %v2659 = vsel %vm860, %v2648, 0
    %v2661 = vsel %vm860, %v2650, 0
    %v2663 = vsel %vm860, %v2652, 0
    %2665 = vmatprep.subr.mxu0 0.0
    %2666 = vmatpush1.xpose.msra.mxu0 0.0
    %2667 = vmatprep.subr.mxu0 0.0
    %2668 = vmatpush1.xpose.msra.mxu0 0.0
    %2669 = vmatprep.subr.mxu0 0.0
    %2670 = vmatpush1.xpose.msra.mxu0 0.0
    %2671 = vmatprep.subr.mxu0 0.0
    %2672 = vmatpush1.xpose.msra.mxu0 0.0
    %2673 = vmatprep.subr.mxu0 0.0
    %2674 = vmatpush1.xpose.msra.mxu0 0.0
    %2675 = vmatprep.subr.mxu0 0.0
    %2676 = vmatpush1.xpose.msra.mxu0 0.0
    %2677 = vmatprep.subr.mxu0 0.0
    %2678 = vmatpush1.xpose.msra.mxu0 0.0
    %2679 = vmatprep.subr.mxu0 0.0
    %2680 = vmatpush1.xpose.msra.mxu0 0.0
    %2681 = vmatprep.subr.mxu0 0.0
    %2682 = vmatpush1.xpose.msra.mxu0 0.0
    %2683 = vmatprep.subr.mxu0 0.0
    %2684 = vmatpush1.xpose.msra.mxu0 0.0
    %2685 = vmatprep.subr.mxu0 0.0
    %2686 = vmatpush1.xpose.msra.mxu0 0.0
    %2687 = vmatprep.subr.mxu0 0.0
    %2688 = vmatpush1.xpose.msra.mxu0 0.0
    %2689 = vmatprep.subr.mxu0 0.0
    %2690 = vmatpush1.xpose.msra.mxu0 0.0
    %2691 = vmatprep.subr.mxu0 0.0
    %2692 = vmatpush1.xpose.msra.mxu0 %v2663
    %2693 = vmatprep.subr.mxu0 0.0
    %2694 = vmatpush1.xpose.msra.mxu0 %v2661
    %2695 = vmatprep.subr.mxu0 0.0
    %2696 = vmatpush1.xpose.msra.mxu0 %v2659
    %2697 = vmatprep.subr.mxu0 0.0
    %2698 = vmatpush2.xpose.msra.mxu0 0.0
    %2699 = vmatprep.subr.mxu0 0.0
    %2700 = vmatpush2.xpose.msra.mxu0 0.0
    %2701 = vmatprep.subr.mxu0 0.0
    %2702 = vmatpush2.xpose.msra.mxu0 0.0
    %2703 = vmatprep.subr.mxu0 0.0
    %2704 = vmatpush2.xpose.msra.mxu0 0.0
    %2705 = vmatprep.subr.mxu0 0.0
    %2706 = vmatpush2.xpose.msra.mxu0 0.0
    %2707 = vmatprep.subr.mxu0 0.0
    %2708 = vmatpush2.xpose.msra.mxu0 0.0
    %2709 = vmatprep.subr.mxu0 0.0
    %2710 = vmatpush2.xpose.msra.mxu0 0.0
    %2711 = vmatprep.subr.mxu0 0.0
    %2712 = vmatpush2.xpose.msra.mxu0 0.0
    %2713 = vmatprep.subr.mxu0 0.0
    %2714 = vmatpush2.xpose.msra.mxu0 0.0
    %2715 = vmatprep.subr.mxu0 0.0
    %2716 = vmatpush2.xpose.msra.mxu0 0.0
    %2717 = vmatprep.subr.mxu0 0.0
    %2718 = vmatpush2.xpose.msra.mxu0 0.0
    %2719 = vmatprep.subr.mxu0 0.0
    %2720 = vmatpush2.xpose.msra.mxu0 0.0
    %2721 = vmatprep.subr.mxu0 0.0
    %2722 = vmatpush2.xpose.msra.mxu0 0.0
    %2723 = vmatprep.subr.mxu0 0.0
    %2724 = vmatpush2.xpose.msra.mxu0 0.0
    %2725 = vmatprep.subr.mxu0 0.0
    %2726 = vmatpush2.xpose.msra.mxu0 0.0
    %2727 = vmatprep.subr.mxu0 0.0
    %2728 = vmatpush2.xpose.msra.mxu0 0.0
    %2729 = vmatprep.mubr.f32.mxu0 0.0
    %2730 = vmatmul.mubr.f32.gmra.mxu0 %v2653
    %v2731 = vpop.f32.mrf.mxu0
    %v2732 = vadd.f32 0.0, %v2731
    %v2733 = vpop.f32.mrf.mxu0
    %2734 = vmatprep.mubr.f32.mxu0 0.0
    %2735 = vmatmul.mubr.f32.gmra.mxu0 %v2655
    %v2736 = vpop.f32.mrf.mxu0
    %v2737 = vadd.f32 0.0, %v2736
    %v2738 = vpop.f32.mrf.mxu0
    %2739 = vmatprep.mubr.f32.mxu0 0.0
    %2740 = vmatmul.mubr.f32.gmra.mxu0 %v2657
    %v2741 = vpop.f32.mrf.mxu0
    %v2742 = vadd.f32 0.0, %v2741
    %v2743 = vpop.f32.mrf.mxu0
    %2744 = vdwg.mxu0
    %v2745 = vmul.f32 %v2732, 0.25
    %v2746 = vmul.f32 %v2737, 0.25
    %v2747 = vmul.f32 %v2742, 0.25
    %v2748 = vadd.f32 %v2745, %v2549
    %v2749 = vadd.f32 %v2746, %v2550
    %v2750 = vadd.f32 %v2747, %v2551
    %v2751 = vsel %vm304, %v2748, -inf
    %2752 = vmax.xlane.f32.xlu0 %v2751
    %v2753 = vpop.xlane.xlu0 %2752
    %v2754 = vsel %vm304, %v2749, -inf
    %2755 = vmax.xlane.f32.xlu0 %v2754
    %v2756 = vpop.xlane.xlu0 %2755
    %v2757 = vsel %vm2263, %v2750, -inf
    %2758 = vmax.xlane.f32.xlu0 %v2757
    %v2759 = vpop.xlane.xlu0 %2758
    %v2760 = vsub.f32 %v2748, %v2753
    %v2761 = vsub.f32 %v2749, %v2756
    %v2762 = vsub.f32 %v2750, %v2759
    %v2763 = vmul.f32 %v2760, 1.442695
    %v2764 = vpow.pop %v2763
    %v2765 = vmul.f32 %v2761, 1.442695
    %v2766 = vpow.pop %v2765
    %v2767 = vmul.f32 %v2762, 1.442695
    %v2768 = vpow.pop %v2767
    %v2769 = vsel %vm304, %v2764, 0.0
    %2770 = vadd.xlane.f32.xlu0 %v2769
    %v2771 = vpop.xlane.xlu0 %2770
    %v2772 = vsel %vm304, %v2766, 0.0
    %2773 = vadd.xlane.f32.xlu0 %v2772
    %v2774 = vpop.xlane.xlu0 %2773
    %v2775 = vsel %vm2263, %v2768, 0.0
    %2776 = vadd.xlane.f32.xlu0 %v2775
    %v2777 = vpop.xlane.xlu0 %2776
    %v2778 = vrcp.pop %v2771
    %v2779 = vrcp.pop %v2774
    %v2780 = vrcp.pop %v2777
    %v2781 = vmul.f32 %v2764, %v2778
    %v2782 = vmul.f32 %v2766, %v2779
    %v2783 = vmul.f32 %v2768, %v2780
    %2784 = vrot.lane.b32.xlu0 %v2631, 96
    %v2785 = vpop.permute.xlu0 %2784
    %2786 = vrot.lane.b32.xlu0 %v2636, 96
    %v2787 = vpop.permute.xlu0 %2786
    %2788 = vrot.lane.b32.xlu0 %v2641, 96
    %v2789 = vpop.permute.xlu0 %2788
    %v2793 = vsel %vm304, %v2781, 0
    %v2796 = vsel %vm304, %v2782, 0
    %v2799 = vsel %vm304, %v2783, 0
    %v2801 = vsel %vm2308, %v2789, 0
    %2803 = vmatprep.subr.mxu0 0.0
    %2804 = vmatpush1.msra.mxu0 0.0
    %2805 = vmatprep.subr.mxu0 0.0
    %2806 = vmatpush1.msra.mxu0 0.0
    %2807 = vmatprep.subr.mxu0 0.0
    %2808 = vmatpush1.msra.mxu0 0.0
    %2809 = vmatprep.subr.mxu0 0.0
    %2810 = vmatpush1.msra.mxu0 0.0
    %2811 = vmatprep.subr.mxu0 0.0
    %2812 = vmatpush1.msra.mxu0 0.0
    %2813 = vmatprep.subr.mxu0 0.0
    %2814 = vmatpush1.msra.mxu0 0.0
    %2815 = vmatprep.subr.mxu0 0.0
    %2816 = vmatpush1.msra.mxu0 0.0
    %2817 = vmatprep.subr.mxu0 0.0
    %2818 = vmatpush1.msra.mxu0 0.0
    %2819 = vmatprep.subr.mxu0 0.0
    %2820 = vmatpush1.msra.mxu0 0.0
    %2821 = vmatprep.subr.mxu0 0.0
    %2822 = vmatpush1.msra.mxu0 0.0
    %2823 = vmatprep.subr.mxu0 0.0
    %2824 = vmatpush1.msra.mxu0 0.0
    %2825 = vmatprep.subr.mxu0 0.0
    %2826 = vmatpush1.msra.mxu0 0.0
    %2827 = vmatprep.subr.mxu0 0.0
    %2828 = vmatpush1.msra.mxu0 0.0
    %2829 = vmatprep.subr.mxu0 0.0
    %2830 = vmatpush1.msra.mxu0 %v2801
    %2831 = vmatprep.subr.mxu0 0.0
    %2832 = vmatpush1.msra.mxu0 %v2787
    %2833 = vmatprep.subr.mxu0 0.0
    %2834 = vmatpush1.msra.mxu0 %v2785
    %2835 = vmatprep.subr.mxu0 0.0
    %2836 = vmatpush2.msra.mxu0 0.0
    %2837 = vmatprep.subr.mxu0 0.0
    %2838 = vmatpush2.msra.mxu0 0.0
    %2839 = vmatprep.subr.mxu0 0.0
    %2840 = vmatpush2.msra.mxu0 0.0
    %2841 = vmatprep.subr.mxu0 0.0
    %2842 = vmatpush2.msra.mxu0 0.0
    %2843 = vmatprep.subr.mxu0 0.0
    %2844 = vmatpush2.msra.mxu0 0.0
    %2845 = vmatprep.subr.mxu0 0.0
    %2846 = vmatpush2.msra.mxu0 0.0
    %2847 = vmatprep.subr.mxu0 0.0
    %2848 = vmatpush2.msra.mxu0 0.0
    %2849 = vmatprep.subr.mxu0 0.0
    %2850 = vmatpush2.msra.mxu0 0.0
    %2851 = vmatprep.subr.mxu0 0.0
    %2852 = vmatpush2.msra.mxu0 0.0
    %2853 = vmatprep.subr.mxu0 0.0
    %2854 = vmatpush2.msra.mxu0 0.0
    %2855 = vmatprep.subr.mxu0 0.0
    %2856 = vmatpush2.msra.mxu0 0.0
    %2857 = vmatprep.subr.mxu0 0.0
    %2858 = vmatpush2.msra.mxu0 0.0
    %2859 = vmatprep.subr.mxu0 0.0
    %2860 = vmatpush2.msra.mxu0 0.0
    %2861 = vmatprep.subr.mxu0 0.0
    %2862 = vmatpush2.msra.mxu0 0.0
    %2863 = vmatprep.subr.mxu0 0.0
    %2864 = vmatpush2.msra.mxu0 0.0
    %2865 = vmatprep.subr.mxu0 0.0
    %2866 = vmatpush2.msra.mxu0 0.0
    %2867 = vmatprep.mubr.f32.mxu0 0.0
    %2868 = vmatmul.mubr.f32.gmra.mxu0 %v2793
    %v2869 = vpop.f32.mrf.mxu0
    %v2870 = vadd.f32 0.0, %v2869
    %v2871 = vpop.f32.mrf.mxu0
    %2872 = vmatprep.mubr.f32.mxu0 0.0
    %2873 = vmatmul.mubr.f32.gmra.mxu0 %v2796
    %v2874 = vpop.f32.mrf.mxu0
    %v2875 = vadd.f32 0.0, %v2874
    %v2876 = vpop.f32.mrf.mxu0
    %2877 = vmatprep.mubr.f32.mxu0 0.0
    %2878 = vmatmul.mubr.f32.gmra.mxu0 %v2799
    %v2879 = vpop.f32.mrf.mxu0
    %v2880 = vadd.f32 0.0, %v2879
    %v2881 = vpop.f32.mrf.mxu0
    %2882 = vdwg.mxu0
    %s2883 = scalar_lea.vmem [#allocation7], 16
    %v2884 = vld [vmem:[%s2883] sm:$0xff]
    %v2885 = vld [vmem:[%s2883 + $0x8] sm:$0xff]
    %v2887 = vsel %vm860, %v2870, 0
    %v2890 = vsel %vm860, %v2875, 0
    %v2893 = vsel %vm860, %v2880, 0
    %2895 = vmatprep.subr.mxu0 0.0
    %2896 = vmatpush1.msra.mxu0 0.0
    %2897 = vmatprep.subr.mxu0 0.0
    %2898 = vmatpush1.msra.mxu0 0.0
    %2899 = vmatprep.subr.mxu0 0.0
    %2900 = vmatpush1.msra.mxu0 0.0
    %2901 = vmatprep.subr.mxu0 0.0
    %2902 = vmatpush1.msra.mxu0 0.0
    %2903 = vmatprep.subr.mxu0 0.0
    %2904 = vmatpush1.msra.mxu0 0.0
    %2905 = vmatprep.subr.mxu0 0.0
    %2906 = vmatpush1.msra.mxu0 0.0
    %2907 = vmatprep.subr.mxu0 0.0
    %2908 = vmatpush1.msra.mxu0 0.0
    %2909 = vmatprep.subr.mxu0 0.0
    %2910 = vmatpush1.msra.mxu0 0.0
    %2911 = vmatprep.subr.mxu0 0.0
    %2912 = vmatpush1.msra.mxu0 0.0
    %2913 = vmatprep.subr.mxu0 0.0
    %2914 = vmatpush1.msra.mxu0 0.0
    %2915 = vmatprep.subr.mxu0 0.0
    %2916 = vmatpush1.msra.mxu0 0.0
    %2917 = vmatprep.subr.mxu0 0.0
    %2918 = vmatpush1.msra.mxu0 0.0
    %2919 = vmatprep.subr.mxu0 0.0
    %2920 = vmatpush1.msra.mxu0 0.0
    %2921 = vmatprep.subr.mxu0 0.0
    %2922 = vmatpush1.msra.mxu0 0.0
    %2923 = vmatprep.subr.mxu0 0.0
    %2924 = vmatpush1.msra.mxu0 %v2885
    %2925 = vmatprep.subr.mxu0 0.0
    %2926 = vmatpush1.msra.mxu0 %v2884
    %2927 = vmatprep.subr.mxu0 0.0
    %2928 = vmatpush2.msra.mxu0 0.0
    %2929 = vmatprep.subr.mxu0 0.0
    %2930 = vmatpush2.msra.mxu0 0.0
    %2931 = vmatprep.subr.mxu0 0.0
    %2932 = vmatpush2.msra.mxu0 0.0
    %2933 = vmatprep.subr.mxu0 0.0
    %2934 = vmatpush2.msra.mxu0 0.0
    %2935 = vmatprep.subr.mxu0 0.0
    %2936 = vmatpush2.msra.mxu0 0.0
    %2937 = vmatprep.subr.mxu0 0.0
    %2938 = vmatpush2.msra.mxu0 0.0
    %2939 = vmatprep.subr.mxu0 0.0
    %2940 = vmatpush2.msra.mxu0 0.0
    %2941 = vmatprep.subr.mxu0 0.0
    %2942 = vmatpush2.msra.mxu0 0.0
    %2943 = vmatprep.subr.mxu0 0.0
    %2944 = vmatpush2.msra.mxu0 0.0
    %2945 = vmatprep.subr.mxu0 0.0
    %2946 = vmatpush2.msra.mxu0 0.0
    %2947 = vmatprep.subr.mxu0 0.0
    %2948 = vmatpush2.msra.mxu0 0.0
    %2949 = vmatprep.subr.mxu0 0.0
    %2950 = vmatpush2.msra.mxu0 0.0
    %2951 = vmatprep.subr.mxu0 0.0
    %2952 = vmatpush2.msra.mxu0 0.0
    %2953 = vmatprep.subr.mxu0 0.0
    %2954 = vmatpush2.msra.mxu0 0.0
    %2955 = vmatprep.subr.mxu0 0.0
    %2956 = vmatpush2.msra.mxu0 0.0
    %2957 = vmatprep.subr.mxu0 0.0
    %2958 = vmatpush2.msra.mxu0 0.0
    %2959 = vmatprep.mubr.f32.mxu0 0.0
    %2960 = vmatmul.mubr.f32.gmra.mxu0 %v2887
    %v2961 = vpop.f32.mrf.mxu0
    %v2962 = vadd.f32 0.0, %v2961
    %v2963 = vpop.f32.mrf.mxu0
    %2964 = vmatprep.mubr.f32.mxu0 0.0
    %2965 = vmatmul.mubr.f32.gmra.mxu0 %v2890
    %v2966 = vpop.f32.mrf.mxu0
    %v2967 = vadd.f32 0.0, %v2966
    %v2968 = vpop.f32.mrf.mxu0
    %2969 = vmatprep.mubr.f32.mxu0 0.0
    %2970 = vmatmul.mubr.f32.gmra.mxu0 %v2893
    %v2971 = vpop.f32.mrf.mxu0
    %v2972 = vadd.f32 0.0, %v2971
    %v2973 = vpop.f32.mrf.mxu0
    %2974 = vdwg.mxu0
    %v2975 = vadd.f32 %v2485, %v2962
    %v2976 = vadd.f32 %v2486, %v2967
    %v2977 = vadd.f32 %v2487, %v2972
    %v2978 = vmax.f32 %v2975, 0.0
    %v2979 = vmax.f32 %v2976, 0.0
    %v2980 = vmax.f32 %v2977, 0.0
    %s2981 = sld [smem:[#allocation8 + $0x10]]
    %v2982 = vstv %s2981
    %v2983 = vsel %vm1971, %v2982, 0.0
    %v2984 = vsel %vm1972, %v2982, 0.0
    %v2985 = vsel %vm1973, %v2982, 0.0
    %v2986 = vadd.f32 %v1968, %v2983
    %v2987 = vadd.f32 %v1969, %v2984
    %v2988 = vadd.f32 %v1970, %v2985
    %s2989 = sld [smem:[#allocation8 + $0x11]]
    %v2990 = vstv %s2989
    %v2991 = vsel %vm1982, %v2990, 0.0
    %v2992 = vsel %vm1983, %v2990, 0.0
    %v2993 = vsel %vm1984, %v2990, 0.0
    %v2994 = vadd.f32 %v2986, %v2991
    %v2995 = vadd.f32 %v2987, %v2992
    %v2996 = vadd.f32 %v2988, %v2993
    %s2997 = sld [smem:[#allocation8 + $0x12]]
    %v2998 = vstv %s2997
    %v2999 = vsel %vm1993, %v2998, 0.0
    %v3000 = vsel %vm1994, %v2998, 0.0
    %v3001 = vsel %vm1995, %v2998, 0.0
    %v3002 = vadd.f32 %v2994, %v2999
    %v3003 = vadd.f32 %v2995, %v3000
    %v3004 = vadd.f32 %v2996, %v3001
    %s3005 = sld [smem:[#allocation8 + $0x13]]
    %v3006 = vstv %s3005
    %v3007 = vsel %vm2004, %v3006, 0.0
    %v3008 = vsel %vm2005, %v3006, 0.0
    %v3009 = vsel %vm2006, %v3006, 0.0
    %v3010 = vadd.f32 %v3002, %v3007
    %v3011 = vadd.f32 %v3003, %v3008
    %v3012 = vadd.f32 %v3004, %v3009
    %s3013 = sld [smem:[#allocation8 + $0x14]]
    %v3014 = vstv %s3013
    %v3015 = vsel %vm2015, %v3014, 0.0
    %v3016 = vsel %vm2016, %v3014, 0.0
    %v3017 = vsel %vm2017, %v3014, 0.0
    %v3018 = vadd.f32 %v3010, %v3015
    %v3019 = vadd.f32 %v3011, %v3016
    %v3020 = vadd.f32 %v3012, %v3017
    %s3021 = sld [smem:[#allocation8 + $0x15]]
    %v3022 = vstv %s3021
    %v3023 = vsel %vm2026, %v3022, 0.0
    %v3024 = vsel %vm2027, %v3022, 0.0
    %v3025 = vsel %vm2028, %v3022, 0.0
    %v3026 = vadd.f32 %v3018, %v3023
    %v3027 = vadd.f32 %v3019, %v3024
    %v3028 = vadd.f32 %v3020, %v3025
    %s3029 = sld [smem:[#allocation8 + $0x16]]
    %v3030 = vstv %s3029
    %v3031 = vsel %vm2037, %v3030, 0.0
    %v3032 = vsel %vm2038, %v3030, 0.0
    %v3033 = vsel %vm2039, %v3030, 0.0
    %v3034 = vadd.f32 %v3026, %v3031
    %v3035 = vadd.f32 %v3027, %v3032
    %v3036 = vadd.f32 %v3028, %v3033
    %s3037 = sld [smem:[#allocation8 + $0x17]]
    %v3038 = vstv %s3037
    %v3039 = vsel %vm2048, %v3038, 0.0
    %v3040 = vsel %vm2049, %v3038, 0.0
    %v3041 = vsel %vm2050, %v3038, 0.0
    %v3042 = vadd.f32 %v3034, %v3039
    %v3043 = vadd.f32 %v3035, %v3040
    %v3044 = vadd.f32 %v3036, %v3041
    %s3045 = scalar_lea.vmem [#allocation5], 32
    %v3046 = vld [vmem:[%s3045] sm:$0xff]
    %v3047 = vld [vmem:[%s3045 + $0x8] sm:$0xff]
    %v3049 = vsel %vm860, %v2978, 0
    %v3052 = vsel %vm860, %v2979, 0
    %v3055 = vsel %vm860, %v2980, 0
    %3057 = vmatprep.subr.mxu0 0.0
    %3058 = vmatpush1.msra.mxu0 0.0
    %3059 = vmatprep.subr.mxu0 0.0
    %3060 = vmatpush1.msra.mxu0 0.0
    %3061 = vmatprep.subr.mxu0 0.0
    %3062 = vmatpush1.msra.mxu0 0.0
    %3063 = vmatprep.subr.mxu0 0.0
    %3064 = vmatpush1.msra.mxu0 0.0
    %3065 = vmatprep.subr.mxu0 0.0
    %3066 = vmatpush1.msra.mxu0 0.0
    %3067 = vmatprep.subr.mxu0 0.0
    %3068 = vmatpush1.msra.mxu0 0.0
    %3069 = vmatprep.subr.mxu0 0.0
    %3070 = vmatpush1.msra.mxu0 0.0
    %3071 = vmatprep.subr.mxu0 0.0
    %3072 = vmatpush1.msra.mxu0 0.0
    %3073 = vmatprep.subr.mxu0 0.0
    %3074 = vmatpush1.msra.mxu0 0.0
    %3075 = vmatprep.subr.mxu0 0.0
    %3076 = vmatpush1.msra.mxu0 0.0
    %3077 = vmatprep.subr.mxu0 0.0
    %3078 = vmatpush1.msra.mxu0 0.0
    %3079 = vmatprep.subr.mxu0 0.0
    %3080 = vmatpush1.msra.mxu0 0.0
    %3081 = vmatprep.subr.mxu0 0.0
    %3082 = vmatpush1.msra.mxu0 0.0
    %3083 = vmatprep.subr.mxu0 0.0
    %3084 = vmatpush1.msra.mxu0 0.0
    %3085 = vmatprep.subr.mxu0 0.0
    %3086 = vmatpush1.msra.mxu0 %v3047
    %3087 = vmatprep.subr.mxu0 0.0
    %3088 = vmatpush1.msra.mxu0 %v3046
    %3089 = vmatprep.subr.mxu0 0.0
    %3090 = vmatpush2.msra.mxu0 0.0
    %3091 = vmatprep.subr.mxu0 0.0
    %3092 = vmatpush2.msra.mxu0 0.0
    %3093 = vmatprep.subr.mxu0 0.0
    %3094 = vmatpush2.msra.mxu0 0.0
    %3095 = vmatprep.subr.mxu0 0.0
    %3096 = vmatpush2.msra.mxu0 0.0
    %3097 = vmatprep.subr.mxu0 0.0
    %3098 = vmatpush2.msra.mxu0 0.0
    %3099 = vmatprep.subr.mxu0 0.0
    %3100 = vmatpush2.msra.mxu0 0.0
    %3101 = vmatprep.subr.mxu0 0.0
    %3102 = vmatpush2.msra.mxu0 0.0
    %3103 = vmatprep.subr.mxu0 0.0
    %3104 = vmatpush2.msra.mxu0 0.0
    %3105 = vmatprep.subr.mxu0 0.0
    %3106 = vmatpush2.msra.mxu0 0.0
    %3107 = vmatprep.subr.mxu0 0.0
    %3108 = vmatpush2.msra.mxu0 0.0
    %3109 = vmatprep.subr.mxu0 0.0
    %3110 = vmatpush2.msra.mxu0 0.0
    %3111 = vmatprep.subr.mxu0 0.0
    %3112 = vmatpush2.msra.mxu0 0.0
    %3113 = vmatprep.subr.mxu0 0.0
    %3114 = vmatpush2.msra.mxu0 0.0
    %3115 = vmatprep.subr.mxu0 0.0
    %3116 = vmatpush2.msra.mxu0 0.0
    %3117 = vmatprep.subr.mxu0 0.0
    %3118 = vmatpush2.msra.mxu0 0.0
    %3119 = vmatprep.subr.mxu0 0.0
    %3120 = vmatpush2.msra.mxu0 0.0
    %3121 = vmatprep.mubr.f32.mxu0 0.0
    %3122 = vmatmul.mubr.f32.gmra.mxu0 %v3049
    %v3123 = vpop.f32.mrf.mxu0
    %v3124 = vadd.f32 0.0, %v3123
    %v3125 = vpop.f32.mrf.mxu0
    %3126 = vmatprep.mubr.f32.mxu0 0.0
    %3127 = vmatmul.mubr.f32.gmra.mxu0 %v3052
    %v3128 = vpop.f32.mrf.mxu0
    %v3129 = vadd.f32 0.0, %v3128
    %v3130 = vpop.f32.mrf.mxu0
    %3131 = vmatprep.mubr.f32.mxu0 0.0
    %3132 = vmatmul.mubr.f32.gmra.mxu0 %v3055
    %v3133 = vpop.f32.mrf.mxu0
    %v3134 = vadd.f32 0.0, %v3133
    %v3135 = vpop.f32.mrf.mxu0
    %3136 = vdwg.mxu0
    %3140 = vrot.lane.b32.xlu0 %v3124, 112
    %v3141 = vpop.permute.xlu0 %3140
    %3142 = vrot.lane.b32.xlu0 %v3129, 112
    %v3143 = vpop.permute.xlu0 %3142
    %3144 = vrot.lane.b32.xlu0 %v3134, 112
    %v3145 = vpop.permute.xlu0 %3144
    %v3146 = vsel %vm860, %v3124, 0
    %v3148 = vsel %vm860, %v3129, 0
    %v3150 = vsel %vm860, %v3134, 0
    %v3152 = vsel %vm860, %v3141, 0
    %v3154 = vsel %vm860, %v3143, 0
    %v3156 = vsel %vm860, %v3145, 0
    %3158 = vmatprep.subr.mxu0 0.0
    %3159 = vmatpush1.xpose.msra.mxu0 0.0
    %3160 = vmatprep.subr.mxu0 0.0
    %3161 = vmatpush1.xpose.msra.mxu0 0.0
    %3162 = vmatprep.subr.mxu0 0.0
    %3163 = vmatpush1.xpose.msra.mxu0 0.0
    %3164 = vmatprep.subr.mxu0 0.0
    %3165 = vmatpush1.xpose.msra.mxu0 0.0
    %3166 = vmatprep.subr.mxu0 0.0
    %3167 = vmatpush1.xpose.msra.mxu0 0.0
    %3168 = vmatprep.subr.mxu0 0.0
    %3169 = vmatpush1.xpose.msra.mxu0 0.0
    %3170 = vmatprep.subr.mxu0 0.0
    %3171 = vmatpush1.xpose.msra.mxu0 0.0
    %3172 = vmatprep.subr.mxu0 0.0
    %3173 = vmatpush1.xpose.msra.mxu0 0.0
    %3174 = vmatprep.subr.mxu0 0.0
    %3175 = vmatpush1.xpose.msra.mxu0 0.0
    %3176 = vmatprep.subr.mxu0 0.0
    %3177 = vmatpush1.xpose.msra.mxu0 0.0
    %3178 = vmatprep.subr.mxu0 0.0
    %3179 = vmatpush1.xpose.msra.mxu0 0.0
    %3180 = vmatprep.subr.mxu0 0.0
    %3181 = vmatpush1.xpose.msra.mxu0 0.0
    %3182 = vmatprep.subr.mxu0 0.0
    %3183 = vmatpush1.xpose.msra.mxu0 0.0
    %3184 = vmatprep.subr.mxu0 0.0
    %3185 = vmatpush1.xpose.msra.mxu0 %v3156
    %3186 = vmatprep.subr.mxu0 0.0
    %3187 = vmatpush1.xpose.msra.mxu0 %v3154
    %3188 = vmatprep.subr.mxu0 0.0
    %3189 = vmatpush1.xpose.msra.mxu0 %v3152
    %3190 = vmatprep.subr.mxu0 0.0
    %3191 = vmatpush2.xpose.msra.mxu0 0.0
    %3192 = vmatprep.subr.mxu0 0.0
    %3193 = vmatpush2.xpose.msra.mxu0 0.0
    %3194 = vmatprep.subr.mxu0 0.0
    %3195 = vmatpush2.xpose.msra.mxu0 0.0
    %3196 = vmatprep.subr.mxu0 0.0
    %3197 = vmatpush2.xpose.msra.mxu0 0.0
    %3198 = vmatprep.subr.mxu0 0.0
    %3199 = vmatpush2.xpose.msra.mxu0 0.0
    %3200 = vmatprep.subr.mxu0 0.0
    %3201 = vmatpush2.xpose.msra.mxu0 0.0
    %3202 = vmatprep.subr.mxu0 0.0
    %3203 = vmatpush2.xpose.msra.mxu0 0.0
    %3204 = vmatprep.subr.mxu0 0.0
    %3205 = vmatpush2.xpose.msra.mxu0 0.0
    %3206 = vmatprep.subr.mxu0 0.0
    %3207 = vmatpush2.xpose.msra.mxu0 0.0
    %3208 = vmatprep.subr.mxu0 0.0
    %3209 = vmatpush2.xpose.msra.mxu0 0.0
    %3210 = vmatprep.subr.mxu0 0.0
    %3211 = vmatpush2.xpose.msra.mxu0 0.0
    %3212 = vmatprep.subr.mxu0 0.0
    %3213 = vmatpush2.xpose.msra.mxu0 0.0
    %3214 = vmatprep.subr.mxu0 0.0
    %3215 = vmatpush2.xpose.msra.mxu0 0.0
    %3216 = vmatprep.subr.mxu0 0.0
    %3217 = vmatpush2.xpose.msra.mxu0 0.0
    %3218 = vmatprep.subr.mxu0 0.0
    %3219 = vmatpush2.xpose.msra.mxu0 0.0
    %3220 = vmatprep.subr.mxu0 0.0
    %3221 = vmatpush2.xpose.msra.mxu0 0.0
    %3222 = vmatprep.mubr.f32.mxu0 0.0
    %3223 = vmatmul.mubr.f32.gmra.mxu0 %v3146
    %v3224 = vpop.f32.mrf.mxu0
    %v3225 = vadd.f32 0.0, %v3224
    %v3226 = vpop.f32.mrf.mxu0
    %3227 = vmatprep.mubr.f32.mxu0 0.0
    %3228 = vmatmul.mubr.f32.gmra.mxu0 %v3148
    %v3229 = vpop.f32.mrf.mxu0
    %v3230 = vadd.f32 0.0, %v3229
    %v3231 = vpop.f32.mrf.mxu0
    %3232 = vmatprep.mubr.f32.mxu0 0.0
    %3233 = vmatmul.mubr.f32.gmra.mxu0 %v3150
    %v3234 = vpop.f32.mrf.mxu0
    %v3235 = vadd.f32 0.0, %v3234
    %v3236 = vpop.f32.mrf.mxu0
    %3237 = vdwg.mxu0
    %v3238 = vmul.f32 %v3225, 0.25
    %v3239 = vmul.f32 %v3230, 0.25
    %v3240 = vmul.f32 %v3235, 0.25
    %v3241 = vadd.f32 %v3238, %v3042
    %v3242 = vadd.f32 %v3239, %v3043
    %v3243 = vadd.f32 %v3240, %v3044
    %v3244 = vsel %vm304, %v3241, -inf
    %3245 = vmax.xlane.f32.xlu0 %v3244
    %v3246 = vpop.xlane.xlu0 %3245
    %v3247 = vsel %vm304, %v3242, -inf
    %3248 = vmax.xlane.f32.xlu0 %v3247
    %v3249 = vpop.xlane.xlu0 %3248
    %v3250 = vsel %vm2263, %v3243, -inf
    %3251 = vmax.xlane.f32.xlu0 %v3250
    %v3252 = vpop.xlane.xlu0 %3251
    %v3253 = vsub.f32 %v3241, %v3246
    %v3254 = vsub.f32 %v3242, %v3249
    %v3255 = vsub.f32 %v3243, %v3252
    %v3256 = vmul.f32 %v3253, 1.442695
    %v3257 = vpow.pop %v3256
    %v3258 = vmul.f32 %v3254, 1.442695
    %v3259 = vpow.pop %v3258
    %v3260 = vmul.f32 %v3255, 1.442695
    %v3261 = vpow.pop %v3260
    %v3262 = vsel %vm304, %v3257, 0.0
    %3263 = vadd.xlane.f32.xlu0 %v3262
    %v3264 = vpop.xlane.xlu0 %3263
    %v3265 = vsel %vm304, %v3259, 0.0
    %3266 = vadd.xlane.f32.xlu0 %v3265
    %v3267 = vpop.xlane.xlu0 %3266
    %v3268 = vsel %vm2263, %v3261, 0.0
    %3269 = vadd.xlane.f32.xlu0 %v3268
    %v3270 = vpop.xlane.xlu0 %3269
    %v3271 = vrcp.pop %v3264
    %v3272 = vrcp.pop %v3267
    %v3273 = vrcp.pop %v3270
    %v3274 = vmul.f32 %v3257, %v3271
    %v3275 = vmul.f32 %v3259, %v3272
    %v3276 = vmul.f32 %v3261, %v3273
    %3277 = vrot.lane.b32.xlu0 %v3124, 96
    %v3278 = vpop.permute.xlu0 %3277
    %3279 = vrot.lane.b32.xlu0 %v3129, 96
    %v3280 = vpop.permute.xlu0 %3279
    %3281 = vrot.lane.b32.xlu0 %v3134, 96
    %v3282 = vpop.permute.xlu0 %3281
    %v3286 = vsel %vm304, %v3274, 0
    %v3289 = vsel %vm304, %v3275, 0
    %v3292 = vsel %vm304, %v3276, 0
    %v3294 = vsel %vm2308, %v3282, 0
    %3296 = vmatprep.subr.mxu0 0.0
    %3297 = vmatpush1.msra.mxu0 0.0
    %3298 = vmatprep.subr.mxu0 0.0
    %3299 = vmatpush1.msra.mxu0 0.0
    %3300 = vmatprep.subr.mxu0 0.0
    %3301 = vmatpush1.msra.mxu0 0.0
    %3302 = vmatprep.subr.mxu0 0.0
    %3303 = vmatpush1.msra.mxu0 0.0
    %3304 = vmatprep.subr.mxu0 0.0
    %3305 = vmatpush1.msra.mxu0 0.0
    %3306 = vmatprep.subr.mxu0 0.0
    %3307 = vmatpush1.msra.mxu0 0.0
    %3308 = vmatprep.subr.mxu0 0.0
    %3309 = vmatpush1.msra.mxu0 0.0
    %3310 = vmatprep.subr.mxu0 0.0
    %3311 = vmatpush1.msra.mxu0 0.0
    %3312 = vmatprep.subr.mxu0 0.0
    %3313 = vmatpush1.msra.mxu0 0.0
    %3314 = vmatprep.subr.mxu0 0.0
    %3315 = vmatpush1.msra.mxu0 0.0
    %3316 = vmatprep.subr.mxu0 0.0
    %3317 = vmatpush1.msra.mxu0 0.0
    %3318 = vmatprep.subr.mxu0 0.0
    %3319 = vmatpush1.msra.mxu0 0.0
    %3320 = vmatprep.subr.mxu0 0.0
    %3321 = vmatpush1.msra.mxu0 0.0
    %3322 = vmatprep.subr.mxu0 0.0
    %3323 = vmatpush1.msra.mxu0 %v3294
    %3324 = vmatprep.subr.mxu0 0.0
    %3325 = vmatpush1.msra.mxu0 %v3280
    %3326 = vmatprep.subr.mxu0 0.0
    %3327 = vmatpush1.msra.mxu0 %v3278
    %3328 = vmatprep.subr.mxu0 0.0
    %3329 = vmatpush2.msra.mxu0 0.0
    %3330 = vmatprep.subr.mxu0 0.0
    %3331 = vmatpush2.msra.mxu0 0.0
    %3332 = vmatprep.subr.mxu0 0.0
    %3333 = vmatpush2.msra.mxu0 0.0
    %3334 = vmatprep.subr.mxu0 0.0
    %3335 = vmatpush2.msra.mxu0 0.0
    %3336 = vmatprep.subr.mxu0 0.0
    %3337 = vmatpush2.msra.mxu0 0.0
    %3338 = vmatprep.subr.mxu0 0.0
    %3339 = vmatpush2.msra.mxu0 0.0
    %3340 = vmatprep.subr.mxu0 0.0
    %3341 = vmatpush2.msra.mxu0 0.0
    %3342 = vmatprep.subr.mxu0 0.0
    %3343 = vmatpush2.msra.mxu0 0.0
    %3344 = vmatprep.subr.mxu0 0.0
    %3345 = vmatpush2.msra.mxu0 0.0
    %3346 = vmatprep.subr.mxu0 0.0
    %3347 = vmatpush2.msra.mxu0 0.0
    %3348 = vmatprep.subr.mxu0 0.0
    %3349 = vmatpush2.msra.mxu0 0.0
    %3350 = vmatprep.subr.mxu0 0.0
    %3351 = vmatpush2.msra.mxu0 0.0
    %3352 = vmatprep.subr.mxu0 0.0
    %3353 = vmatpush2.msra.mxu0 0.0
    %3354 = vmatprep.subr.mxu0 0.0
    %3355 = vmatpush2.msra.mxu0 0.0
    %3356 = vmatprep.subr.mxu0 0.0
    %3357 = vmatpush2.msra.mxu0 0.0
    %3358 = vmatprep.subr.mxu0 0.0
    %3359 = vmatpush2.msra.mxu0 0.0
    %3360 = vmatprep.mubr.f32.mxu0 0.0
    %3361 = vmatmul.mubr.f32.gmra.mxu0 %v3286
    %v3362 = vpop.f32.mrf.mxu0
    %v3363 = vadd.f32 0.0, %v3362
    %v3364 = vpop.f32.mrf.mxu0
    %3365 = vmatprep.mubr.f32.mxu0 0.0
    %3366 = vmatmul.mubr.f32.gmra.mxu0 %v3289
    %v3367 = vpop.f32.mrf.mxu0
    %v3368 = vadd.f32 0.0, %v3367
    %v3369 = vpop.f32.mrf.mxu0
    %3370 = vmatprep.mubr.f32.mxu0 0.0
    %3371 = vmatmul.mubr.f32.gmra.mxu0 %v3292
    %v3372 = vpop.f32.mrf.mxu0
    %v3373 = vadd.f32 0.0, %v3372
    %v3374 = vpop.f32.mrf.mxu0
    %3375 = vdwg.mxu0
    %s3376 = scalar_lea.vmem [#allocation7], 32
    %v3377 = vld [vmem:[%s3376] sm:$0xff]
    %v3378 = vld [vmem:[%s3376 + $0x8] sm:$0xff]
    %v3380 = vsel %vm860, %v3363, 0
    %v3383 = vsel %vm860, %v3368, 0
    %v3386 = vsel %vm860, %v3373, 0
    %3388 = vmatprep.subr.mxu0 0.0
    %3389 = vmatpush1.msra.mxu0 0.0
    %3390 = vmatprep.subr.mxu0 0.0
    %3391 = vmatpush1.msra.mxu0 0.0
    %3392 = vmatprep.subr.mxu0 0.0
    %3393 = vmatpush1.msra.mxu0 0.0
    %3394 = vmatprep.subr.mxu0 0.0
    %3395 = vmatpush1.msra.mxu0 0.0
    %3396 = vmatprep.subr.mxu0 0.0
    %3397 = vmatpush1.msra.mxu0 0.0
    %3398 = vmatprep.subr.mxu0 0.0
    %3399 = vmatpush1.msra.mxu0 0.0
    %3400 = vmatprep.subr.mxu0 0.0
    %3401 = vmatpush1.msra.mxu0 0.0
    %3402 = vmatprep.subr.mxu0 0.0
    %3403 = vmatpush1.msra.mxu0 0.0
    %3404 = vmatprep.subr.mxu0 0.0
    %3405 = vmatpush1.msra.mxu0 0.0
    %3406 = vmatprep.subr.mxu0 0.0
    %3407 = vmatpush1.msra.mxu0 0.0
    %3408 = vmatprep.subr.mxu0 0.0
    %3409 = vmatpush1.msra.mxu0 0.0
    %3410 = vmatprep.subr.mxu0 0.0
    %3411 = vmatpush1.msra.mxu0 0.0
    %3412 = vmatprep.subr.mxu0 0.0
    %3413 = vmatpush1.msra.mxu0 0.0
    %3414 = vmatprep.subr.mxu0 0.0
    %3415 = vmatpush1.msra.mxu0 0.0
    %3416 = vmatprep.subr.mxu0 0.0
    %3417 = vmatpush1.msra.mxu0 %v3378
    %3418 = vmatprep.subr.mxu0 0.0
    %3419 = vmatpush1.msra.mxu0 %v3377
    %3420 = vmatprep.subr.mxu0 0.0
    %3421 = vmatpush2.msra.mxu0 0.0
    %3422 = vmatprep.subr.mxu0 0.0
    %3423 = vmatpush2.msra.mxu0 0.0
    %3424 = vmatprep.subr.mxu0 0.0
    %3425 = vmatpush2.msra.mxu0 0.0
    %3426 = vmatprep.subr.mxu0 0.0
    %3427 = vmatpush2.msra.mxu0 0.0
    %3428 = vmatprep.subr.mxu0 0.0
    %3429 = vmatpush2.msra.mxu0 0.0
    %3430 = vmatprep.subr.mxu0 0.0
    %3431 = vmatpush2.msra.mxu0 0.0
    %3432 = vmatprep.subr.mxu0 0.0
    %3433 = vmatpush2.msra.mxu0 0.0
    %3434 = vmatprep.subr.mxu0 0.0
    %3435 = vmatpush2.msra.mxu0 0.0
    %3436 = vmatprep.subr.mxu0 0.0
    %3437 = vmatpush2.msra.mxu0 0.0
    %3438 = vmatprep.subr.mxu0 0.0
    %3439 = vmatpush2.msra.mxu0 0.0
    %3440 = vmatprep.subr.mxu0 0.0
    %3441 = vmatpush2.msra.mxu0 0.0
    %3442 = vmatprep.subr.mxu0 0.0
    %3443 = vmatpush2.msra.mxu0 0.0
    %3444 = vmatprep.subr.mxu0 0.0
    %3445 = vmatpush2.msra.mxu0 0.0
    %3446 = vmatprep.subr.mxu0 0.0
    %3447 = vmatpush2.msra.mxu0 0.0
    %3448 = vmatprep.subr.mxu0 0.0
    %3449 = vmatpush2.msra.mxu0 0.0
    %3450 = vmatprep.subr.mxu0 0.0
    %3451 = vmatpush2.msra.mxu0 0.0
    %3452 = vmatprep.mubr.f32.mxu0 0.0
    %3453 = vmatmul.mubr.f32.gmra.mxu0 %v3380
    %v3454 = vpop.f32.mrf.mxu0
    %v3455 = vadd.f32 0.0, %v3454
    %v3456 = vpop.f32.mrf.mxu0
    %3457 = vmatprep.mubr.f32.mxu0 0.0
    %3458 = vmatmul.mubr.f32.gmra.mxu0 %v3383
    %v3459 = vpop.f32.mrf.mxu0
    %v3460 = vadd.f32 0.0, %v3459
    %v3461 = vpop.f32.mrf.mxu0
    %3462 = vmatprep.mubr.f32.mxu0 0.0
    %3463 = vmatmul.mubr.f32.gmra.mxu0 %v3386
    %v3464 = vpop.f32.mrf.mxu0
    %v3465 = vadd.f32 0.0, %v3464
    %v3466 = vpop.f32.mrf.mxu0
    %3467 = vdwg.mxu0
    %v3468 = vadd.f32 %v2978, %v3455
    %v3469 = vadd.f32 %v2979, %v3460
    %v3470 = vadd.f32 %v2980, %v3465
    %v3471 = vmax.f32 %v3468, 0.0
    %v3472 = vmax.f32 %v3469, 0.0
    %v3473 = vmax.f32 %v3470, 0.0
    %v3475 = vrot.slane %v3471, 2
    %3476 = vrot.lane.b32.xlu0 %v3475, 16
    %v3477 = vpop.permute.xlu0 %3476
    %v3479 = vrot.slane %v3471, 4
    %3480 = vrot.lane.b32.xlu0 %v3479, 32
    %v3481 = vpop.permute.xlu0 %3480
    %v3483 = vrot.slane %v3471, 6
    %3484 = vrot.lane.b32.xlu0 %v3483, 48
    %v3485 = vpop.permute.xlu0 %3484
    %3488 = vrot.lane.b32.xlu0 %v3472, 64
    %v3489 = vpop.permute.xlu0 %3488
    %v3491 = vrot.slane %v3472, 2
    %3492 = vrot.lane.b32.xlu0 %v3491, 80
    %v3493 = vpop.permute.xlu0 %3492
    %v3495 = vrot.slane %v3472, 4
    %3496 = vrot.lane.b32.xlu0 %v3495, 96
    %v3497 = vpop.permute.xlu0 %3496
    %v3499 = vrot.slane %v3472, 6
    %3500 = vrot.lane.b32.xlu0 %v3499, 112
    %v3501 = vpop.permute.xlu0 %3500
    %v3504 = vrot.slane %v3473, 2
    %3505 = vrot.lane.b32.xlu0 %v3504, 16
    %v3506 = vpop.permute.xlu0 %3505
    %v3508 = vsel %vm860, %v3471, %v3477
    %v3509 = vsel %vm862, %v3508, %v3481
    %v3510 = vsel %vm864, %v3509, %v3485
    %v3511 = vsel %vm866, %v3510, %v3489
    %v3512 = vsel %vm868, %v3511, %v3493
    %v3513 = vsel %vm870, %v3512, %v3497
    %v3514 = vsel %vm872, %v3513, %v3501
    %v3515 = vsel %vm860, %v3473, %v3506
    %v3516 = vld [vmem:[%s13] sm:$0xff]
    %v3517 = vld [vmem:[%s13 + $0x8] sm:$0xff]
    %v3518 = vld [vmem:[%s13 + $0x10] sm:$0xff]
    %v3519 = vld [vmem:[%s13 + $0x18] sm:$0xff]
    %v3520 = vld [vmem:[%s13 + $0x20] sm:$0xff]
    %v3521 = vld [vmem:[%s13 + $0x28] sm:$0xff]
    %v3522 = vld [vmem:[%s13 + $0x30] sm:$0xff]
    %v3523 = vld [vmem:[%s13 + $0x38] sm:$0xff]
    %v3524 = vld [vmem:[%s13 + $0x40] sm:$0xff]
    %v3525 = vld [vmem:[%s13 + $0x48] sm:$0xff]
    %v3526 = vld [vmem:[%s13 + $0x50] sm:$0xff]
    %v3527 = vld [vmem:[%s13 + $0x58] sm:$0xff]
    %v3528 = vld [vmem:[%s13 + $0x60] sm:$0xff]
    %v3529 = vld [vmem:[%s13 + $0x68] sm:$0xff]
    %v3530 = vld [vmem:[%s13 + $0x70] sm:$0xff]
    %v3531 = vld [vmem:[%s13 + $0x78] sm:$0xff]
    %v3532 = vld [vmem:[%s13 + $0x80] sm:$0xff]
    %v3533 = vld [vmem:[%s13 + $0x88] sm:$0xff]
    %v3534 = vld [vmem:[%s13 + $0x90] sm:$0xff]
    %v3535 = vld [vmem:[%s13 + $0x98] sm:$0xff]
    %v3536 = vld [vmem:[%s13 + $0xa0] sm:$0xff]
    %v3537 = vld [vmem:[%s13 + $0xa8] sm:$0xff]
    %v3538 = vld [vmem:[%s13 + $0xb0] sm:$0xff]
    %v3539 = vld [vmem:[%s13 + $0xb8] sm:$0xff]
    %v3540 = vld [vmem:[%s13 + $0xc0] sm:$0xff]
    %v3541 = vld [vmem:[%s13 + $0xc8] sm:$0xff]
    %v3542 = vld [vmem:[%s13 + $0xd0] sm:$0xff]
    %v3543 = vld [vmem:[%s13 + $0xd8] sm:$0xff]
    %v3544 = vld [vmem:[%s13 + $0xe0] sm:$0xff]
    %v3545 = vld [vmem:[%s13 + $0xe8] sm:$0xff]
    %v3546 = vld [vmem:[%s13 + $0xf0] sm:$0xff]
    %v3547 = vld [vmem:[%s13 + $0xf8] sm:$0xff]
    %v3548 = vld [vmem:[%s13 + $0x100] sm:$0xff]
    %v3549 = vld [vmem:[%s13 + $0x108] sm:$0xff]
    %v3550 = vld [vmem:[%s13 + $0x110] sm:$0xff]
    %v3551 = vld [vmem:[%s13 + $0x118] sm:$0xff]
    %v3552 = vld [vmem:[#allocation9] sm:$0x1]
    %v3554 = vlaneseq
    %v3555 = vshrl.u32 %v3554, 7
    %v3556 = vsub.s32 0, %v3555
    %v3557 = vrot.slane %v3552, %v3556
    %v3560 = vsel %vm862, %v3515, 0
    %3562 = vmatprep.subr.mxu0 0.0
    %3563 = vmatpush1.msra.mxu0 %v3531
    %3564 = vmatprep.subr.mxu0 0.0
    %3565 = vmatpush1.msra.mxu0 %v3530
    %3566 = vmatprep.subr.mxu0 0.0
    %3567 = vmatpush1.msra.mxu0 %v3529
    %3568 = vmatprep.subr.mxu0 0.0
    %3569 = vmatpush1.msra.mxu0 %v3528
    %3570 = vmatprep.subr.mxu0 0.0
    %3571 = vmatpush1.msra.mxu0 %v3527
    %3572 = vmatprep.subr.mxu0 0.0
    %3573 = vmatpush1.msra.mxu0 %v3526
    %3574 = vmatprep.subr.mxu0 0.0
    %3575 = vmatpush1.msra.mxu0 %v3525
    %3576 = vmatprep.subr.mxu0 0.0
    %3577 = vmatpush1.msra.mxu0 %v3524
    %3578 = vmatprep.subr.mxu0 0.0
    %3579 = vmatpush1.msra.mxu0 %v3523
    %3580 = vmatprep.subr.mxu0 0.0
    %3581 = vmatpush1.msra.mxu0 %v3522
    %3582 = vmatprep.subr.mxu0 0.0
    %3583 = vmatpush1.msra.mxu0 %v3521
    %3584 = vmatprep.subr.mxu0 0.0
    %3585 = vmatpush1.msra.mxu0 %v3520
    %3586 = vmatprep.subr.mxu0 0.0
    %3587 = vmatpush1.msra.mxu0 %v3519
    %3588 = vmatprep.subr.mxu0 0.0
    %3589 = vmatpush1.msra.mxu0 %v3518
    %3590 = vmatprep.subr.mxu0 0.0
    %3591 = vmatpush1.msra.mxu0 %v3517
    %3592 = vmatprep.subr.mxu0 0.0
    %3593 = vmatpush1.msra.mxu0 %v3516
    %3594 = vmatprep.subr.mxu0 0.0
    %3595 = vmatpush2.msra.mxu0 %v3547
    %3596 = vmatprep.subr.mxu0 0.0
    %3597 = vmatpush2.msra.mxu0 %v3546
    %3598 = vmatprep.subr.mxu0 0.0
    %3599 = vmatpush2.msra.mxu0 %v3545
    %3600 = vmatprep.subr.mxu0 0.0
    %3601 = vmatpush2.msra.mxu0 %v3544
    %3602 = vmatprep.subr.mxu0 0.0
    %3603 = vmatpush2.msra.mxu0 %v3543
    %3604 = vmatprep.subr.mxu0 0.0
    %3605 = vmatpush2.msra.mxu0 %v3542
    %3606 = vmatprep.subr.mxu0 0.0
    %3607 = vmatpush2.msra.mxu0 %v3541
    %3608 = vmatprep.subr.mxu0 0.0
    %3609 = vmatpush2.msra.mxu0 %v3540
    %3610 = vmatprep.subr.mxu0 0.0
    %3611 = vmatpush2.msra.mxu0 %v3539
    %3612 = vmatprep.subr.mxu0 0.0
    %3613 = vmatpush2.msra.mxu0 %v3538
    %3614 = vmatprep.subr.mxu0 0.0
    %3615 = vmatpush2.msra.mxu0 %v3537
    %3616 = vmatprep.subr.mxu0 0.0
    %3617 = vmatpush2.msra.mxu0 %v3536
    %3618 = vmatprep.subr.mxu0 0.0
    %3619 = vmatpush2.msra.mxu0 %v3535
    %3620 = vmatprep.subr.mxu0 0.0
    %3621 = vmatpush2.msra.mxu0 %v3534
    %3622 = vmatprep.subr.mxu0 0.0
    %3623 = vmatpush2.msra.mxu0 %v3533
    %3624 = vmatprep.subr.mxu0 0.0
    %3625 = vmatpush2.msra.mxu0 %v3532
    %3626 = vmatprep.mubr.f32.mxu0 %v3514
    %3627 = vmatmul.mubr.f32.gmra.mxu0 %v1842
    %v3628 = vpop.f32.mrf.mxu0
    %v3629 = vadd.f32 %v3557, %v3628
    %v3630 = vpop.f32.mrf.mxu0
    %3631 = vdwg.mxu0
    %3632 = vmatprep.subr.mxu0 0.0
    %3633 = vmatpush1.msra.mxu0 0.0
    %3634 = vmatprep.subr.mxu0 0.0
    %3635 = vmatpush1.msra.mxu0 0.0
    %3636 = vmatprep.subr.mxu0 0.0
    %3637 = vmatpush1.msra.mxu0 0.0
    %3638 = vmatprep.subr.mxu0 0.0
    %3639 = vmatpush1.msra.mxu0 0.0
    %3640 = vmatprep.subr.mxu0 0.0
    %3641 = vmatpush1.msra.mxu0 0.0
    %3642 = vmatprep.subr.mxu0 0.0
    %3643 = vmatpush1.msra.mxu0 0.0
    %3644 = vmatprep.subr.mxu0 0.0
    %3645 = vmatpush1.msra.mxu0 0.0
    %3646 = vmatprep.subr.mxu0 0.0
    %3647 = vmatpush1.msra.mxu0 0.0
    %3648 = vmatprep.subr.mxu0 0.0
    %3649 = vmatpush1.msra.mxu0 0.0
    %3650 = vmatprep.subr.mxu0 0.0
    %3651 = vmatpush1.msra.mxu0 0.0
    %3652 = vmatprep.subr.mxu0 0.0
    %3653 = vmatpush1.msra.mxu0 0.0
    %3654 = vmatprep.subr.mxu0 0.0
    %3655 = vmatpush1.msra.mxu0 0.0
    %3656 = vmatprep.subr.mxu0 0.0
    %3657 = vmatpush1.msra.mxu0 %v3551
    %3658 = vmatprep.subr.mxu0 0.0
    %3659 = vmatpush1.msra.mxu0 %v3550
    %3660 = vmatprep.subr.mxu0 0.0
    %3661 = vmatpush1.msra.mxu0 %v3549
    %3662 = vmatprep.subr.mxu0 0.0
    %3663 = vmatpush1.msra.mxu0 %v3548
    %3664 = vmatprep.subr.mxu0 0.0
    %3665 = vmatpush2.msra.mxu0 0.0
    %3666 = vmatprep.subr.mxu0 0.0
    %3667 = vmatpush2.msra.mxu0 0.0
    %3668 = vmatprep.subr.mxu0 0.0
    %3669 = vmatpush2.msra.mxu0 0.0
    %3670 = vmatprep.subr.mxu0 0.0
    %3671 = vmatpush2.msra.mxu0 0.0
    %3672 = vmatprep.subr.mxu0 0.0
    %3673 = vmatpush2.msra.mxu0 0.0
    %3674 = vmatprep.subr.mxu0 0.0
    %3675 = vmatpush2.msra.mxu0 0.0
    %3676 = vmatprep.subr.mxu0 0.0
    %3677 = vmatpush2.msra.mxu0 0.0
    %3678 = vmatprep.subr.mxu0 0.0
    %3679 = vmatpush2.msra.mxu0 0.0
    %3680 = vmatprep.subr.mxu0 0.0
    %3681 = vmatpush2.msra.mxu0 0.0
    %3682 = vmatprep.subr.mxu0 0.0
    %3683 = vmatpush2.msra.mxu0 0.0
    %3684 = vmatprep.subr.mxu0 0.0
    %3685 = vmatpush2.msra.mxu0 0.0
    %3686 = vmatprep.subr.mxu0 0.0
    %3687 = vmatpush2.msra.mxu0 0.0
    %3688 = vmatprep.subr.mxu0 0.0
    %3689 = vmatpush2.msra.mxu0 0.0
    %3690 = vmatprep.subr.mxu0 0.0
    %3691 = vmatpush2.msra.mxu0 0.0
    %3692 = vmatprep.subr.mxu0 0.0
    %3693 = vmatpush2.msra.mxu0 0.0
    %3694 = vmatprep.subr.mxu0 0.0
    %3695 = vmatpush2.msra.mxu0 0.0
    %3696 = vmatprep.mubr.f32.mxu0 0.0
    %3697 = vmatmul.mubr.f32.gmra.mxu0 %v3560
    %v3698 = vpop.f32.mrf.mxu0
    %v3699 = vadd.f32 %v3629, %v3698
    %v3700 = vpop.f32.mrf.mxu0
    %3701 = vdwg.mxu0
    %v3702 = vmax.f32 %v3699, 0.0
    %v3703 = vld [vmem:[%s15] sm:$0xff]
    %v3704 = vld [vmem:[%s15 + $0x8] sm:$0xff]
    %v3705 = vld [vmem:[%s15 + $0x10] sm:$0xff]
    %v3706 = vld [vmem:[%s15 + $0x18] sm:$0xff]
    %v3707 = vld [vmem:[%s15 + $0x20] sm:$0xff]
    %v3708 = vld [vmem:[%s15 + $0x28] sm:$0xff]
    %v3709 = vld [vmem:[%s15 + $0x30] sm:$0xff]
    %v3710 = vld [vmem:[%s15 + $0x38] sm:$0xff]
    %v3711 = vld [vmem:[%s15 + $0x40] sm:$0xff]
    %v3712 = vld [vmem:[%s15 + $0x48] sm:$0xff]
    %v3713 = vld [vmem:[%s15 + $0x50] sm:$0xff]
    %v3714 = vld [vmem:[%s15 + $0x58] sm:$0xff]
    %v3715 = vld [vmem:[%s15 + $0x60] sm:$0xff]
    %v3716 = vld [vmem:[%s15 + $0x68] sm:$0xff]
    %v3717 = vld [vmem:[%s15 + $0x70] sm:$0xff]
    %v3718 = vld [vmem:[%s15 + $0x78] sm:$0xff]
    %v3719 = vld [vmem:[#allocation11] sm:$0x1]
    %v3721 = vlaneseq
    %v3722 = vshrl.u32 %v3721, 7
    %v3723 = vsub.s32 0, %v3722
    %v3724 = vrot.slane %v3719, %v3723
    %3726 = vmatprep.subr.mxu0 0.0
    %3727 = vmatpush1.msra.mxu0 %v3718
    %3728 = vmatprep.subr.mxu0 0.0
    %3729 = vmatpush1.msra.mxu0 %v3717
    %3730 = vmatprep.subr.mxu0 0.0
    %3731 = vmatpush1.msra.mxu0 %v3716
    %3732 = vmatprep.subr.mxu0 0.0
    %3733 = vmatpush1.msra.mxu0 %v3715
    %3734 = vmatprep.subr.mxu0 0.0
    %3735 = vmatpush1.msra.mxu0 %v3714
    %3736 = vmatprep.subr.mxu0 0.0
    %3737 = vmatpush1.msra.mxu0 %v3713
    %3738 = vmatprep.subr.mxu0 0.0
    %3739 = vmatpush1.msra.mxu0 %v3712
    %3740 = vmatprep.subr.mxu0 0.0
    %3741 = vmatpush1.msra.mxu0 %v3711
    %3742 = vmatprep.subr.mxu0 0.0
    %3743 = vmatpush1.msra.mxu0 %v3710
    %3744 = vmatprep.subr.mxu0 0.0
    %3745 = vmatpush1.msra.mxu0 %v3709
    %3746 = vmatprep.subr.mxu0 0.0
    %3747 = vmatpush1.msra.mxu0 %v3708
    %3748 = vmatprep.subr.mxu0 0.0
    %3749 = vmatpush1.msra.mxu0 %v3707
    %3750 = vmatprep.subr.mxu0 0.0
    %3751 = vmatpush1.msra.mxu0 %v3706
    %3752 = vmatprep.subr.mxu0 0.0
    %3753 = vmatpush1.msra.mxu0 %v3705
    %3754 = vmatprep.subr.mxu0 0.0
    %3755 = vmatpush1.msra.mxu0 %v3704
    %3756 = vmatprep.subr.mxu0 0.0
    %3757 = vmatpush1.msra.mxu0 %v3703
    %3758 = vmatprep.subr.mxu0 0.0
    %3759 = vmatpush2.msra.mxu0 0.0
    %3760 = vmatprep.subr.mxu0 0.0
    %3761 = vmatpush2.msra.mxu0 0.0
    %3762 = vmatprep.subr.mxu0 0.0
    %3763 = vmatpush2.msra.mxu0 0.0
    %3764 = vmatprep.subr.mxu0 0.0
    %3765 = vmatpush2.msra.mxu0 0.0
    %3766 = vmatprep.subr.mxu0 0.0
    %3767 = vmatpush2.msra.mxu0 0.0
    %3768 = vmatprep.subr.mxu0 0.0
    %3769 = vmatpush2.msra.mxu0 0.0
    %3770 = vmatprep.subr.mxu0 0.0
    %3771 = vmatpush2.msra.mxu0 0.0
    %3772 = vmatprep.subr.mxu0 0.0
    %3773 = vmatpush2.msra.mxu0 0.0
    %3774 = vmatprep.subr.mxu0 0.0
    %3775 = vmatpush2.msra.mxu0 0.0
    %3776 = vmatprep.subr.mxu0 0.0
    %3777 = vmatpush2.msra.mxu0 0.0
    %3778 = vmatprep.subr.mxu0 0.0
    %3779 = vmatpush2.msra.mxu0 0.0
    %3780 = vmatprep.subr.mxu0 0.0
    %3781 = vmatpush2.msra.mxu0 0.0
    %3782 = vmatprep.subr.mxu0 0.0
    %3783 = vmatpush2.msra.mxu0 0.0
    %3784 = vmatprep.subr.mxu0 0.0
    %3785 = vmatpush2.msra.mxu0 0.0
    %3786 = vmatprep.subr.mxu0 0.0
    %3787 = vmatpush2.msra.mxu0 0.0
    %3788 = vmatprep.subr.mxu0 0.0
    %3789 = vmatpush2.msra.mxu0 0.0
    %3790 = vmatprep.mubr.f32.mxu0 0.0
    %3791 = vmatmul.mubr.f32.gmra.mxu0 %v3702
    %v3792 = vpop.f32.mrf.mxu0
    %v3793 = vadd.f32 %v3724, %v3792
    %v3794 = vpop.f32.mrf.mxu0
    %3795 = vdwg.mxu0
    %v3796 = vmax.f32 %v3793, 0.0
    %v3797 = vld [vmem:[%s17] sm:$0xff]
    %v3798 = vld [vmem:[%s17 + $0x8] sm:$0xff]
    %v3799 = vld [vmem:[%s17 + $0x10] sm:$0xff]
    %v3800 = vld [vmem:[%s17 + $0x18] sm:$0xff]
    %v3801 = vld [vmem:[%s17 + $0x20] sm:$0xff]
    %v3802 = vld [vmem:[%s17 + $0x28] sm:$0xff]
    %v3803 = vld [vmem:[%s17 + $0x30] sm:$0xff]
    %v3804 = vld [vmem:[%s17 + $0x38] sm:$0xff]
    %v3805 = vld [vmem:[%s17 + $0x40] sm:$0xff]
    %v3806 = vld [vmem:[%s17 + $0x48] sm:$0xff]
    %v3807 = vld [vmem:[%s17 + $0x50] sm:$0xff]
    %v3808 = vld [vmem:[%s17 + $0x58] sm:$0xff]
    %v3809 = vld [vmem:[%s17 + $0x60] sm:$0xff]
    %v3810 = vld [vmem:[%s17 + $0x68] sm:$0xff]
    %v3811 = vld [vmem:[%s17 + $0x70] sm:$0xff]
    %v3812 = vld [vmem:[%s17 + $0x78] sm:$0xff]
    %v3813 = vld [vmem:[#allocation12] sm:$0x1]
    %v3815 = vlaneseq
    %v3816 = vshrl.u32 %v3815, 7
    %v3817 = vsub.s32 0, %v3816
    %v3818 = vrot.slane %v3813, %v3817
    %3820 = vmatprep.subr.mxu0 0.0
    %3821 = vmatpush1.msra.mxu0 %v3812
    %3822 = vmatprep.subr.mxu0 0.0
    %3823 = vmatpush1.msra.mxu0 %v3811
    %3824 = vmatprep.subr.mxu0 0.0
    %3825 = vmatpush1.msra.mxu0 %v3810
    %3826 = vmatprep.subr.mxu0 0.0
    %3827 = vmatpush1.msra.mxu0 %v3809
    %3828 = vmatprep.subr.mxu0 0.0
    %3829 = vmatpush1.msra.mxu0 %v3808
    %3830 = vmatprep.subr.mxu0 0.0
    %3831 = vmatpush1.msra.mxu0 %v3807
    %3832 = vmatprep.subr.mxu0 0.0
    %3833 = vmatpush1.msra.mxu0 %v3806
    %3834 = vmatprep.subr.mxu0 0.0
    %3835 = vmatpush1.msra.mxu0 %v3805
    %3836 = vmatprep.subr.mxu0 0.0
    %3837 = vmatpush1.msra.mxu0 %v3804
    %3838 = vmatprep.subr.mxu0 0.0
    %3839 = vmatpush1.msra.mxu0 %v3803
    %3840 = vmatprep.subr.mxu0 0.0
    %3841 = vmatpush1.msra.mxu0 %v3802
    %3842 = vmatprep.subr.mxu0 0.0
    %3843 = vmatpush1.msra.mxu0 %v3801
    %3844 = vmatprep.subr.mxu0 0.0
    %3845 = vmatpush1.msra.mxu0 %v3800
    %3846 = vmatprep.subr.mxu0 0.0
    %3847 = vmatpush1.msra.mxu0 %v3799
    %3848 = vmatprep.subr.mxu0 0.0
    %3849 = vmatpush1.msra.mxu0 %v3798
    %3850 = vmatprep.subr.mxu0 0.0
    %3851 = vmatpush1.msra.mxu0 %v3797
    %3852 = vmatprep.subr.mxu0 0.0
    %3853 = vmatpush2.msra.mxu0 0.0
    %3854 = vmatprep.subr.mxu0 0.0
    %3855 = vmatpush2.msra.mxu0 0.0
    %3856 = vmatprep.subr.mxu0 0.0
    %3857 = vmatpush2.msra.mxu0 0.0
    %3858 = vmatprep.subr.mxu0 0.0
    %3859 = vmatpush2.msra.mxu0 0.0
    %3860 = vmatprep.subr.mxu0 0.0
    %3861 = vmatpush2.msra.mxu0 0.0
    %3862 = vmatprep.subr.mxu0 0.0
    %3863 = vmatpush2.msra.mxu0 0.0
    %3864 = vmatprep.subr.mxu0 0.0
    %3865 = vmatpush2.msra.mxu0 0.0
    %3866 = vmatprep.subr.mxu0 0.0
    %3867 = vmatpush2.msra.mxu0 0.0
    %3868 = vmatprep.subr.mxu0 0.0
    %3869 = vmatpush2.msra.mxu0 0.0
    %3870 = vmatprep.subr.mxu0 0.0
    %3871 = vmatpush2.msra.mxu0 0.0
    %3872 = vmatprep.subr.mxu0 0.0
    %3873 = vmatpush2.msra.mxu0 0.0
    %3874 = vmatprep.subr.mxu0 0.0
    %3875 = vmatpush2.msra.mxu0 0.0
    %3876 = vmatprep.subr.mxu0 0.0
    %3877 = vmatpush2.msra.mxu0 0.0
    %3878 = vmatprep.subr.mxu0 0.0
    %3879 = vmatpush2.msra.mxu0 0.0
    %3880 = vmatprep.subr.mxu0 0.0
    %3881 = vmatpush2.msra.mxu0 0.0
    %3882 = vmatprep.subr.mxu0 0.0
    %3883 = vmatpush2.msra.mxu0 0.0
    %3884 = vmatprep.mubr.f32.mxu0 0.0
    %3885 = vmatmul.mubr.f32.gmra.mxu0 %v3796
    %v3886 = vpop.f32.mrf.mxu0
    %v3887 = vadd.f32 %v3818, %v3886
    %v3888 = vpop.f32.mrf.mxu0
    %3889 = vdwg.mxu0
    %3890 = vst [vmem:[%s19] sm:$0x3] %v3887
    // Predicated region
    $region106: #{custom_network_forward.1} parent=1 // pred_check
      _
    $region107: #{custom_network_forward.1} parent=1 // pred_check_branch
      %3892 = sbr.rel (0) target = $region109
    $region108: #{custom_network_forward.1} parent=1 // pred_region
      _
    $region109: #{custom_network_forward.1} parent=1 // pred_fallthru
      _
    // Predicated region
    $region110: #{custom_network_forward.1} parent=1 // pred_check
      _
    $region111: #{custom_network_forward.1} parent=1 // pred_check_branch
      %3894 = sbr.rel (0) target = $region113
    $region112: #{custom_network_forward.1} parent=1 // pred_region
      _
    $region113: #{custom_network_forward.1} parent=1 // pred_fallthru
      _
    %3895 = vsyncpa [#allocation3], 1
    %3896 = vsyncpa [#allocation6], 1
    %3897 = vsyncpa [#allocation10], 1
    %3898 = vsyncpa [#allocation13], 1
    %3899 = vsyncpa [#allocation4], 1

</llo_original>
